<compile_context>
chip_gen: v6e
topology: v6e:2x2x1
jax: 0.10.0
libtpu: 0.0.40
codegen_flags: <defaults>
</compile_context>

<pallas_src>
import jax
import jax.numpy as jnp
from jax.experimental import pallas as pl
from jax.experimental.pallas import tpu as pltpu

# ---------------- configuration (small, consistent with the module) ----------------
IN_DIM = 3            # direction input dim
COND_DIM = 16         # conditioning_input_dim
HIDDEN = 32           # hidden_features == latent_dim
NUM_HEADS = 4
NUM_LAYERS = 2
SEQ_K = 8             # number of conditioning tokens
HEAD_DIM = HIDDEN // NUM_HEADS
SCALE = HEAD_DIM ** (-0.5)

GROUPS = 4                    # batch rows packed per 128-lane vreg row
GHID = GROUPS * HIDDEN        # 128  (packed hidden width)
GCOND = GROUPS * COND_DIM     # 64   (packed conditioning width)
GIN = GROUPS * IN_DIM         # 12   (packed direction width)


def _layer_norm(x, w, b, eps=1e-5):
    mu = jnp.mean(x, axis=-1, keepdims=True)
    var = jnp.mean((x - mu) ** 2, axis=-1, keepdims=True)
    return (x - mu) * jax.lax.rsqrt(var + eps) * w + b


def _group_norm(x, w, b, mean_sel, eps=1e-5):
    """LayerNorm over each 32-lane group of a (N, 128) packed activation.

    mean_sel[i, j] = 1/HIDDEN if i//HIDDEN == j//HIDDEN else 0, so one MXU matmul
    produces the per-group mean replicated across that group's lanes.
    """
    mu = jnp.dot(x, mean_sel, preferred_element_type=jnp.float32)
    d = x - mu
    var = jnp.dot(d * d, mean_sel, preferred_element_type=jnp.float32)
    return d * jax.lax.rsqrt(var + eps) * w + b


# ---------------------------------- kernel ----------------------------------
def decoder_kernel(x_ref, cond_ref, wproj_ref, bproj_ref, wkv_ref, bkv_ref,
                   wsq_ref, bln_ref, gsel_ref, msel_ref, wout_ref, bout_ref, o_ref):
    n = x_ref.shape[0]                       # packed rows in this tile (= bb // 4)

    xg = x_ref[...]                          # (n, GIN)       4 rays per row
    cond = cond_ref[...]                     # (n*SEQ_K, GCOND) lane-dense packed cond
    gsel = gsel_ref[...]                     # (GHID, GHID) per-head score selector * SCALE
    msel = msel_ref[...]                     # (GHID, GHID) per-group averaging selector
    bln = bln_ref[...]                       # (NUM_LAYERS*8, GHID)
    bkv = bkv_ref[...]                       # (NUM_LAYERS, 2*GHID)

    # residual projection: (n, 12) @ (12, 128) block-diagonal
    h = jnp.dot(xg, wproj_ref[...], preferred_element_type=jnp.float32) + bproj_ref[...]

    for l in range(NUM_LAYERS):
        wq, wo = wsq_ref[4 * l + 0], wsq_ref[4 * l + 1]
        wf1, wf2 = wsq_ref[4 * l + 2], wsq_ref[4 * l + 3]
        r = 8 * l
        bq, bo = bln[r + 0:r + 1, :], bln[r + 1:r + 2, :]
        bf1, bf2 = bln[r + 2:r + 3, :], bln[r + 3:r + 4, :]
        n1w, n1b = bln[r + 4:r + 5, :], bln[r + 5:r + 6, :]
        n2w, n2b = bln[r + 6:r + 7, :], bln[r + 7:r + 8, :]

        # Fused K/V projection for this layer: (n*SEQ_K, 64) @ (64, 256).
        # K occupies lanes [0,128), V lanes [128,256): both slices are full-vreg
        # aligned, so no lane relayout is needed.
        kv = jnp.dot(cond, wkv_ref[l], preferred_element_type=jnp.float32) + bkv[l:l + 1, :]
        kv = kv.reshape(n, SEQ_K, 2 * GHID)           # SEQ_K == 8: layout-preserving
        k3 = kv[:, :, :GHID]                          # (n, SEQ_K, 128)
        v3 = kv[:, :, GHID:]                          # (n, SEQ_K, 128)

        # ---- multi-head attention (query seq-len == 1), all heads & groups at once ----
        q = jnp.dot(h, wq, preferred_element_type=jnp.float32) + bq      # (n, 128)

        # gsel[i, j] = SCALE if i//HEAD_DIM == j//HEAD_DIM: one MXU matmul sums q*k
        # within each head and replicates the scaled score across that head's lanes.
        prod = q[:, None, :] * k3                                        # (n, SEQ_K, 128)
        scores = jnp.dot(prod.reshape(n * SEQ_K, GHID), gsel,
                         preferred_element_type=jnp.float32)
        scores = scores.reshape(n, SEQ_K, GHID)

        m = jnp.max(scores, axis=1, keepdims=True)
        e = jnp.exp(scores - m)
        denom = jnp.sum(e, axis=1)                                       # (n, 128)
        wsum = jnp.sum(e * v3, axis=1)                                   # (n, 128)
        ctx = wsum * pl.reciprocal(denom, approx=True)                   # softmax folded in

        attn_out = jnp.dot(ctx, wo, preferred_element_type=jnp.float32) + bo

        # ---- residual + norm1 ----
        out1 = _group_norm(attn_out + h, n1w, n1b, msel)

        # ---- MLP: Linear -> ReLU -> Linear ----
        f = jnp.dot(out1, wf1, preferred_element_type=jnp.float32) + bf1
        f = jnp.maximum(f, 0.0)
        f = jnp.dot(f, wf2, preferred_element_type=jnp.float32) + bf2

        # ---- residual + norm2 ----
        h = _group_norm(f + out1, n2w, n2b, msel)

    # final Linear(HIDDEN, 3) as a lane-dense (128, 128) block-diag matmul; each
    # group's 3 useful outputs land at lanes [32g, 32g+3). out_activation None.
    out = jnp.dot(h, wout_ref[...], preferred_element_type=jnp.float32) + bout_ref[...]
    o_ref[...] = out.astype(o_ref.dtype)


# -------------------------------- packing + wrapper --------------------------------
PACKED_ORDER = ['wproj', 'bproj', 'wkv', 'bkv', 'wsq', 'bln', 'gsel', 'msel',
                'wout', 'bout']


def _round_up(n, m):
    return ((n + m - 1) // m) * m


def pack_params(p):
    """Pack per-layer params into block-diagonal / replicated kernel operands."""
    eye = jnp.eye(GROUPS, dtype=jnp.float32)
    rep_w = lambda w: jnp.kron(eye, w)                             # block-diag x GROUPS
    rep_b = lambda b: jnp.tile(b.reshape(1, -1), (1, GROUPS))      # (1, GROUPS*fo)

    wkv, bkv, wsq, bln = [], [], [], []
    for l in range(NUM_LAYERS):
        wkv.append(jnp.concatenate([rep_w(p['wk'][l]), rep_w(p['wv'][l])], axis=1))
        bkv.append(jnp.concatenate([rep_b(p['bk'][l]), rep_b(p['bv'][l])], axis=1)[0])
        wsq += [rep_w(p['wq'][l]), rep_w(p['wo'][l]),
                rep_w(p['wf1'][l]), rep_w(p['wf2'][l])]
        bln += [rep_b(p[k][l])[0] for k in
                ('bq', 'bo', 'bf1', 'bf2', 'n1w', 'n1b', 'n2w', 'n2b')]

    head = jnp.arange(GHID, dtype=jnp.int32) // HEAD_DIM
    gsel = (head[:, None] == head[None, :]).astype(jnp.float32) * SCALE
    grp = jnp.arange(GHID, dtype=jnp.int32) // HIDDEN
    msel = (grp[:, None] == grp[None, :]).astype(jnp.float32) / HIDDEN

    wout_pad = jnp.pad(p['wout'], ((0, 0), (0, HIDDEN - 3)))       # (32, 32)
    bout_pad = jnp.pad(p['bout'], ((0, 0), (0, HIDDEN - 3)))       # (1, 32)

    return dict(
        wproj=rep_w(p['wproj']),          # (GIN, GHID)
        bproj=rep_b(p['bproj']),          # (1, GHID)
        wkv=jnp.stack(wkv),               # (L, GCOND, 2*GHID)
        bkv=jnp.stack(bkv),               # (L, 2*GHID)
        wsq=jnp.stack(wsq),               # (4L, GHID, GHID)
        bln=jnp.stack(bln),               # (8L, GHID)
        gsel=gsel,                        # (GHID, GHID)
        msel=msel,                        # (GHID, GHID)
        wout=rep_w(wout_pad),             # (GHID, GHID)
        bout=rep_b(bout_pad),             # (1, GHID)
    )


def decoder_pallas(x, cond, params, block_b=512):
    """x: (B, IN_DIM), cond: (B, SEQ_K, COND_DIM), params: per-layer ('natural') dict.

    block_b is the batch tile in rays. Default 512 fits the v7x 64 MiB VMEM with
    wide margin; on v5e/v6e (128 MiB) 1024 is also fine for large B.
    """
    B = x.shape[0]
    packed = pack_params(params)

    block_b = max(32, (block_b // 32) * 32)   # tile must pack into (bb/4, 128) rows

    # Tile: large (amortizes ~0.35us/step grid overhead), clamped so small batches
    # are not massively over-padded. Multiple of 32 so bb/4 is sublane-aligned.
    bb = min(block_b, _round_up(max(pl.cdiv(B, 2), 32), 32))
    grid = pl.cdiv(B, bb)
    # Prefer an even grid (both v7x TensorCores get equal work) when it is free.
    if grid > 1 and grid % 2 == 1:
        bb_alt = _round_up(pl.cdiv(B, grid + 1), 32)
        if pl.cdiv(B, bb_alt) % 2 == 0:
            bb = bb_alt
    B_pad = _round_up(B, bb)
    grid = B_pad // bb

    if B_pad != B:   # ragged batches via zero padding (group-local math; sliced off)
        x = jnp.pad(x, ((0, B_pad - B), (0, 0)))
        cond = jnp.pad(cond, ((0, B_pad - B), (0, 0), (0, 0)))

    # Wrapper-side lane packing (layout plumbing done once by XLA, not per layer):
    #   x    -> (B/4, 12): row r = [x[4r], x[4r+1], x[4r+2], x[4r+3]]
    #   cond -> (B/4 * SEQ_K, 64): row (r, s) lane group g = cond[4r+g, s, :]
    x_p = x.reshape(B_pad // GROUPS, GIN)
    cond_p = cond.reshape(B_pad // GROUPS, GROUPS, SEQ_K, COND_DIM)
    cond_p = jnp.transpose(cond_p, (0, 2, 1, 3)).reshape(B_pad // GROUPS * SEQ_K, GCOND)

    weights = [packed[k] for k in PACKED_ORDER]

    def full_spec(a):
        nd = a.ndim
        return pl.BlockSpec(a.shape, lambda i, _nd=nd: (0,) * _nd)

    in_specs = [
        pl.BlockSpec((bb // GROUPS, GIN), lambda i: (i, 0)),
        pl.BlockSpec((bb // GROUPS * SEQ_K, GCOND), lambda i: (i, 0)),
    ] + [full_spec(w) for w in weights]

    out = pl.pallas_call(
        decoder_kernel,
        out_shape=jax.ShapeDtypeStruct((B_pad // GROUPS, GHID), jnp.float32),
        grid_spec=pltpu.PrefetchScalarGridSpec(
            num_scalar_prefetch=0,
            grid=(grid,),
            in_specs=in_specs,
            out_specs=pl.BlockSpec((bb // GROUPS, GHID), lambda i: (i, 0)),
        ),
        compiler_params=pltpu.CompilerParams(
            dimension_semantics=("parallel",),
            # ~6-10 MiB actually used at bb=512 (inputs double-buffered + spilled
            # 3-D intermediates); 40 MiB leaves headroom and fits v7x's 64 MiB.
            vmem_limit_bytes=40 * 1024 * 1024,
        ),
    )(x_p, cond_p, *weights)

    # Unpack lane-dense output: group g of packed row r -> ray 4r+g, first 3 lanes.
    out = out.reshape(B_pad // GROUPS, GROUPS, HIDDEN).reshape(B_pad, HIDDEN)
    return out[:B, :3]


# -------------------------- deterministic param init --------------------------
def init_params(key):
    keys = jax.random.split(key, 16)
    it = iter(keys)

    def lin(k, fan_in, shape):
        bound = 1.0 / (fan_in ** 0.5)
        return jax.random.uniform(k, shape, jnp.float32, -bound, bound)

    p = {}
    p['wproj'] = lin(next(it), IN_DIM, (IN_DIM, HIDDEN))
    p['bproj'] = lin(next(it), IN_DIM, (1, HIDDEN))
    p['wq'] = lin(next(it), HIDDEN, (NUM_LAYERS, HIDDEN, HIDDEN))
    p['bq'] = lin(next(it), HIDDEN, (NUM_LAYERS, HIDDEN))
    p['wk'] = lin(next(it), COND_DIM, (NUM_LAYERS, COND_DIM, HIDDEN))
    p['bk'] = lin(next(it), COND_DIM, (NUM_LAYERS, HIDDEN))
    p['wv'] = lin(next(it), COND_DIM, (NUM_LAYERS, COND_DIM, HIDDEN))
    p['bv'] = lin(next(it), COND_DIM, (NUM_LAYERS, HIDDEN))
    p['wo'] = lin(next(it), HIDDEN, (NUM_LAYERS, HIDDEN, HIDDEN))
    p['bo'] = lin(next(it), HIDDEN, (NUM_LAYERS, HIDDEN))
    p['n1w'] = jnp.ones((NUM_LAYERS, HIDDEN), jnp.float32)    # LayerNorm default init
    p['n1b'] = jnp.zeros((NUM_LAYERS, HIDDEN), jnp.float32)
    p['wf1'] = lin(next(it), HIDDEN, (NUM_LAYERS, HIDDEN, HIDDEN))
    p['bf1'] = lin(next(it), HIDDEN, (NUM_LAYERS, HIDDEN))
    p['wf2'] = lin(next(it), HIDDEN, (NUM_LAYERS, HIDDEN, HIDDEN))
    p['bf2'] = lin(next(it), HIDDEN, (NUM_LAYERS, HIDDEN))
    p['n2w'] = jnp.ones((NUM_LAYERS, HIDDEN), jnp.float32)
    p['n2b'] = jnp.zeros((NUM_LAYERS, HIDDEN), jnp.float32)
    p['wout'] = lin(next(it), HIDDEN, (HIDDEN, 3))
    p['bout'] = lin(next(it), HIDDEN, (1, 3))
    return p


# ---------------------------- pure-JAX reference ----------------------------
def decoder_ref(x, cond, p):
    B = x.shape[0]
    h = x @ p['wproj'] + p['bproj']
    for l in range(NUM_LAYERS):
        q = h @ p['wq'][l] + p['bq'][l]
        k = jnp.einsum('bsc,ch->bsh', cond, p['wk'][l]) + p['bk'][l]
        v = jnp.einsum('bsc,ch->bsh', cond, p['wv'][l]) + p['bv'][l]
        qh = q.reshape(B, 1, NUM_HEADS, HEAD_DIM).transpose(0, 2, 1, 3)
        kh = k.reshape(B, SEQ_K, NUM_HEADS, HEAD_DIM).transpose(0, 2, 1, 3)
        vh = v.reshape(B, SEQ_K, NUM_HEADS, HEAD_DIM).transpose(0, 2, 1, 3)
        scores = jnp.einsum('bhqd,bhkd->bhqk', qh, kh) * SCALE
        attn = jax.nn.softmax(scores, axis=-1)
        o = jnp.einsum('bhqk,bhkd->bhqd', attn, vh)
        o = o.transpose(0, 2, 1, 3).reshape(B, HIDDEN)
        o = o @ p['wo'][l] + p['bo'][l]
        out1 = _layer_norm(o + h, p['n1w'][l], p['n1b'][l])
        f = jnp.maximum(out1 @ p['wf1'][l] + p['bf1'][l], 0.0)
        f = f @ p['wf2'][l] + p['bf2'][l]
        h = _layer_norm(f + out1, p['n2w'][l], p['n2b'][l])
    return h @ p['wout'] + p['bout']


if __name__ == "__main__":
    key = jax.random.PRNGKey(0)
    kx, kc, kp = jax.random.split(key, 3)
    params = init_params(kp)

    # small batch (bb clamps to 32, grid=1) and a ragged batch (padding + even grid).
    # Tolerance slightly relaxed for the approx softmax reciprocal.
    for B in (16, 200):
        x = jax.random.normal(jax.random.fold_in(kx, B), (B, IN_DIM), jnp.float32)
        cond = jax.random.normal(jax.random.fold_in(kc, B), (B, SEQ_K, COND_DIM),
                                 jnp.float32)
        out = jax.block_until_ready(decoder_pallas(x, cond, params))
        ref = decoder_ref(x, cond, params)
        assert out.shape == (B, 3), out.shape
        assert jnp.allclose(out, ref, rtol=2e-3, atol=2e-3), (
            B, float(jnp.max(jnp.abs(out - ref))))
    print("KERNEL_OK")
</pallas_src>

<mosaic_0001>
module attributes {stable_mosaic.version = 11 : i64} {
  func.func @decoder_kernel(%arg0: i32, %arg1: memref<8x12xf32, #tpu.memory_space<vmem>>, %arg2: memref<64x64xf32, #tpu.memory_space<vmem>>, %arg3: memref<12x128xf32, #tpu.memory_space<vmem>>, %arg4: memref<1x128xf32, #tpu.memory_space<vmem>>, %arg5: memref<2x64x256xf32, #tpu.memory_space<vmem>>, %arg6: memref<2x256xf32, #tpu.memory_space<vmem>>, %arg7: memref<8x128x128xf32, #tpu.memory_space<vmem>>, %arg8: memref<16x128xf32, #tpu.memory_space<vmem>>, %arg9: memref<128x128xf32, #tpu.memory_space<vmem>>, %arg10: memref<128x128xf32, #tpu.memory_space<vmem>>, %arg11: memref<128x128xf32, #tpu.memory_space<vmem>>, %arg12: memref<1x128xf32, #tpu.memory_space<vmem>>, %arg13: memref<8x128xf32, #tpu.memory_space<vmem>>) attributes {dimension_semantics = [#tpu.dimension_semantics<parallel>], iteration_bounds = array<i64: 1>, scalar_prefetch = 0 : i64, scratch_operands = 0 : i64, tpu.core_type = #tpu.core_type<tc>, window_params = [{transform_indices = @transform_0, window_bounds = array<i64: 8, 12>}, {transform_indices = @transform_1, window_bounds = array<i64: 64, 64>}, {pipeline_mode = #tpu.pipeline_mode<synchronous>, transform_indices = @transform_2, window_bounds = array<i64: 12, 128>}, {pipeline_mode = #tpu.pipeline_mode<synchronous>, transform_indices = @transform_3, window_bounds = array<i64: 1, 128>}, {pipeline_mode = #tpu.pipeline_mode<synchronous>, transform_indices = @transform_4, window_bounds = array<i64: 2, 64, 256>}, {pipeline_mode = #tpu.pipeline_mode<synchronous>, transform_indices = @transform_5, window_bounds = array<i64: 2, 256>}, {pipeline_mode = #tpu.pipeline_mode<synchronous>, transform_indices = @transform_6, window_bounds = array<i64: 8, 128, 128>}, {pipeline_mode = #tpu.pipeline_mode<synchronous>, transform_indices = @transform_7, window_bounds = array<i64: 16, 128>}, {pipeline_mode = #tpu.pipeline_mode<synchronous>, transform_indices = @transform_8, window_bounds = array<i64: 128, 128>}, {pipeline_mode = #tpu.pipeline_mode<synchronous>, transform_indices = @transform_9, window_bounds = array<i64: 128, 128>}, {pipeline_mode = #tpu.pipeline_mode<synchronous>, transform_indices = @transform_10, window_bounds = array<i64: 128, 128>}, {pipeline_mode = #tpu.pipeline_mode<synchronous>, transform_indices = @transform_11, window_bounds = array<i64: 1, 128>}, {transform_indices = @transform_12, window_bounds = array<i64: 8, 128>}]} {
    %c0 = arith.constant 0 : index
    %c0_0 = arith.constant 0 : index
    %0 = vector.load %arg1[%c0, %c0_0] : memref<8x12xf32, #tpu.memory_space<vmem>>, vector<8x12xf32>
    %c0_1 = arith.constant 0 : index
    %c0_2 = arith.constant 0 : index
    %1 = vector.load %arg2[%c0_1, %c0_2] : memref<64x64xf32, #tpu.memory_space<vmem>>, vector<64x64xf32>
    %c0_3 = arith.constant 0 : index
    %c0_4 = arith.constant 0 : index
    %2 = vector.load %arg9[%c0_3, %c0_4] : memref<128x128xf32, #tpu.memory_space<vmem>>, vector<128x128xf32>
    %c0_5 = arith.constant 0 : index
    %c0_6 = arith.constant 0 : index
    %3 = vector.load %arg10[%c0_5, %c0_6] : memref<128x128xf32, #tpu.memory_space<vmem>>, vector<128x128xf32>
    %c0_7 = arith.constant 0 : index
    %c0_8 = arith.constant 0 : index
    %4 = vector.load %arg8[%c0_7, %c0_8] : memref<16x128xf32, #tpu.memory_space<vmem>>, vector<16x128xf32>
    %c0_9 = arith.constant 0 : index
    %c0_10 = arith.constant 0 : index
    %5 = vector.load %arg6[%c0_9, %c0_10] : memref<2x256xf32, #tpu.memory_space<vmem>>, vector<2x256xf32>
    %c0_11 = arith.constant 0 : index
    %c0_12 = arith.constant 0 : index
    %6 = vector.load %arg3[%c0_11, %c0_12] : memref<12x128xf32, #tpu.memory_space<vmem>>, vector<12x128xf32>
    %cst = arith.constant dense<0.000000e+00> : vector<8x128xf32>
    %7 = tpu.matmul %0, %6, %cst {dimension_numbers = #tpu.dot_dimension_numbers<[1], [0], [0], [1], [0, 0, 1, 1], [], []>} : vector<8x12xf32>, vector<12x128xf32>, vector<8x128xf32> -> vector<8x128xf32>
    %c0_13 = arith.constant 0 : index
    %c0_14 = arith.constant 0 : index
    %8 = vector.load %arg4[%c0_13, %c0_14] : memref<1x128xf32, #tpu.memory_space<vmem>>, vector<1x128xf32>
    %9 = vector.broadcast %8 : vector<1x128xf32> to vector<8x128xf32>
    %10 = arith.addf %7, %9 : vector<8x128xf32>
    %c0_15 = arith.constant 0 : index
    %c0_16 = arith.constant 0 : index
    %c0_17 = arith.constant 0 : index
    %11 = vector.load %arg7[%c0_15, %c0_16, %c0_17] : memref<8x128x128xf32, #tpu.memory_space<vmem>>, vector<1x128x128xf32>
    %12 = vector.shape_cast %11 : vector<1x128x128xf32> to vector<128x128xf32>
    %c1 = arith.constant 1 : index
    %c0_18 = arith.constant 0 : index
    %c0_19 = arith.constant 0 : index
    %13 = vector.load %arg7[%c1, %c0_18, %c0_19] : memref<8x128x128xf32, #tpu.memory_space<vmem>>, vector<1x128x128xf32>
    %14 = vector.shape_cast %13 : vector<1x128x128xf32> to vector<128x128xf32>
    %c2 = arith.constant 2 : index
    %c0_20 = arith.constant 0 : index
    %c0_21 = arith.constant 0 : index
    %15 = vector.load %arg7[%c2, %c0_20, %c0_21] : memref<8x128x128xf32, #tpu.memory_space<vmem>>, vector<1x128x128xf32>
    %16 = vector.shape_cast %15 : vector<1x128x128xf32> to vector<128x128xf32>
    %c3 = arith.constant 3 : index
    %c0_22 = arith.constant 0 : index
    %c0_23 = arith.constant 0 : index
    %17 = vector.load %arg7[%c3, %c0_22, %c0_23] : memref<8x128x128xf32, #tpu.memory_space<vmem>>, vector<1x128x128xf32>
    %18 = vector.shape_cast %17 : vector<1x128x128xf32> to vector<128x128xf32>
    %19 = vector.extract_strided_slice %4 {offsets = [0, 0], sizes = [1, 128], strides = [1, 1]} : vector<16x128xf32> to vector<1x128xf32>
    %20 = vector.extract_strided_slice %4 {offsets = [1, 0], sizes = [1, 128], strides = [1, 1]} : vector<16x128xf32> to vector<1x128xf32>
    %21 = vector.extract_strided_slice %4 {offsets = [2, 0], sizes = [1, 128], strides = [1, 1]} : vector<16x128xf32> to vector<1x128xf32>
    %22 = vector.extract_strided_slice %4 {offsets = [3, 0], sizes = [1, 128], strides = [1, 1]} : vector<16x128xf32> to vector<1x128xf32>
    %23 = vector.extract_strided_slice %4 {offsets = [4, 0], sizes = [1, 128], strides = [1, 1]} : vector<16x128xf32> to vector<1x128xf32>
    %24 = vector.extract_strided_slice %4 {offsets = [5, 0], sizes = [1, 128], strides = [1, 1]} : vector<16x128xf32> to vector<1x128xf32>
    %25 = vector.extract_strided_slice %4 {offsets = [6, 0], sizes = [1, 128], strides = [1, 1]} : vector<16x128xf32> to vector<1x128xf32>
    %26 = vector.extract_strided_slice %4 {offsets = [7, 0], sizes = [1, 128], strides = [1, 1]} : vector<16x128xf32> to vector<1x128xf32>
    %c0_24 = arith.constant 0 : index
    %c0_25 = arith.constant 0 : index
    %c0_26 = arith.constant 0 : index
    %27 = vector.load %arg5[%c0_24, %c0_25, %c0_26] : memref<2x64x256xf32, #tpu.memory_space<vmem>>, vector<1x64x256xf32>
    %28 = vector.shape_cast %27 : vector<1x64x256xf32> to vector<64x256xf32>
    %cst_27 = arith.constant dense<0.000000e+00> : vector<64x256xf32>
    %29 = tpu.matmul %1, %28, %cst_27 {dimension_numbers = #tpu.dot_dimension_numbers<[1], [0], [0], [1], [0, 0, 1, 1], [], []>} : vector<64x64xf32>, vector<64x256xf32>, vector<64x256xf32> -> vector<64x256xf32>
    %30 = vector.extract_strided_slice %5 {offsets = [0, 0], sizes = [1, 256], strides = [1, 1]} : vector<2x256xf32> to vector<1x256xf32>
    %31 = vector.broadcast %30 : vector<1x256xf32> to vector<64x256xf32>
    %32 = arith.addf %29, %31 : vector<64x256xf32>
    %33 = vector.shape_cast %32 : vector<64x256xf32> to vector<8x8x256xf32>
    %34 = vector.extract_strided_slice %33 {offsets = [0, 0, 0], sizes = [8, 8, 128], strides = [1, 1, 1]} : vector<8x8x256xf32> to vector<8x8x128xf32>
    %35 = vector.extract_strided_slice %33 {offsets = [0, 0, 128], sizes = [8, 8, 128], strides = [1, 1, 1]} : vector<8x8x256xf32> to vector<8x8x128xf32>
    %cst_28 = arith.constant dense<0.000000e+00> : vector<8x128xf32>
    %36 = tpu.matmul %10, %12, %cst_28 {dimension_numbers = #tpu.dot_dimension_numbers<[1], [0], [0], [1], [0, 0, 1, 1], [], []>} : vector<8x128xf32>, vector<128x128xf32>, vector<8x128xf32> -> vector<8x128xf32>
    %37 = vector.broadcast %19 : vector<1x128xf32> to vector<8x128xf32>
    %38 = arith.addf %36, %37 : vector<8x128xf32>
    %39 = vector.shape_cast %38 : vector<8x128xf32> to vector<8x1x128xf32>
    %40 = vector.broadcast %39 : vector<8x1x128xf32> to vector<8x8x128xf32>
    %41 = arith.mulf %40, %34 : vector<8x8x128xf32>
    %42 = vector.shape_cast %41 : vector<8x8x128xf32> to vector<64x128xf32>
    %cst_29 = arith.constant dense<0.000000e+00> : vector<64x128xf32>
    %43 = tpu.matmul %42, %2, %cst_29 {dimension_numbers = #tpu.dot_dimension_numbers<[1], [0], [0], [1], [0, 0, 1, 1], [], []>} : vector<64x128xf32>, vector<128x128xf32>, vector<64x128xf32> -> vector<64x128xf32>
    %44 = vector.shape_cast %43 : vector<64x128xf32> to vector<8x8x128xf32>
    %cst_30 = arith.constant dense<0xFF800000> : vector<8x128xf32>
    %45 = vector.multi_reduction <maximumf>, %44, %cst_30 [1] : vector<8x8x128xf32> to vector<8x128xf32>
    %46 = vector.shape_cast %45 : vector<8x128xf32> to vector<8x1x128xf32>
    %47 = vector.broadcast %46 : vector<8x1x128xf32> to vector<8x8x128xf32>
    %48 = arith.subf %44, %47 : vector<8x8x128xf32>
    %49 = math.exp %48 : vector<8x8x128xf32>
    %cst_31 = arith.constant dense<0.000000e+00> : vector<8x128xf32>
    %50 = vector.multi_reduction <add>, %49, %cst_31 [1] : vector<8x8x128xf32> to vector<8x128xf32>
    %51 = arith.mulf %49, %35 : vector<8x8x128xf32>
    %cst_32 = arith.constant dense<0.000000e+00> : vector<8x128xf32>
    %52 = vector.multi_reduction <add>, %51, %cst_32 [1] : vector<8x8x128xf32> to vector<8x128xf32>
    %53 = tpu.reciprocal %50 {approx = true} : vector<8x128xf32> -> vector<8x128xf32>
    %54 = arith.mulf %52, %53 : vector<8x128xf32>
    %cst_33 = arith.constant dense<0.000000e+00> : vector<8x128xf32>
    %55 = tpu.matmul %54, %14, %cst_33 {dimension_numbers = #tpu.dot_dimension_numbers<[1], [0], [0], [1], [0, 0, 1, 1], [], []>} : vector<8x128xf32>, vector<128x128xf32>, vector<8x128xf32> -> vector<8x128xf32>
    %56 = vector.broadcast %20 : vector<1x128xf32> to vector<8x128xf32>
    %57 = arith.addf %55, %56 : vector<8x128xf32>
    %58 = arith.addf %57, %10 : vector<8x128xf32>
    %cst_34 = arith.constant dense<0.000000e+00> : vector<8x128xf32>
    %59 = tpu.matmul %58, %3, %cst_34 {dimension_numbers = #tpu.dot_dimension_numbers<[1], [0], [0], [1], [0, 0, 1, 1], [], []>} : vector<8x128xf32>, vector<128x128xf32>, vector<8x128xf32> -> vector<8x128xf32>
    %60 = arith.subf %58, %59 : vector<8x128xf32>
    %61 = arith.mulf %60, %60 : vector<8x128xf32>
    %cst_35 = arith.constant dense<0.000000e+00> : vector<8x128xf32>
    %62 = tpu.matmul %61, %3, %cst_35 {dimension_numbers = #tpu.dot_dimension_numbers<[1], [0], [0], [1], [0, 0, 1, 1], [], []>} : vector<8x128xf32>, vector<128x128xf32>, vector<8x128xf32> -> vector<8x128xf32>
    %cst_36 = arith.constant 9.99999974E-6 : f32
    %63 = vector.broadcast %cst_36 : f32 to vector<8x128xf32>
    %64 = arith.addf %62, %63 : vector<8x128xf32>
    %65 = math.rsqrt %64 : vector<8x128xf32>
    %66 = arith.mulf %60, %65 : vector<8x128xf32>
    %67 = vector.broadcast %23 : vector<1x128xf32> to vector<8x128xf32>
    %68 = arith.mulf %66, %67 : vector<8x128xf32>
    %69 = vector.broadcast %24 : vector<1x128xf32> to vector<8x128xf32>
    %70 = arith.addf %68, %69 : vector<8x128xf32>
    %cst_37 = arith.constant dense<0.000000e+00> : vector<8x128xf32>
    %71 = tpu.matmul %70, %16, %cst_37 {dimension_numbers = #tpu.dot_dimension_numbers<[1], [0], [0], [1], [0, 0, 1, 1], [], []>} : vector<8x128xf32>, vector<128x128xf32>, vector<8x128xf32> -> vector<8x128xf32>
    %72 = vector.broadcast %21 : vector<1x128xf32> to vector<8x128xf32>
    %73 = arith.addf %71, %72 : vector<8x128xf32>
    %cst_38 = arith.constant 0.000000e+00 : f32
    %74 = vector.broadcast %cst_38 : f32 to vector<8x128xf32>
    %75 = arith.maximumf %73, %74 : vector<8x128xf32>
    %cst_39 = arith.constant dense<0.000000e+00> : vector<8x128xf32>
    %76 = tpu.matmul %75, %18, %cst_39 {dimension_numbers = #tpu.dot_dimension_numbers<[1], [0], [0], [1], [0, 0, 1, 1], [], []>} : vector<8x128xf32>, vector<128x128xf32>, vector<8x128xf32> -> vector<8x128xf32>
    %77 = vector.broadcast %22 : vector<1x128xf32> to vector<8x128xf32>
    %78 = arith.addf %76, %77 : vector<8x128xf32>
    %79 = arith.addf %78, %70 : vector<8x128xf32>
    %cst_40 = arith.constant dense<0.000000e+00> : vector<8x128xf32>
    %80 = tpu.matmul %79, %3, %cst_40 {dimension_numbers = #tpu.dot_dimension_numbers<[1], [0], [0], [1], [0, 0, 1, 1], [], []>} : vector<8x128xf32>, vector<128x128xf32>, vector<8x128xf32> -> vector<8x128xf32>
    %81 = arith.subf %79, %80 : vector<8x128xf32>
    %82 = arith.mulf %81, %81 : vector<8x128xf32>
    %cst_41 = arith.constant dense<0.000000e+00> : vector<8x128xf32>
    %83 = tpu.matmul %82, %3, %cst_41 {dimension_numbers = #tpu.dot_dimension_numbers<[1], [0], [0], [1], [0, 0, 1, 1], [], []>} : vector<8x128xf32>, vector<128x128xf32>, vector<8x128xf32> -> vector<8x128xf32>
    %cst_42 = arith.constant 9.99999974E-6 : f32
    %84 = vector.broadcast %cst_42 : f32 to vector<8x128xf32>
    %85 = arith.addf %83, %84 : vector<8x128xf32>
    %86 = math.rsqrt %85 : vector<8x128xf32>
    %87 = arith.mulf %81, %86 : vector<8x128xf32>
    %88 = vector.broadcast %25 : vector<1x128xf32> to vector<8x128xf32>
    %89 = arith.mulf %87, %88 : vector<8x128xf32>
    %90 = vector.broadcast %26 : vector<1x128xf32> to vector<8x128xf32>
    %91 = arith.addf %89, %90 : vector<8x128xf32>
    %c4 = arith.constant 4 : index
    %c0_43 = arith.constant 0 : index
    %c0_44 = arith.constant 0 : index
    %92 = vector.load %arg7[%c4, %c0_43, %c0_44] : memref<8x128x128xf32, #tpu.memory_space<vmem>>, vector<1x128x128xf32>
    %93 = vector.shape_cast %92 : vector<1x128x128xf32> to vector<128x128xf32>
    %c5 = arith.constant 5 : index
    %c0_45 = arith.constant 0 : index
    %c0_46 = arith.constant 0 : index
    %94 = vector.load %arg7[%c5, %c0_45, %c0_46] : memref<8x128x128xf32, #tpu.memory_space<vmem>>, vector<1x128x128xf32>
    %95 = vector.shape_cast %94 : vector<1x128x128xf32> to vector<128x128xf32>
    %c6 = arith.constant 6 : index
    %c0_47 = arith.constant 0 : index
    %c0_48 = arith.constant 0 : index
    %96 = vector.load %arg7[%c6, %c0_47, %c0_48] : memref<8x128x128xf32, #tpu.memory_space<vmem>>, vector<1x128x128xf32>
    %97 = vector.shape_cast %96 : vector<1x128x128xf32> to vector<128x128xf32>
    %c7 = arith.constant 7 : index
    %c0_49 = arith.constant 0 : index
    %c0_50 = arith.constant 0 : index
    %98 = vector.load %arg7[%c7, %c0_49, %c0_50] : memref<8x128x128xf32, #tpu.memory_space<vmem>>, vector<1x128x128xf32>
    %99 = vector.shape_cast %98 : vector<1x128x128xf32> to vector<128x128xf32>
    %100 = vector.extract_strided_slice %4 {offsets = [8, 0], sizes = [1, 128], strides = [1, 1]} : vector<16x128xf32> to vector<1x128xf32>
    %101 = vector.extract_strided_slice %4 {offsets = [9, 0], sizes = [1, 128], strides = [1, 1]} : vector<16x128xf32> to vector<1x128xf32>
    %102 = vector.extract_strided_slice %4 {offsets = [10, 0], sizes = [1, 128], strides = [1, 1]} : vector<16x128xf32> to vector<1x128xf32>
    %103 = vector.extract_strided_slice %4 {offsets = [11, 0], sizes = [1, 128], strides = [1, 1]} : vector<16x128xf32> to vector<1x128xf32>
    %104 = vector.extract_strided_slice %4 {offsets = [12, 0], sizes = [1, 128], strides = [1, 1]} : vector<16x128xf32> to vector<1x128xf32>
    %105 = vector.extract_strided_slice %4 {offsets = [13, 0], sizes = [1, 128], strides = [1, 1]} : vector<16x128xf32> to vector<1x128xf32>
    %106 = vector.extract_strided_slice %4 {offsets = [14, 0], sizes = [1, 128], strides = [1, 1]} : vector<16x128xf32> to vector<1x128xf32>
    %107 = vector.extract_strided_slice %4 {offsets = [15, 0], sizes = [1, 128], strides = [1, 1]} : vector<16x128xf32> to vector<1x128xf32>
    %c1_51 = arith.constant 1 : index
    %c0_52 = arith.constant 0 : index
    %c0_53 = arith.constant 0 : index
    %108 = vector.load %arg5[%c1_51, %c0_52, %c0_53] : memref<2x64x256xf32, #tpu.memory_space<vmem>>, vector<1x64x256xf32>
    %109 = vector.shape_cast %108 : vector<1x64x256xf32> to vector<64x256xf32>
    %cst_54 = arith.constant dense<0.000000e+00> : vector<64x256xf32>
    %110 = tpu.matmul %1, %109, %cst_54 {dimension_numbers = #tpu.dot_dimension_numbers<[1], [0], [0], [1], [0, 0, 1, 1], [], []>} : vector<64x64xf32>, vector<64x256xf32>, vector<64x256xf32> -> vector<64x256xf32>
    %111 = vector.extract_strided_slice %5 {offsets = [1, 0], sizes = [1, 256], strides = [1, 1]} : vector<2x256xf32> to vector<1x256xf32>
    %112 = vector.broadcast %111 : vector<1x256xf32> to vector<64x256xf32>
    %113 = arith.addf %110, %112 : vector<64x256xf32>
    %114 = vector.shape_cast %113 : vector<64x256xf32> to vector<8x8x256xf32>
    %115 = vector.extract_strided_slice %114 {offsets = [0, 0, 0], sizes = [8, 8, 128], strides = [1, 1, 1]} : vector<8x8x256xf32> to vector<8x8x128xf32>
    %116 = vector.extract_strided_slice %114 {offsets = [0, 0, 128], sizes = [8, 8, 128], strides = [1, 1, 1]} : vector<8x8x256xf32> to vector<8x8x128xf32>
    %cst_55 = arith.constant dense<0.000000e+00> : vector<8x128xf32>
    %117 = tpu.matmul %91, %93, %cst_55 {dimension_numbers = #tpu.dot_dimension_numbers<[1], [0], [0], [1], [0, 0, 1, 1], [], []>} : vector<8x128xf32>, vector<128x128xf32>, vector<8x128xf32> -> vector<8x128xf32>
    %118 = vector.broadcast %100 : vector<1x128xf32> to vector<8x128xf32>
    %119 = arith.addf %117, %118 : vector<8x128xf32>
    %120 = vector.shape_cast %119 : vector<8x128xf32> to vector<8x1x128xf32>
    %121 = vector.broadcast %120 : vector<8x1x128xf32> to vector<8x8x128xf32>
    %122 = arith.mulf %121, %115 : vector<8x8x128xf32>
    %123 = vector.shape_cast %122 : vector<8x8x128xf32> to vector<64x128xf32>
    %cst_56 = arith.constant dense<0.000000e+00> : vector<64x128xf32>
    %124 = tpu.matmul %123, %2, %cst_56 {dimension_numbers = #tpu.dot_dimension_numbers<[1], [0], [0], [1], [0, 0, 1, 1], [], []>} : vector<64x128xf32>, vector<128x128xf32>, vector<64x128xf32> -> vector<64x128xf32>
    %125 = vector.shape_cast %124 : vector<64x128xf32> to vector<8x8x128xf32>
    %cst_57 = arith.constant dense<0xFF800000> : vector<8x128xf32>
    %126 = vector.multi_reduction <maximumf>, %125, %cst_57 [1] : vector<8x8x128xf32> to vector<8x128xf32>
    %127 = vector.shape_cast %126 : vector<8x128xf32> to vector<8x1x128xf32>
    %128 = vector.broadcast %127 : vector<8x1x128xf32> to vector<8x8x128xf32>
    %129 = arith.subf %125, %128 : vector<8x8x128xf32>
    %130 = math.exp %129 : vector<8x8x128xf32>
    %cst_58 = arith.constant dense<0.000000e+00> : vector<8x128xf32>
    %131 = vector.multi_reduction <add>, %130, %cst_58 [1] : vector<8x8x128xf32> to vector<8x128xf32>
    %132 = arith.mulf %130, %116 : vector<8x8x128xf32>
    %cst_59 = arith.constant dense<0.000000e+00> : vector<8x128xf32>
    %133 = vector.multi_reduction <add>, %132, %cst_59 [1] : vector<8x8x128xf32> to vector<8x128xf32>
    %134 = tpu.reciprocal %131 {approx = true} : vector<8x128xf32> -> vector<8x128xf32>
    %135 = arith.mulf %133, %134 : vector<8x128xf32>
    %cst_60 = arith.constant dense<0.000000e+00> : vector<8x128xf32>
    %136 = tpu.matmul %135, %95, %cst_60 {dimension_numbers = #tpu.dot_dimension_numbers<[1], [0], [0], [1], [0, 0, 1, 1], [], []>} : vector<8x128xf32>, vector<128x128xf32>, vector<8x128xf32> -> vector<8x128xf32>
    %137 = vector.broadcast %101 : vector<1x128xf32> to vector<8x128xf32>
    %138 = arith.addf %136, %137 : vector<8x128xf32>
    %139 = arith.addf %138, %91 : vector<8x128xf32>
    %cst_61 = arith.constant dense<0.000000e+00> : vector<8x128xf32>
    %140 = tpu.matmul %139, %3, %cst_61 {dimension_numbers = #tpu.dot_dimension_numbers<[1], [0], [0], [1], [0, 0, 1, 1], [], []>} : vector<8x128xf32>, vector<128x128xf32>, vector<8x128xf32> -> vector<8x128xf32>
    %141 = arith.subf %139, %140 : vector<8x128xf32>
    %142 = arith.mulf %141, %141 : vector<8x128xf32>
    %cst_62 = arith.constant dense<0.000000e+00> : vector<8x128xf32>
    %143 = tpu.matmul %142, %3, %cst_62 {dimension_numbers = #tpu.dot_dimension_numbers<[1], [0], [0], [1], [0, 0, 1, 1], [], []>} : vector<8x128xf32>, vector<128x128xf32>, vector<8x128xf32> -> vector<8x128xf32>
    %cst_63 = arith.constant 9.99999974E-6 : f32
    %144 = vector.broadcast %cst_63 : f32 to vector<8x128xf32>
    %145 = arith.addf %143, %144 : vector<8x128xf32>
    %146 = math.rsqrt %145 : vector<8x128xf32>
    %147 = arith.mulf %141, %146 : vector<8x128xf32>
    %148 = vector.broadcast %104 : vector<1x128xf32> to vector<8x128xf32>
    %149 = arith.mulf %147, %148 : vector<8x128xf32>
    %150 = vector.broadcast %105 : vector<1x128xf32> to vector<8x128xf32>
    %151 = arith.addf %149, %150 : vector<8x128xf32>
    %cst_64 = arith.constant dense<0.000000e+00> : vector<8x128xf32>
    %152 = tpu.matmul %151, %97, %cst_64 {dimension_numbers = #tpu.dot_dimension_numbers<[1], [0], [0], [1], [0, 0, 1, 1], [], []>} : vector<8x128xf32>, vector<128x128xf32>, vector<8x128xf32> -> vector<8x128xf32>
    %153 = vector.broadcast %102 : vector<1x128xf32> to vector<8x128xf32>
    %154 = arith.addf %152, %153 : vector<8x128xf32>
    %cst_65 = arith.constant 0.000000e+00 : f32
    %155 = vector.broadcast %cst_65 : f32 to vector<8x128xf32>
    %156 = arith.maximumf %154, %155 : vector<8x128xf32>
    %cst_66 = arith.constant dense<0.000000e+00> : vector<8x128xf32>
    %157 = tpu.matmul %156, %99, %cst_66 {dimension_numbers = #tpu.dot_dimension_numbers<[1], [0], [0], [1], [0, 0, 1, 1], [], []>} : vector<8x128xf32>, vector<128x128xf32>, vector<8x128xf32> -> vector<8x128xf32>
    %158 = vector.broadcast %103 : vector<1x128xf32> to vector<8x128xf32>
    %159 = arith.addf %157, %158 : vector<8x128xf32>
    %160 = arith.addf %159, %151 : vector<8x128xf32>
    %cst_67 = arith.constant dense<0.000000e+00> : vector<8x128xf32>
    %161 = tpu.matmul %160, %3, %cst_67 {dimension_numbers = #tpu.dot_dimension_numbers<[1], [0], [0], [1], [0, 0, 1, 1], [], []>} : vector<8x128xf32>, vector<128x128xf32>, vector<8x128xf32> -> vector<8x128xf32>
    %162 = arith.subf %160, %161 : vector<8x128xf32>
    %163 = arith.mulf %162, %162 : vector<8x128xf32>
    %cst_68 = arith.constant dense<0.000000e+00> : vector<8x128xf32>
    %164 = tpu.matmul %163, %3, %cst_68 {dimension_numbers = #tpu.dot_dimension_numbers<[1], [0], [0], [1], [0, 0, 1, 1], [], []>} : vector<8x128xf32>, vector<128x128xf32>, vector<8x128xf32> -> vector<8x128xf32>
    %cst_69 = arith.constant 9.99999974E-6 : f32
    %165 = vector.broadcast %cst_69 : f32 to vector<8x128xf32>
    %166 = arith.addf %164, %165 : vector<8x128xf32>
    %167 = math.rsqrt %166 : vector<8x128xf32>
    %168 = arith.mulf %162, %167 : vector<8x128xf32>
    %169 = vector.broadcast %106 : vector<1x128xf32> to vector<8x128xf32>
    %170 = arith.mulf %168, %169 : vector<8x128xf32>
    %171 = vector.broadcast %107 : vector<1x128xf32> to vector<8x128xf32>
    %172 = arith.addf %170, %171 : vector<8x128xf32>
    %c0_70 = arith.constant 0 : index
    %c0_71 = arith.constant 0 : index
    %173 = vector.load %arg11[%c0_70, %c0_71] : memref<128x128xf32, #tpu.memory_space<vmem>>, vector<128x128xf32>
    %cst_72 = arith.constant dense<0.000000e+00> : vector<8x128xf32>
    %174 = tpu.matmul %172, %173, %cst_72 {dimension_numbers = #tpu.dot_dimension_numbers<[1], [0], [0], [1], [0, 0, 1, 1], [], []>} : vector<8x128xf32>, vector<128x128xf32>, vector<8x128xf32> -> vector<8x128xf32>
    %c0_73 = arith.constant 0 : index
    %c0_74 = arith.constant 0 : index
    %175 = vector.load %arg12[%c0_73, %c0_74] : memref<1x128xf32, #tpu.memory_space<vmem>>, vector<1x128xf32>
    %176 = vector.broadcast %175 : vector<1x128xf32> to vector<8x128xf32>
    %177 = arith.addf %174, %176 : vector<8x128xf32>
    %c0_75 = arith.constant 0 : index
    %c0_76 = arith.constant 0 : index
    %178 = vector.load %arg13[%c0_75, %c0_76] : memref<8x128xf32, #tpu.memory_space<vmem>>, vector<8x128xf32>
    tpu.vector_store %arg13[%c0_75, %c0_76], %177 {strides = array<i32>} : memref<8x128xf32, #tpu.memory_space<vmem>>, vector<8x128xf32>,
    return
  }
  func.func @transform_0(%arg0: i32) -> (i32, i32) {
    %c0_i32 = arith.constant 0 : i32
    %c0_i32_0 = arith.constant 0 : i32
    return %arg0, %c0_i32 : i32, i32
  }
  func.func @transform_1(%arg0: i32) -> (i32, i32) {
    %c0_i32 = arith.constant 0 : i32
    %c0_i32_0 = arith.constant 0 : i32
    return %arg0, %c0_i32 : i32, i32
  }
  func.func @transform_2(%arg0: i32) -> (i32, i32) {
    %c0_i32 = arith.constant 0 : i32
    %c0_i32_0 = arith.constant 0 : i32
    %c0_i32_1 = arith.constant 0 : i32
    return %c0_i32, %c0_i32_0 : i32, i32
  }
  func.func @transform_3(%arg0: i32) -> (i32, i32) {
    %c0_i32 = arith.constant 0 : i32
    %c0_i32_0 = arith.constant 0 : i32
    %c0_i32_1 = arith.constant 0 : i32
    return %c0_i32, %c0_i32_0 : i32, i32
  }
  func.func @transform_4(%arg0: i32) -> (i32, i32, i32) {
    %c0_i32 = arith.constant 0 : i32
    %c0_i32_0 = arith.constant 0 : i32
    %c0_i32_1 = arith.constant 0 : i32
    %c0_i32_2 = arith.constant 0 : i32
    return %c0_i32, %c0_i32_0, %c0_i32_1 : i32, i32, i32
  }
  func.func @transform_5(%arg0: i32) -> (i32, i32) {
    %c0_i32 = arith.constant 0 : i32
    %c0_i32_0 = arith.constant 0 : i32
    %c0_i32_1 = arith.constant 0 : i32
    return %c0_i32, %c0_i32_0 : i32, i32
  }
  func.func @transform_6(%arg0: i32) -> (i32, i32, i32) {
    %c0_i32 = arith.constant 0 : i32
    %c0_i32_0 = arith.constant 0 : i32
    %c0_i32_1 = arith.constant 0 : i32
    %c0_i32_2 = arith.constant 0 : i32
    return %c0_i32, %c0_i32_0, %c0_i32_1 : i32, i32, i32
  }
  func.func @transform_7(%arg0: i32) -> (i32, i32) {
    %c0_i32 = arith.constant 0 : i32
    %c0_i32_0 = arith.constant 0 : i32
    %c0_i32_1 = arith.constant 0 : i32
    return %c0_i32, %c0_i32_0 : i32, i32
  }
  func.func @transform_8(%arg0: i32) -> (i32, i32) {
    %c0_i32 = arith.constant 0 : i32
    %c0_i32_0 = arith.constant 0 : i32
    %c0_i32_1 = arith.constant 0 : i32
    return %c0_i32, %c0_i32_0 : i32, i32
  }
  func.func @transform_9(%arg0: i32) -> (i32, i32) {
    %c0_i32 = arith.constant 0 : i32
    %c0_i32_0 = arith.constant 0 : i32
    %c0_i32_1 = arith.constant 0 : i32
    return %c0_i32, %c0_i32_0 : i32, i32
  }
  func.func @transform_10(%arg0: i32) -> (i32, i32) {
    %c0_i32 = arith.constant 0 : i32
    %c0_i32_0 = arith.constant 0 : i32
    %c0_i32_1 = arith.constant 0 : i32
    return %c0_i32, %c0_i32_0 : i32, i32
  }
  func.func @transform_11(%arg0: i32) -> (i32, i32) {
    %c0_i32 = arith.constant 0 : i32
    %c0_i32_0 = arith.constant 0 : i32
    %c0_i32_1 = arith.constant 0 : i32
    return %c0_i32, %c0_i32_0 : i32, i32
  }
  func.func @transform_12(%arg0: i32) -> (i32, i32) {
    %c0_i32 = arith.constant 0 : i32
    %c0_i32_0 = arith.constant 0 : i32
    return %arg0, %c0_i32 : i32, i32
  }
}

</mosaic_0001>

<llo_original>
// kernel: tpu_custom_call.1
$region0: #{tpu_custom_call.1}
  #allocation0 [shape = 'u32[]', space=smem, size = 0x4, offset = 0x4, fixed_abs, tag = 'smem constant byte address 0x4 - core index']
  #allocation1 [shape = 'u32[144,128]{1,0:T(1,128)}', space=vmem, size = 0x12000, scoped, tag = 'internal scratch']
  %s0 = inlined_call_operand.hbm [shape: f32[8,12], index: 0, kind: input, shape index: {}]
  %s1 = inlined_call_operand.hbm [shape: f32[64,64], index: 1, kind: input, shape index: {}]
  %s2 = inlined_call_operand.hbm [shape: f32[12,128], index: 2, kind: input, shape index: {}]
  %s3 = inlined_call_operand.vmem [shape: f32[1,128], index: 3, kind: input, shape index: {}]
  %s4 = inlined_call_operand.hbm [shape: f32[2,64,256], index: 4, kind: input, shape index: {}]
  %s5 = inlined_call_operand.vmem [shape: f32[2,256], index: 5, kind: input, shape index: {}]
  %s6 = inlined_call_operand.hbm [shape: f32[8,128,128], index: 6, kind: input, shape index: {}]
  %s7 = inlined_call_operand.hbm [shape: f32[16,128], index: 7, kind: input, shape index: {}]
  %s8 = inlined_call_operand.hbm [shape: f32[128,128], index: 8, kind: input, shape index: {}]
  %s9 = inlined_call_operand.hbm [shape: f32[128,128], index: 9, kind: input, shape index: {}]
  %s10 = inlined_call_operand.hbm [shape: f32[128,128], index: 10, kind: input, shape index: {}]
  %s11 = inlined_call_operand.vmem [shape: f32[1,128], index: 11, kind: input, shape index: {}]
  %s12 = inlined_call_operand.hbm [shape: f32[8,128], index: 12, kind: output, shape index: {}]
  %s13 = sld [smem:[#allocation0]]
  $region94: #{tpu_custom_call.1} parent=0
    _
  %s15 = ssub.s32 1, %s13
  %s16 = scalar_select 0, %s15, %s13
  $region1: #{tpu_custom_call.1} parent=0
    #allocation2 [shape = 'u8[4096]{0}', space=vmem, size = 0x1000, scoped, tag = 'input window, operand 0, single buffered']
    #allocation3 [shape = 's32[1]{0}', space=sflag, size = 0x4, scoped, tag = 'scoped memory for tpu_custom_call.1']
    #allocation4 [shape = 's32[1]{0}', space=sflag, size = 0x4, scoped, tag = 'scoped memory for tpu_custom_call.1']
    #allocation5 [shape = 'u8[32768]{0}', space=vmem, size = 0x8000, scoped, tag = 'input window, operand 1, single buffered']
    #allocation6 [shape = 's32[1]{0}', space=sflag, size = 0x4, scoped, tag = 'scoped memory for tpu_custom_call.1']
    #allocation7 [shape = 'u8[8192]{0}', space=vmem, size = 0x2000, scoped, tag = 'input window, operand 2, single buffered']
    #allocation8 [shape = 'u8[131072]{0}', space=vmem, size = 0x20000, scoped, tag = 'input window, operand 4, single buffered']
    #allocation9 [shape = 's32[1]{0}', space=sflag, size = 0x4, scoped, tag = 'scoped memory for tpu_custom_call.1']
    #allocation10 [shape = 'u8[524288]{0}', space=vmem, size = 0x80000, scoped, tag = 'input window, operand 6, single buffered']
    #allocation11 [shape = 'u8[8192]{0}', space=vmem, size = 0x2000, scoped, tag = 'input window, operand 7, single buffered']
    #allocation12 [shape = 's32[1]{0}', space=sflag, size = 0x4, scoped, tag = 'scoped memory for tpu_custom_call.1']
    #allocation13 [shape = 'u8[65536]{0}', space=vmem, size = 0x10000, scoped, tag = 'input window, operand 8, single buffered']
    #allocation14 [shape = 'u8[65536]{0}', space=vmem, size = 0x10000, scoped, tag = 'input window, operand 9, single buffered']
    #allocation15 [shape = 's32[1]{0}', space=sflag, size = 0x4, scoped, tag = 'scoped memory for tpu_custom_call.1']
    #allocation16 [shape = 'u8[65536]{0}', space=vmem, size = 0x10000, scoped, tag = 'input window, operand 10, single buffered']
    #allocation17 [shape = 'u8[4096]{0}', space=vmem, size = 0x1000, scoped, tag = 'output window, operand 0, single buffered']
    %17 = vsyncpa [#allocation3], 0
    %18 = vsyncpa [#allocation6], 0
    %19 = vsyncpa [#allocation9], 0
    %20 = vsyncpa [#allocation12], 0
    %21 = vsyncpa [#allocation15], 0
    %22 = vsyncpa [#allocation4], 0
    // Predicated region
    $region2: #{tpu_custom_call.1} parent=1 // pred_check
      _
    $region3: #{tpu_custom_call.1} parent=1 // pred_check_branch
      %24 = sbr.rel (0) target = $region5
    $region4: #{tpu_custom_call.1} parent=1 // pred_region
      %s26 = ssub.s32 128, 128
      %27 = vsyncadd [#allocation3], %s26
      %s29 = sshll.u32 [#allocation2], 4
      %s30 = int_to_ptr.vmem [resolvable:$true] %s29
      %32 = dma.hbm_to_vmem [thread:$0]  %s0, 128, %s30, [#allocation3]
    $region5: #{tpu_custom_call.1} parent=1 // pred_fallthru
      _
    // Predicated region
    $region6: #{tpu_custom_call.1} parent=1 // pred_check
      _
    $region7: #{tpu_custom_call.1} parent=1 // pred_check_branch
      %34 = sbr.rel (0) target = $region9
    $region8: #{tpu_custom_call.1} parent=1 // pred_region
      %s36 = ssub.s32 1024, 1024
      %37 = vsyncadd [#allocation6], %s36
      %s38 = sshll.u32 [#allocation5], 4
      %s39 = int_to_ptr.vmem [resolvable:$true] %s38
      %44 = dma.hbm_to_vmem [thread:$0]  %s1, 1024, %s39, [#allocation6], 128, 128, 8
    $region9: #{tpu_custom_call.1} parent=1 // pred_fallthru
      _
    // Predicated region
    $region10: #{tpu_custom_call.1} parent=1 // pred_check
      _
    $region11: #{tpu_custom_call.1} parent=1 // pred_check_branch
      %46 = sbr.rel (0) target = $region13
    $region12: #{tpu_custom_call.1} parent=1 // pred_region
      %s48 = ssub.s32 256, 256
      %49 = vsyncadd [#allocation6], %s48
      %s50 = sshll.u32 [#allocation7], 4
      %s51 = int_to_ptr.vmem [resolvable:$true] %s50
      %56 = dma.hbm_to_vmem [thread:$0]  %s2, 256, %s51, [#allocation6], 128, 128, 8
    $region13: #{tpu_custom_call.1} parent=1 // pred_fallthru
      _
    // Predicated region
    $region14: #{tpu_custom_call.1} parent=1 // pred_check
      _
    $region15: #{tpu_custom_call.1} parent=1 // pred_check_branch
      %58 = sbr.rel (0) target = $region17
    $region16: #{tpu_custom_call.1} parent=1 // pred_region
      _
    $region17: #{tpu_custom_call.1} parent=1 // pred_fallthru
      _
    // Predicated region
    $region18: #{tpu_custom_call.1} parent=1 // pred_check
      _
    $region19: #{tpu_custom_call.1} parent=1 // pred_check_branch
      %60 = sbr.rel (0) target = $region21
    $region20: #{tpu_custom_call.1} parent=1 // pred_region
      %s62 = ssub.s32 4096, 4096
      %63 = vsyncadd [#allocation9], %s62
      %s64 = sshll.u32 [#allocation8], 4
      %s65 = int_to_ptr.vmem [resolvable:$true] %s64
      %70 = dma.hbm_to_vmem [thread:$0]  %s4, 4096, %s65, [#allocation9], 256, 256, 16
    $region21: #{tpu_custom_call.1} parent=1 // pred_fallthru
      _
    // Predicated region
    $region22: #{tpu_custom_call.1} parent=1 // pred_check
      _
    $region23: #{tpu_custom_call.1} parent=1 // pred_check_branch
      %72 = sbr.rel (0) target = $region25
    $region24: #{tpu_custom_call.1} parent=1 // pred_region
      _
    $region25: #{tpu_custom_call.1} parent=1 // pred_fallthru
      _
    // Predicated region
    $region26: #{tpu_custom_call.1} parent=1 // pred_check
      _
    $region27: #{tpu_custom_call.1} parent=1 // pred_check_branch
      %74 = sbr.rel (0) target = $region29
    $region28: #{tpu_custom_call.1} parent=1 // pred_region
      %s76 = ssub.s32 16384, 16384
      %77 = vsyncadd [#allocation9], %s76
      %s78 = sshll.u32 [#allocation10], 4
      %s79 = int_to_ptr.vmem [resolvable:$true] %s78
      %84 = dma.hbm_to_vmem [thread:$0]  %s6, 16384, %s79, [#allocation9], 128, 128, 8
    $region29: #{tpu_custom_call.1} parent=1 // pred_fallthru
      _
    // Predicated region
    $region30: #{tpu_custom_call.1} parent=1 // pred_check
      _
    $region31: #{tpu_custom_call.1} parent=1 // pred_check_branch
      %86 = sbr.rel (0) target = $region33
    $region32: #{tpu_custom_call.1} parent=1 // pred_region
      %s88 = ssub.s32 256, 256
      %89 = vsyncadd [#allocation12], %s88
      %s90 = sshll.u32 [#allocation11], 4
      %s91 = int_to_ptr.vmem [resolvable:$true] %s90
      %96 = dma.hbm_to_vmem [thread:$0]  %s7, 256, %s91, [#allocation12], 128, 128, 8
    $region33: #{tpu_custom_call.1} parent=1 // pred_fallthru
      _
    // Predicated region
    $region34: #{tpu_custom_call.1} parent=1 // pred_check
      _
    $region35: #{tpu_custom_call.1} parent=1 // pred_check_branch
      %98 = sbr.rel (0) target = $region37
    $region36: #{tpu_custom_call.1} parent=1 // pred_region
      %s100 = ssub.s32 2048, 2048
      %101 = vsyncadd [#allocation12], %s100
      %s102 = sshll.u32 [#allocation13], 4
      %s103 = int_to_ptr.vmem [resolvable:$true] %s102
      %108 = dma.hbm_to_vmem [thread:$0]  %s8, 2048, %s103, [#allocation12], 128, 128, 8
    $region37: #{tpu_custom_call.1} parent=1 // pred_fallthru
      _
    // Predicated region
    $region38: #{tpu_custom_call.1} parent=1 // pred_check
      _
    $region39: #{tpu_custom_call.1} parent=1 // pred_check_branch
      %110 = sbr.rel (0) target = $region41
    $region40: #{tpu_custom_call.1} parent=1 // pred_region
      %s112 = ssub.s32 2048, 2048
      %113 = vsyncadd [#allocation15], %s112
      %s114 = sshll.u32 [#allocation14], 4
      %s115 = int_to_ptr.vmem [resolvable:$true] %s114
      %120 = dma.hbm_to_vmem [thread:$0]  %s9, 2048, %s115, [#allocation15], 128, 128, 8
    $region41: #{tpu_custom_call.1} parent=1 // pred_fallthru
      _
    // Predicated region
    $region42: #{tpu_custom_call.1} parent=1 // pred_check
      _
    $region43: #{tpu_custom_call.1} parent=1 // pred_check_branch
      %122 = sbr.rel (0) target = $region45
    $region44: #{tpu_custom_call.1} parent=1 // pred_region
      %s124 = ssub.s32 2048, 2048
      %125 = vsyncadd [#allocation15], %s124
      %s126 = sshll.u32 [#allocation16], 4
      %s127 = int_to_ptr.vmem [resolvable:$true] %s126
      %132 = dma.hbm_to_vmem [thread:$0]  %s10, 2048, %s127, [#allocation15], 128, 128, 8
    $region45: #{tpu_custom_call.1} parent=1 // pred_fallthru
      _
    // Predicated region
    $region46: #{tpu_custom_call.1} parent=1 // pred_check
      _
    $region47: #{tpu_custom_call.1} parent=1 // pred_check_branch
      %134 = sbr.rel (0) target = $region49
    $region48: #{tpu_custom_call.1} parent=1 // pred_region
      _
    $region49: #{tpu_custom_call.1} parent=1 // pred_fallthru
      _
    // Predicated region
    $region50: #{tpu_custom_call.1} parent=1 // pred_check
      _
    $region51: #{tpu_custom_call.1} parent=1 // pred_check_branch
      %136 = sbr.rel (0) target = $region53
    $region52: #{tpu_custom_call.1} parent=1 // pred_region
      %137 = dma.done [#allocation3], 128
    $region53: #{tpu_custom_call.1} parent=1 // pred_fallthru
      _
    // Predicated region
    $region54: #{tpu_custom_call.1} parent=1 // pred_check
      _
    $region55: #{tpu_custom_call.1} parent=1 // pred_check_branch
      %139 = sbr.rel (0) target = $region57
    $region56: #{tpu_custom_call.1} parent=1 // pred_region
      %140 = dma.done [#allocation6], 1024
    $region57: #{tpu_custom_call.1} parent=1 // pred_fallthru
      _
    // Predicated region
    $region58: #{tpu_custom_call.1} parent=1 // pred_check
      _
    $region59: #{tpu_custom_call.1} parent=1 // pred_check_branch
      %142 = sbr.rel (0) target = $region61
    $region60: #{tpu_custom_call.1} parent=1 // pred_region
      %143 = dma.done [#allocation6], 256
    $region61: #{tpu_custom_call.1} parent=1 // pred_fallthru
      _
    // Predicated region
    $region62: #{tpu_custom_call.1} parent=1 // pred_check
      _
    $region63: #{tpu_custom_call.1} parent=1 // pred_check_branch
      %145 = sbr.rel (0) target = $region65
    $region64: #{tpu_custom_call.1} parent=1 // pred_region
      %146 = dma.done [#allocation9], 4096
    $region65: #{tpu_custom_call.1} parent=1 // pred_fallthru
      _
    // Predicated region
    $region66: #{tpu_custom_call.1} parent=1 // pred_check
      _
    $region67: #{tpu_custom_call.1} parent=1 // pred_check_branch
      %148 = sbr.rel (0) target = $region69
    $region68: #{tpu_custom_call.1} parent=1 // pred_region
      %149 = dma.done [#allocation9], 16384
    $region69: #{tpu_custom_call.1} parent=1 // pred_fallthru
      _
    // Predicated region
    $region70: #{tpu_custom_call.1} parent=1 // pred_check
      _
    $region71: #{tpu_custom_call.1} parent=1 // pred_check_branch
      %151 = sbr.rel (0) target = $region73
    $region72: #{tpu_custom_call.1} parent=1 // pred_region
      %152 = dma.done [#allocation12], 256
    $region73: #{tpu_custom_call.1} parent=1 // pred_fallthru
      _
    // Predicated region
    $region74: #{tpu_custom_call.1} parent=1 // pred_check
      _
    $region75: #{tpu_custom_call.1} parent=1 // pred_check_branch
      %154 = sbr.rel (0) target = $region77
    $region76: #{tpu_custom_call.1} parent=1 // pred_region
      %155 = dma.done [#allocation12], 2048
    $region77: #{tpu_custom_call.1} parent=1 // pred_fallthru
      _
    // Predicated region
    $region78: #{tpu_custom_call.1} parent=1 // pred_check
      _
    $region79: #{tpu_custom_call.1} parent=1 // pred_check_branch
      %157 = sbr.rel (0) target = $region81
    $region80: #{tpu_custom_call.1} parent=1 // pred_region
      %158 = dma.done [#allocation15], 2048
    $region81: #{tpu_custom_call.1} parent=1 // pred_fallthru
      _
    // Predicated region
    $region82: #{tpu_custom_call.1} parent=1 // pred_check
      _
    $region83: #{tpu_custom_call.1} parent=1 // pred_check_branch
      %160 = sbr.rel (0) target = $region85
    $region84: #{tpu_custom_call.1} parent=1 // pred_region
      %161 = dma.done [#allocation15], 2048
    $region85: #{tpu_custom_call.1} parent=1 // pred_fallthru
      _
    %v162 = vld [vmem:[#allocation2] sm:$0xff]
    %v163 = vld [vmem:[#allocation5] sm:$0xff]
    %v164 = vld [vmem:[#allocation5 + $0x8] sm:$0xff]
    %v165 = vld [vmem:[#allocation5 + $0x10] sm:$0xff]
    %v166 = vld [vmem:[#allocation5 + $0x18] sm:$0xff]
    %v167 = vld [vmem:[#allocation5 + $0x20] sm:$0xff]
    %v168 = vld [vmem:[#allocation5 + $0x28] sm:$0xff]
    %v169 = vld [vmem:[#allocation5 + $0x30] sm:$0xff]
    %v170 = vld [vmem:[#allocation5 + $0x38] sm:$0xff]
    %v171 = vld [vmem:[#allocation13] sm:$0xff]
    %v172 = vld [vmem:[#allocation13 + $0x8] sm:$0xff]
    %v173 = vld [vmem:[#allocation13 + $0x10] sm:$0xff]
    %v174 = vld [vmem:[#allocation13 + $0x18] sm:$0xff]
    %v175 = vld [vmem:[#allocation13 + $0x20] sm:$0xff]
    %v176 = vld [vmem:[#allocation13 + $0x28] sm:$0xff]
    %v177 = vld [vmem:[#allocation13 + $0x30] sm:$0xff]
    %v178 = vld [vmem:[#allocation13 + $0x38] sm:$0xff]
    %v179 = vld [vmem:[#allocation13 + $0x40] sm:$0xff]
    %v180 = vld [vmem:[#allocation13 + $0x48] sm:$0xff]
    %v181 = vld [vmem:[#allocation13 + $0x50] sm:$0xff]
    %v182 = vld [vmem:[#allocation13 + $0x58] sm:$0xff]
    %v183 = vld [vmem:[#allocation13 + $0x60] sm:$0xff]
    %v184 = vld [vmem:[#allocation13 + $0x68] sm:$0xff]
    %v185 = vld [vmem:[#allocation13 + $0x70] sm:$0xff]
    %v186 = vld [vmem:[#allocation13 + $0x78] sm:$0xff]
    %v187 = vld [vmem:[#allocation14] sm:$0xff]
    %v188 = vld [vmem:[#allocation14 + $0x8] sm:$0xff]
    %v189 = vld [vmem:[#allocation14 + $0x10] sm:$0xff]
    %v190 = vld [vmem:[#allocation14 + $0x18] sm:$0xff]
    %v191 = vld [vmem:[#allocation14 + $0x20] sm:$0xff]
    %v192 = vld [vmem:[#allocation14 + $0x28] sm:$0xff]
    %v193 = vld [vmem:[#allocation14 + $0x30] sm:$0xff]
    %v194 = vld [vmem:[#allocation14 + $0x38] sm:$0xff]
    %v195 = vld [vmem:[#allocation14 + $0x40] sm:$0xff]
    %v196 = vld [vmem:[#allocation14 + $0x48] sm:$0xff]
    %v197 = vld [vmem:[#allocation14 + $0x50] sm:$0xff]
    %v198 = vld [vmem:[#allocation14 + $0x58] sm:$0xff]
    %v199 = vld [vmem:[#allocation14 + $0x60] sm:$0xff]
    %v200 = vld [vmem:[#allocation14 + $0x68] sm:$0xff]
    %v201 = vld [vmem:[#allocation14 + $0x70] sm:$0xff]
    %v202 = vld [vmem:[#allocation14 + $0x78] sm:$0xff]
    %v203 = vld [vmem:[#allocation11] sm:$0xff]
    %v204 = vld [vmem:[#allocation11 + $0x8] sm:$0xff]
    %v205 = vld [vmem:[%s5] sm:$0xf]
    %v206 = vld [vmem:[#allocation7] sm:$0xff]
    %v207 = vld [vmem:[#allocation7 + $0x8] sm:$0xf]
    %v208 = vld [vmem:[%s3] sm:$0x1]
    %v210 = vlaneseq
    %v211 = vshrl.u32 %v210, 7
    %v212 = vsub.s32 0, %v211
    %v213 = vrot.slane %v208, %v212
    %vm215 = vcmask 97280
    %v217 = vsel %vm215, %v162, 0
    %vm219 = vcmask 1043456
    %v221 = vsel %vm219, %v207, 0
    %223 = vmatprep.subr.mxu0 0.0
    %224 = vmatpush1.msra.mxu0 0.0
    %225 = vmatprep.subr.mxu0 0.0
    %226 = vmatpush1.msra.mxu0 0.0
    %227 = vmatprep.subr.mxu0 0.0
    %228 = vmatpush1.msra.mxu0 0.0
    %229 = vmatprep.subr.mxu0 0.0
    %230 = vmatpush1.msra.mxu0 0.0
    %231 = vmatprep.subr.mxu0 0.0
    %232 = vmatpush1.msra.mxu0 0.0
    %233 = vmatprep.subr.mxu0 0.0
    %234 = vmatpush1.msra.mxu0 0.0
    %235 = vmatprep.subr.mxu0 0.0
    %236 = vmatpush1.msra.mxu0 0.0
    %237 = vmatprep.subr.mxu0 0.0
    %238 = vmatpush1.msra.mxu0 0.0
    %239 = vmatprep.subr.mxu0 0.0
    %240 = vmatpush1.msra.mxu0 0.0
    %241 = vmatprep.subr.mxu0 0.0
    %242 = vmatpush1.msra.mxu0 0.0
    %243 = vmatprep.subr.mxu0 0.0
    %244 = vmatpush1.msra.mxu0 0.0
    %245 = vmatprep.subr.mxu0 0.0
    %246 = vmatpush1.msra.mxu0 0.0
    %247 = vmatprep.subr.mxu0 0.0
    %248 = vmatpush1.msra.mxu0 0.0
    %249 = vmatprep.subr.mxu0 0.0
    %250 = vmatpush1.msra.mxu0 0.0
    %251 = vmatprep.subr.mxu0 0.0
    %252 = vmatpush1.msra.mxu0 %v221
    %253 = vmatprep.subr.mxu0 0.0
    %254 = vmatpush1.msra.mxu0 %v206
    %255 = vmatprep.subr.mxu0 0.0
    %256 = vmatpush2.msra.mxu0 0.0
    %257 = vmatprep.subr.mxu0 0.0
    %258 = vmatpush2.msra.mxu0 0.0
    %259 = vmatprep.subr.mxu0 0.0
    %260 = vmatpush2.msra.mxu0 0.0
    %261 = vmatprep.subr.mxu0 0.0
    %262 = vmatpush2.msra.mxu0 0.0
    %263 = vmatprep.subr.mxu0 0.0
    %264 = vmatpush2.msra.mxu0 0.0
    %265 = vmatprep.subr.mxu0 0.0
    %266 = vmatpush2.msra.mxu0 0.0
    %267 = vmatprep.subr.mxu0 0.0
    %268 = vmatpush2.msra.mxu0 0.0
    %269 = vmatprep.subr.mxu0 0.0
    %270 = vmatpush2.msra.mxu0 0.0
    %271 = vmatprep.subr.mxu0 0.0
    %272 = vmatpush2.msra.mxu0 0.0
    %273 = vmatprep.subr.mxu0 0.0
    %274 = vmatpush2.msra.mxu0 0.0
    %275 = vmatprep.subr.mxu0 0.0
    %276 = vmatpush2.msra.mxu0 0.0
    %277 = vmatprep.subr.mxu0 0.0
    %278 = vmatpush2.msra.mxu0 0.0
    %279 = vmatprep.subr.mxu0 0.0
    %280 = vmatpush2.msra.mxu0 0.0
    %281 = vmatprep.subr.mxu0 0.0
    %282 = vmatpush2.msra.mxu0 0.0
    %283 = vmatprep.subr.mxu0 0.0
    %284 = vmatpush2.msra.mxu0 0.0
    %285 = vmatprep.subr.mxu0 0.0
    %286 = vmatpush2.msra.mxu0 0.0
    %287 = vmatprep.mubr.f32.mxu0 0.0
    %288 = vmatmul.mubr.f32.gmra.mxu0 %v217
    %v289 = vpop.f32.mrf.mxu0
    %v290 = vadd.f32 %v213, %v289
    %v291 = vpop.f32.mrf.mxu0
    %292 = vdwg.mxu0
    %v293 = vld [vmem:[#allocation10] sm:$0xff]
    %v294 = vld [vmem:[#allocation10 + $0x8] sm:$0xff]
    %v295 = vld [vmem:[#allocation10 + $0x10] sm:$0xff]
    %v296 = vld [vmem:[#allocation10 + $0x18] sm:$0xff]
    %v297 = vld [vmem:[#allocation10 + $0x20] sm:$0xff]
    %v298 = vld [vmem:[#allocation10 + $0x28] sm:$0xff]
    %v299 = vld [vmem:[#allocation10 + $0x30] sm:$0xff]
    %v300 = vld [vmem:[#allocation10 + $0x38] sm:$0xff]
    %v301 = vld [vmem:[#allocation10 + $0x40] sm:$0xff]
    %v302 = vld [vmem:[#allocation10 + $0x48] sm:$0xff]
    %v303 = vld [vmem:[#allocation10 + $0x50] sm:$0xff]
    %v304 = vld [vmem:[#allocation10 + $0x58] sm:$0xff]
    %v305 = vld [vmem:[#allocation10 + $0x60] sm:$0xff]
    %v306 = vld [vmem:[#allocation10 + $0x68] sm:$0xff]
    %v307 = vld [vmem:[#allocation10 + $0x70] sm:$0xff]
    %v308 = vld [vmem:[#allocation10 + $0x78] sm:$0xff]
    %s309 = scalar_lea.vmem [#allocation10], 128
    %v310 = vld [vmem:[%s309] sm:$0xff]
    %v311 = vld [vmem:[%s309 + $0x8] sm:$0xff]
    %v312 = vld [vmem:[%s309 + $0x10] sm:$0xff]
    %v313 = vld [vmem:[%s309 + $0x18] sm:$0xff]
    %v314 = vld [vmem:[%s309 + $0x20] sm:$0xff]
    %v315 = vld [vmem:[%s309 + $0x28] sm:$0xff]
    %v316 = vld [vmem:[%s309 + $0x30] sm:$0xff]
    %v317 = vld [vmem:[%s309 + $0x38] sm:$0xff]
    %v318 = vld [vmem:[%s309 + $0x40] sm:$0xff]
    %v319 = vld [vmem:[%s309 + $0x48] sm:$0xff]
    %v320 = vld [vmem:[%s309 + $0x50] sm:$0xff]
    %v321 = vld [vmem:[%s309 + $0x58] sm:$0xff]
    %v322 = vld [vmem:[%s309 + $0x60] sm:$0xff]
    %v323 = vld [vmem:[%s309 + $0x68] sm:$0xff]
    %v324 = vld [vmem:[%s309 + $0x70] sm:$0xff]
    %v325 = vld [vmem:[%s309 + $0x78] sm:$0xff]
    %s326 = scalar_lea.vmem [#allocation10], 256
    %v327 = vld [vmem:[%s326] sm:$0xff]
    %v328 = vld [vmem:[%s326 + $0x8] sm:$0xff]
    %v329 = vld [vmem:[%s326 + $0x10] sm:$0xff]
    %v330 = vld [vmem:[%s326 + $0x18] sm:$0xff]
    %v331 = vld [vmem:[%s326 + $0x20] sm:$0xff]
    %v332 = vld [vmem:[%s326 + $0x28] sm:$0xff]
    %v333 = vld [vmem:[%s326 + $0x30] sm:$0xff]
    %v334 = vld [vmem:[%s326 + $0x38] sm:$0xff]
    %v335 = vld [vmem:[%s326 + $0x40] sm:$0xff]
    %v336 = vld [vmem:[%s326 + $0x48] sm:$0xff]
    %v337 = vld [vmem:[%s326 + $0x50] sm:$0xff]
    %v338 = vld [vmem:[%s326 + $0x58] sm:$0xff]
    %v339 = vld [vmem:[%s326 + $0x60] sm:$0xff]
    %v340 = vld [vmem:[%s326 + $0x68] sm:$0xff]
    %v341 = vld [vmem:[%s326 + $0x70] sm:$0xff]
    %v342 = vld [vmem:[%s326 + $0x78] sm:$0xff]
    %s343 = scalar_lea.vmem [#allocation10], 384
    %v344 = vld [vmem:[%s343] sm:$0xff]
    %v345 = vld [vmem:[%s343 + $0x8] sm:$0xff]
    %v346 = vld [vmem:[%s343 + $0x10] sm:$0xff]
    %v347 = vld [vmem:[%s343 + $0x18] sm:$0xff]
    %v348 = vld [vmem:[%s343 + $0x20] sm:$0xff]
    %v349 = vld [vmem:[%s343 + $0x28] sm:$0xff]
    %v350 = vld [vmem:[%s343 + $0x30] sm:$0xff]
    %v351 = vld [vmem:[%s343 + $0x38] sm:$0xff]
    %v352 = vld [vmem:[%s343 + $0x40] sm:$0xff]
    %v353 = vld [vmem:[%s343 + $0x48] sm:$0xff]
    %v354 = vld [vmem:[%s343 + $0x50] sm:$0xff]
    %v355 = vld [vmem:[%s343 + $0x58] sm:$0xff]
    %v356 = vld [vmem:[%s343 + $0x60] sm:$0xff]
    %v357 = vld [vmem:[%s343 + $0x68] sm:$0xff]
    %v358 = vld [vmem:[%s343 + $0x70] sm:$0xff]
    %v359 = vld [vmem:[%s343 + $0x78] sm:$0xff]
    %v360 = vld [vmem:[#allocation8] sm:$0xff]
    %v361 = vld [vmem:[#allocation8 + $0x8] sm:$0xff]
    %v362 = vld [vmem:[#allocation8 + $0x10] sm:$0xff]
    %v363 = vld [vmem:[#allocation8 + $0x18] sm:$0xff]
    %v364 = vld [vmem:[#allocation8 + $0x20] sm:$0xff]
    %v365 = vld [vmem:[#allocation8 + $0x28] sm:$0xff]
    %v366 = vld [vmem:[#allocation8 + $0x30] sm:$0xff]
    %v367 = vld [vmem:[#allocation8 + $0x38] sm:$0xff]
    %v368 = vld [vmem:[#allocation8 + $0x40] sm:$0xff]
    %v369 = vld [vmem:[#allocation8 + $0x48] sm:$0xff]
    %v370 = vld [vmem:[#allocation8 + $0x50] sm:$0xff]
    %v371 = vld [vmem:[#allocation8 + $0x58] sm:$0xff]
    %v372 = vld [vmem:[#allocation8 + $0x60] sm:$0xff]
    %v373 = vld [vmem:[#allocation8 + $0x68] sm:$0xff]
    %v374 = vld [vmem:[#allocation8 + $0x70] sm:$0xff]
    %v375 = vld [vmem:[#allocation8 + $0x78] sm:$0xff]
    %v377 = vlaneseq
    %v378 = vshrl.u32 %v377, 7
    %v379 = vsub.s32 0, %v378
    %v380 = vrot.slane %v205, %v379
    %v381 = vlaneseq
    %v382 = vshrl.u32 %v381, 7
    %v383 = vsub.s32 2, %v382
    %v384 = vrot.slane %v205, %v383
    %v387 = vlaneseq
    %v388 = vshrl.u32 %v387, 7
    %v389 = vsub.s32 0, %v388
    %v390 = vrot.slane %v380, %v389
    %v391 = vlaneseq
    %v392 = vshrl.u32 %v391, 7
    %v393 = vsub.s32 0, %v392
    %v394 = vrot.slane %v384, %v393
    %vm395 = vcmask 523264
    %v397 = vsel %vm395, %v163, 0
    %v400 = vsel %vm395, %v164, 0
    %v403 = vsel %vm395, %v165, 0
    %v406 = vsel %vm395, %v166, 0
    %v409 = vsel %vm395, %v167, 0
    %v412 = vsel %vm395, %v168, 0
    %v415 = vsel %vm395, %v169, 0
    %v418 = vsel %vm395, %v170, 0
    %420 = vmatprep.subr.mxu0 0.0
    %421 = vmatpush1.msra.mxu0 0.0
    %422 = vmatprep.subr.mxu0 0.0
    %423 = vmatpush1.msra.mxu0 0.0
    %424 = vmatprep.subr.mxu0 0.0
    %425 = vmatpush1.msra.mxu0 0.0
    %426 = vmatprep.subr.mxu0 0.0
    %427 = vmatpush1.msra.mxu0 0.0
    %428 = vmatprep.subr.mxu0 0.0
    %429 = vmatpush1.msra.mxu0 0.0
    %430 = vmatprep.subr.mxu0 0.0
    %431 = vmatpush1.msra.mxu0 0.0
    %432 = vmatprep.subr.mxu0 0.0
    %433 = vmatpush1.msra.mxu0 0.0
    %434 = vmatprep.subr.mxu0 0.0
    %435 = vmatpush1.msra.mxu0 0.0
    %436 = vmatprep.subr.mxu0 %v375
    %437 = vmatpush1.msra.mxu0 %v374
    %438 = vmatprep.subr.mxu0 %v373
    %439 = vmatpush1.msra.mxu0 %v372
    %440 = vmatprep.subr.mxu0 %v371
    %441 = vmatpush1.msra.mxu0 %v370
    %442 = vmatprep.subr.mxu0 %v369
    %443 = vmatpush1.msra.mxu0 %v368
    %444 = vmatprep.subr.mxu0 %v367
    %445 = vmatpush1.msra.mxu0 %v366
    %446 = vmatprep.subr.mxu0 %v365
    %447 = vmatpush1.msra.mxu0 %v364
    %448 = vmatprep.subr.mxu0 %v363
    %449 = vmatpush1.msra.mxu0 %v362
    %450 = vmatprep.subr.mxu0 %v361
    %451 = vmatpush1.msra.mxu0 %v360
    %452 = vmatprep.subr.mxu0 0.0
    %453 = vmatpush2.msra.mxu0 0.0
    %454 = vmatprep.subr.mxu0 0.0
    %455 = vmatpush2.msra.mxu0 0.0
    %456 = vmatprep.subr.mxu0 0.0
    %457 = vmatpush2.msra.mxu0 0.0
    %458 = vmatprep.subr.mxu0 0.0
    %459 = vmatpush2.msra.mxu0 0.0
    %460 = vmatprep.subr.mxu0 0.0
    %461 = vmatpush2.msra.mxu0 0.0
    %462 = vmatprep.subr.mxu0 0.0
    %463 = vmatpush2.msra.mxu0 0.0
    %464 = vmatprep.subr.mxu0 0.0
    %465 = vmatpush2.msra.mxu0 0.0
    %466 = vmatprep.subr.mxu0 0.0
    %467 = vmatpush2.msra.mxu0 0.0
    %468 = vmatprep.subr.mxu0 0.0
    %469 = vmatpush2.msra.mxu0 0.0
    %470 = vmatprep.subr.mxu0 0.0
    %471 = vmatpush2.msra.mxu0 0.0
    %472 = vmatprep.subr.mxu0 0.0
    %473 = vmatpush2.msra.mxu0 0.0
    %474 = vmatprep.subr.mxu0 0.0
    %475 = vmatpush2.msra.mxu0 0.0
    %476 = vmatprep.subr.mxu0 0.0
    %477 = vmatpush2.msra.mxu0 0.0
    %478 = vmatprep.subr.mxu0 0.0
    %479 = vmatpush2.msra.mxu0 0.0
    %480 = vmatprep.subr.mxu0 0.0
    %481 = vmatpush2.msra.mxu0 0.0
    %482 = vmatprep.subr.mxu0 0.0
    %483 = vmatpush2.msra.mxu0 0.0
    %484 = vmatprep.mubr.f32.mxu0 0.0
    %485 = vmatmul.mubr.f32.gmra.mxu0 %v397
    %v486 = vpop.f32.mrf.mxu0
    %v487 = vadd.f32 %v390, %v486
    %v488 = vpop.f32.mrf.mxu0
    %v489 = vadd.f32 %v394, %v488
    %490 = vmatprep.mubr.f32.mxu0 0.0
    %491 = vmatmul.mubr.f32.gmra.mxu0 %v400
    %v492 = vpop.f32.mrf.mxu0
    %v493 = vadd.f32 %v390, %v492
    %v494 = vpop.f32.mrf.mxu0
    %v495 = vadd.f32 %v394, %v494
    %496 = vmatprep.mubr.f32.mxu0 0.0
    %497 = vmatmul.mubr.f32.gmra.mxu0 %v403
    %v498 = vpop.f32.mrf.mxu0
    %v499 = vadd.f32 %v390, %v498
    %v500 = vpop.f32.mrf.mxu0
    %v501 = vadd.f32 %v394, %v500
    %502 = vmatprep.mubr.f32.mxu0 0.0
    %503 = vmatmul.mubr.f32.gmra.mxu0 %v406
    %v504 = vpop.f32.mrf.mxu0
    %v505 = vadd.f32 %v390, %v504
    %v506 = vpop.f32.mrf.mxu0
    %v507 = vadd.f32 %v394, %v506
    %508 = vmatprep.mubr.f32.mxu0 0.0
    %509 = vmatmul.mubr.f32.gmra.mxu0 %v409
    %v510 = vpop.f32.mrf.mxu0
    %v511 = vadd.f32 %v390, %v510
    %v512 = vpop.f32.mrf.mxu0
    %v513 = vadd.f32 %v394, %v512
    %514 = vmatprep.mubr.f32.mxu0 0.0
    %515 = vmatmul.mubr.f32.gmra.mxu0 %v412
    %v516 = vpop.f32.mrf.mxu0
    %v517 = vadd.f32 %v390, %v516
    %v518 = vpop.f32.mrf.mxu0
    %v519 = vadd.f32 %v394, %v518
    %520 = vmatprep.mubr.f32.mxu0 0.0
    %521 = vmatmul.mubr.f32.gmra.mxu0 %v415
    %v522 = vpop.f32.mrf.mxu0
    %v523 = vadd.f32 %v390, %v522
    %v524 = vpop.f32.mrf.mxu0
    %v525 = vadd.f32 %v394, %v524
    %526 = vmatprep.mubr.f32.mxu0 0.0
    %527 = vmatmul.mubr.f32.gmra.mxu0 %v418
    %v528 = vpop.f32.mrf.mxu0
    %v529 = vadd.f32 %v390, %v528
    %v530 = vpop.f32.mrf.mxu0
    %v531 = vadd.f32 %v394, %v530
    %532 = vdwg.mxu0
    %v533 = vlaneseq
    %v534 = vshrl.u32 %v533, 7
    %v535 = vsub.s32 0, %v534
    %v536 = vrot.slane %v203, %v535
    %537 = vmatprep.subr.mxu0 0.0
    %538 = vmatpush1.msra.mxu0 %v308
    %539 = vmatprep.subr.mxu0 0.0
    %540 = vmatpush1.msra.mxu0 %v307
    %541 = vmatprep.subr.mxu0 0.0
    %542 = vmatpush1.msra.mxu0 %v306
    %543 = vmatprep.subr.mxu0 0.0
    %544 = vmatpush1.msra.mxu0 %v305
    %545 = vmatprep.subr.mxu0 0.0
    %546 = vmatpush1.msra.mxu0 %v304
    %547 = vmatprep.subr.mxu0 0.0
    %548 = vmatpush1.msra.mxu0 %v303
    %549 = vmatprep.subr.mxu0 0.0
    %550 = vmatpush1.msra.mxu0 %v302
    %551 = vmatprep.subr.mxu0 0.0
    %552 = vmatpush1.msra.mxu0 %v301
    %553 = vmatprep.subr.mxu0 0.0
    %554 = vmatpush1.msra.mxu0 %v300
    %555 = vmatprep.subr.mxu0 0.0
    %556 = vmatpush1.msra.mxu0 %v299
    %557 = vmatprep.subr.mxu0 0.0
    %558 = vmatpush1.msra.mxu0 %v298
    %559 = vmatprep.subr.mxu0 0.0
    %560 = vmatpush1.msra.mxu0 %v297
    %561 = vmatprep.subr.mxu0 0.0
    %562 = vmatpush1.msra.mxu0 %v296
    %563 = vmatprep.subr.mxu0 0.0
    %564 = vmatpush1.msra.mxu0 %v295
    %565 = vmatprep.subr.mxu0 0.0
    %566 = vmatpush1.msra.mxu0 %v294
    %567 = vmatprep.subr.mxu0 0.0
    %568 = vmatpush1.msra.mxu0 %v293
    %569 = vmatprep.subr.mxu0 0.0
    %570 = vmatpush2.msra.mxu0 0.0
    %571 = vmatprep.subr.mxu0 0.0
    %572 = vmatpush2.msra.mxu0 0.0
    %573 = vmatprep.subr.mxu0 0.0
    %574 = vmatpush2.msra.mxu0 0.0
    %575 = vmatprep.subr.mxu0 0.0
    %576 = vmatpush2.msra.mxu0 0.0
    %577 = vmatprep.subr.mxu0 0.0
    %578 = vmatpush2.msra.mxu0 0.0
    %579 = vmatprep.subr.mxu0 0.0
    %580 = vmatpush2.msra.mxu0 0.0
    %581 = vmatprep.subr.mxu0 0.0
    %582 = vmatpush2.msra.mxu0 0.0
    %583 = vmatprep.subr.mxu0 0.0
    %584 = vmatpush2.msra.mxu0 0.0
    %585 = vmatprep.subr.mxu0 0.0
    %586 = vmatpush2.msra.mxu0 0.0
    %587 = vmatprep.subr.mxu0 0.0
    %588 = vmatpush2.msra.mxu0 0.0
    %589 = vmatprep.subr.mxu0 0.0
    %590 = vmatpush2.msra.mxu0 0.0
    %591 = vmatprep.subr.mxu0 0.0
    %592 = vmatpush2.msra.mxu0 0.0
    %593 = vmatprep.subr.mxu0 0.0
    %594 = vmatpush2.msra.mxu0 0.0
    %595 = vmatprep.subr.mxu0 0.0
    %596 = vmatpush2.msra.mxu0 0.0
    %597 = vmatprep.subr.mxu0 0.0
    %598 = vmatpush2.msra.mxu0 0.0
    %599 = vmatprep.subr.mxu0 0.0
    %600 = vmatpush2.msra.mxu0 0.0
    %601 = vmatprep.mubr.f32.mxu0 0.0
    %602 = vmatmul.mubr.f32.gmra.mxu0 %v290
    %v603 = vpop.f32.mrf.mxu0
    %v604 = vadd.f32 %v536, %v603
    %v605 = vpop.f32.mrf.mxu0
    %606 = vdwg.mxu0
    %v608 = vcombine.high %v604, %v604
    %v610 = vunpack.c.l.s4 1966171168
    %v611 = vunpack.c.0.s8 %v610
    %v612 = vlaneseq
    %v613 = vshrl.u32 %v612, 7
    %v614 = vsub.s32 %v611, %v613
    %v615 = vrot.slane %v604, %v614
    %v617 = vunpack.c.l.s4 1966171168
    %v618 = vunpack.c.0.s8 %v617
    %v619 = vlaneseq
    %v620 = vshrl.u32 %v619, 7
    %v621 = vsub.s32 %v618, %v620
    %v622 = vrot.slane %v608, %v621
    %v623 = vcombine.high %v615, %v615
    %v624 = vcombine.high %v622, %v622
    %v626 = vunpack.c.l.s4 1966171168
    %v627 = vunpack.c.0.s8 %v626
    %v628 = vlaneseq
    %v629 = vshrl.u32 %v628, 7
    %v630 = vsub.s32 %v627, %v629
    %v631 = vrot.slane %v615, %v630
    %v633 = vunpack.c.l.s4 1966171168
    %v634 = vunpack.c.0.s8 %v633
    %v635 = vlaneseq
    %v636 = vshrl.u32 %v635, 7
    %v637 = vsub.s32 %v634, %v636
    %v638 = vrot.slane %v622, %v637
    %v640 = vunpack.c.l.s4 1966171168
    %v641 = vunpack.c.0.s8 %v640
    %v642 = vlaneseq
    %v643 = vshrl.u32 %v642, 7
    %v644 = vsub.s32 %v641, %v643
    %v645 = vrot.slane %v623, %v644
    %v647 = vunpack.c.l.s4 1966171168
    %v648 = vunpack.c.0.s8 %v647
    %v649 = vlaneseq
    %v650 = vshrl.u32 %v649, 7
    %v651 = vsub.s32 %v648, %v650
    %v652 = vrot.slane %v624, %v651
    %v653 = vcombine.high %v631, %v631
    %v654 = vcombine.high %v638, %v638
    %v655 = vcombine.high %v645, %v645
    %v656 = vcombine.high %v652, %v652
    %v657 = vlaneseq
    %v658 = vshrl.u32 %v657, 7
    %v659 = vsub.s32 0, %v658
    %v660 = vrot.slane %v631, %v659
    %v661 = vlaneseq
    %v662 = vshrl.u32 %v661, 7
    %v663 = vsub.s32 0, %v662
    %v664 = vrot.slane %v645, %v663
    %v665 = vlaneseq
    %v666 = vshrl.u32 %v665, 7
    %v667 = vsub.s32 0, %v666
    %v668 = vrot.slane %v653, %v667
    %v669 = vlaneseq
    %v670 = vshrl.u32 %v669, 7
    %v671 = vsub.s32 0, %v670
    %v672 = vrot.slane %v655, %v671
    %v673 = vlaneseq
    %v674 = vshrl.u32 %v673, 7
    %v675 = vsub.s32 0, %v674
    %v676 = vrot.slane %v638, %v675
    %v677 = vlaneseq
    %v678 = vshrl.u32 %v677, 7
    %v679 = vsub.s32 0, %v678
    %v680 = vrot.slane %v652, %v679
    %v681 = vlaneseq
    %v682 = vshrl.u32 %v681, 7
    %v683 = vsub.s32 0, %v682
    %v684 = vrot.slane %v654, %v683
    %v685 = vlaneseq
    %v686 = vshrl.u32 %v685, 7
    %v687 = vsub.s32 0, %v686
    %v688 = vrot.slane %v656, %v687
    %v697 = vmul.f32 %v660, %v487
    %v698 = vmul.f32 %v664, %v493
    %v699 = vmul.f32 %v668, %v499
    %v700 = vmul.f32 %v672, %v505
    %v701 = vmul.f32 %v676, %v511
    %v702 = vmul.f32 %v680, %v517
    %v703 = vmul.f32 %v684, %v523
    %v704 = vmul.f32 %v688, %v529
    %705 = vmatprep.subr.mxu0 0.0
    %706 = vmatpush1.msra.mxu0 %v186
    %707 = vmatprep.subr.mxu0 0.0
    %708 = vmatpush1.msra.mxu0 %v185
    %709 = vmatprep.subr.mxu0 0.0
    %710 = vmatpush1.msra.mxu0 %v184
    %711 = vmatprep.subr.mxu0 0.0
    %712 = vmatpush1.msra.mxu0 %v183
    %713 = vmatprep.subr.mxu0 0.0
    %714 = vmatpush1.msra.mxu0 %v182
    %715 = vmatprep.subr.mxu0 0.0
    %716 = vmatpush1.msra.mxu0 %v181
    %717 = vmatprep.subr.mxu0 0.0
    %718 = vmatpush1.msra.mxu0 %v180
    %719 = vmatprep.subr.mxu0 0.0
    %720 = vmatpush1.msra.mxu0 %v179
    %721 = vmatprep.subr.mxu0 0.0
    %722 = vmatpush1.msra.mxu0 %v178
    %723 = vmatprep.subr.mxu0 0.0
    %724 = vmatpush1.msra.mxu0 %v177
    %725 = vmatprep.subr.mxu0 0.0
    %726 = vmatpush1.msra.mxu0 %v176
    %727 = vmatprep.subr.mxu0 0.0
    %728 = vmatpush1.msra.mxu0 %v175
    %729 = vmatprep.subr.mxu0 0.0
    %730 = vmatpush1.msra.mxu0 %v174
    %731 = vmatprep.subr.mxu0 0.0
    %732 = vmatpush1.msra.mxu0 %v173
    %733 = vmatprep.subr.mxu0 0.0
    %734 = vmatpush1.msra.mxu0 %v172
    %735 = vmatprep.subr.mxu0 0.0
    %736 = vmatpush1.msra.mxu0 %v171
    %737 = vmatprep.subr.mxu0 0.0
    %738 = vmatpush2.msra.mxu0 0.0
    %739 = vmatprep.subr.mxu0 0.0
    %740 = vmatpush2.msra.mxu0 0.0
    %741 = vmatprep.subr.mxu0 0.0
    %742 = vmatpush2.msra.mxu0 0.0
    %743 = vmatprep.subr.mxu0 0.0
    %744 = vmatpush2.msra.mxu0 0.0
    %745 = vmatprep.subr.mxu0 0.0
    %746 = vmatpush2.msra.mxu0 0.0
    %747 = vmatprep.subr.mxu0 0.0
    %748 = vmatpush2.msra.mxu0 0.0
    %749 = vmatprep.subr.mxu0 0.0
    %750 = vmatpush2.msra.mxu0 0.0
    %751 = vmatprep.subr.mxu0 0.0
    %752 = vmatpush2.msra.mxu0 0.0
    %753 = vmatprep.subr.mxu0 0.0
    %754 = vmatpush2.msra.mxu0 0.0
    %755 = vmatprep.subr.mxu0 0.0
    %756 = vmatpush2.msra.mxu0 0.0
    %757 = vmatprep.subr.mxu0 0.0
    %758 = vmatpush2.msra.mxu0 0.0
    %759 = vmatprep.subr.mxu0 0.0
    %760 = vmatpush2.msra.mxu0 0.0
    %761 = vmatprep.subr.mxu0 0.0
    %762 = vmatpush2.msra.mxu0 0.0
    %763 = vmatprep.subr.mxu0 0.0
    %764 = vmatpush2.msra.mxu0 0.0
    %765 = vmatprep.subr.mxu0 0.0
    %766 = vmatpush2.msra.mxu0 0.0
    %767 = vmatprep.subr.mxu0 0.0
    %768 = vmatpush2.msra.mxu0 0.0
    %769 = vmatprep.mubr.f32.mxu0 0.0
    %770 = vmatmul.mubr.f32.gmra.mxu0 %v697
    %v771 = vpop.f32.mrf.mxu0
    %v772 = vadd.f32 0.0, %v771
    %v773 = vpop.f32.mrf.mxu0
    %774 = vmatprep.mubr.f32.mxu0 0.0
    %775 = vmatmul.mubr.f32.gmra.mxu0 %v698
    %v776 = vpop.f32.mrf.mxu0
    %v777 = vadd.f32 0.0, %v776
    %v778 = vpop.f32.mrf.mxu0
    %779 = vmatprep.mubr.f32.mxu0 0.0
    %780 = vmatmul.mubr.f32.gmra.mxu0 %v699
    %v781 = vpop.f32.mrf.mxu0
    %v782 = vadd.f32 0.0, %v781
    %v783 = vpop.f32.mrf.mxu0
    %784 = vmatprep.mubr.f32.mxu0 0.0
    %785 = vmatmul.mubr.f32.gmra.mxu0 %v700
    %v786 = vpop.f32.mrf.mxu0
    %v787 = vadd.f32 0.0, %v786
    %v788 = vpop.f32.mrf.mxu0
    %789 = vmatprep.mubr.f32.mxu0 0.0
    %790 = vmatmul.mubr.f32.gmra.mxu0 %v701
    %v791 = vpop.f32.mrf.mxu0
    %v792 = vadd.f32 0.0, %v791
    %v793 = vpop.f32.mrf.mxu0
    %794 = vmatprep.mubr.f32.mxu0 0.0
    %795 = vmatmul.mubr.f32.gmra.mxu0 %v702
    %v796 = vpop.f32.mrf.mxu0
    %v797 = vadd.f32 0.0, %v796
    %v798 = vpop.f32.mrf.mxu0
    %799 = vmatprep.mubr.f32.mxu0 0.0
    %800 = vmatmul.mubr.f32.gmra.mxu0 %v703
    %v801 = vpop.f32.mrf.mxu0
    %v802 = vadd.f32 0.0, %v801
    %v803 = vpop.f32.mrf.mxu0
    %804 = vmatprep.mubr.f32.mxu0 0.0
    %805 = vmatmul.mubr.f32.gmra.mxu0 %v704
    %v806 = vpop.f32.mrf.mxu0
    %v807 = vadd.f32 0.0, %v806
    %v808 = vpop.f32.mrf.mxu0
    %809 = vdwg.mxu0
    %v810 = vrot.slane %v772, 4
    %v811 = vmax.f32 %v772, %v810
    %v812 = vrot.slane %v811, 2
    %v813 = vmax.f32 %v811, %v812
    %v814 = vrot.slane %v813, 1
    %v815 = vmax.f32 %v813, %v814
    %v816 = vrot.slane %v777, 4
    %v817 = vmax.f32 %v777, %v816
    %v818 = vrot.slane %v817, 2
    %v819 = vmax.f32 %v817, %v818
    %v820 = vrot.slane %v819, 1
    %v821 = vmax.f32 %v819, %v820
    %v822 = vrot.slane %v782, 4
    %v823 = vmax.f32 %v782, %v822
    %v824 = vrot.slane %v823, 2
    %v825 = vmax.f32 %v823, %v824
    %v826 = vrot.slane %v825, 1
    %v827 = vmax.f32 %v825, %v826
    %v828 = vrot.slane %v787, 4
    %v829 = vmax.f32 %v787, %v828
    %v830 = vrot.slane %v829, 2
    %v831 = vmax.f32 %v829, %v830
    %v832 = vrot.slane %v831, 1
    %v833 = vmax.f32 %v831, %v832
    %v834 = vrot.slane %v792, 4
    %v835 = vmax.f32 %v792, %v834
    %v836 = vrot.slane %v835, 2
    %v837 = vmax.f32 %v835, %v836
    %v838 = vrot.slane %v837, 1
    %v839 = vmax.f32 %v837, %v838
    %v840 = vrot.slane %v797, 4
    %v841 = vmax.f32 %v797, %v840
    %v842 = vrot.slane %v841, 2
    %v843 = vmax.f32 %v841, %v842
    %v844 = vrot.slane %v843, 1
    %v845 = vmax.f32 %v843, %v844
    %v846 = vrot.slane %v802, 4
    %v847 = vmax.f32 %v802, %v846
    %v848 = vrot.slane %v847, 2
    %v849 = vmax.f32 %v847, %v848
    %v850 = vrot.slane %v849, 1
    %v851 = vmax.f32 %v849, %v850
    %v852 = vrot.slane %v807, 4
    %v853 = vmax.f32 %v807, %v852
    %v854 = vrot.slane %v853, 2
    %v855 = vmax.f32 %v853, %v854
    %v856 = vrot.slane %v855, 1
    %v857 = vmax.f32 %v855, %v856
    %v858 = vsub.f32 %v772, %v815
    %v859 = vsub.f32 %v777, %v821
    %v860 = vsub.f32 %v782, %v827
    %v861 = vsub.f32 %v787, %v833
    %v862 = vsub.f32 %v792, %v839
    %v863 = vsub.f32 %v797, %v845
    %v864 = vsub.f32 %v802, %v851
    %v865 = vsub.f32 %v807, %v857
    %v866 = vmul.f32 %v858, 1.442695
    %v867 = vpow.pop %v866
    %v868 = vmul.f32 %v859, 1.442695
    %v869 = vpow.pop %v868
    %v870 = vmul.f32 %v860, 1.442695
    %v871 = vpow.pop %v870
    %v872 = vmul.f32 %v861, 1.442695
    %v873 = vpow.pop %v872
    %v874 = vmul.f32 %v862, 1.442695
    %v875 = vpow.pop %v874
    %v876 = vmul.f32 %v863, 1.442695
    %v877 = vpow.pop %v876
    %v878 = vmul.f32 %v864, 1.442695
    %v879 = vpow.pop %v878
    %v880 = vmul.f32 %v865, 1.442695
    %v881 = vpow.pop %v880
    %v882 = vrot.slane %v867, 4
    %v883 = vadd.f32 %v867, %v882
    %v884 = vrot.slane %v883, 2
    %v885 = vadd.f32 %v883, %v884
    %v886 = vrot.slane %v885, 1
    %v887 = vadd.f32 %v885, %v886
    %v888 = vrot.slane %v869, 4
    %v889 = vadd.f32 %v869, %v888
    %v890 = vrot.slane %v889, 2
    %v891 = vadd.f32 %v889, %v890
    %v892 = vrot.slane %v891, 1
    %v893 = vadd.f32 %v891, %v892
    %v894 = vrot.slane %v871, 4
    %v895 = vadd.f32 %v871, %v894
    %v896 = vrot.slane %v895, 2
    %v897 = vadd.f32 %v895, %v896
    %v898 = vrot.slane %v897, 1
    %v899 = vadd.f32 %v897, %v898
    %v900 = vrot.slane %v873, 4
    %v901 = vadd.f32 %v873, %v900
    %v902 = vrot.slane %v901, 2
    %v903 = vadd.f32 %v901, %v902
    %v904 = vrot.slane %v903, 1
    %v905 = vadd.f32 %v903, %v904
    %v906 = vrot.slane %v875, 4
    %v907 = vadd.f32 %v875, %v906
    %v908 = vrot.slane %v907, 2
    %v909 = vadd.f32 %v907, %v908
    %v910 = vrot.slane %v909, 1
    %v911 = vadd.f32 %v909, %v910
    %v912 = vrot.slane %v877, 4
    %v913 = vadd.f32 %v877, %v912
    %v914 = vrot.slane %v913, 2
    %v915 = vadd.f32 %v913, %v914
    %v916 = vrot.slane %v915, 1
    %v917 = vadd.f32 %v915, %v916
    %v918 = vrot.slane %v879, 4
    %v919 = vadd.f32 %v879, %v918
    %v920 = vrot.slane %v919, 2
    %v921 = vadd.f32 %v919, %v920
    %v922 = vrot.slane %v921, 1
    %v923 = vadd.f32 %v921, %v922
    %v924 = vrot.slane %v881, 4
    %v925 = vadd.f32 %v881, %v924
    %v926 = vrot.slane %v925, 2
    %v927 = vadd.f32 %v925, %v926
    %v928 = vrot.slane %v927, 1
    %v929 = vadd.f32 %v927, %v928
    %v930 = vmul.f32 %v867, %v489
    %v931 = vmul.f32 %v869, %v495
    %v932 = vmul.f32 %v871, %v501
    %v933 = vmul.f32 %v873, %v507
    %v934 = vmul.f32 %v875, %v513
    %v935 = vmul.f32 %v877, %v519
    %v936 = vmul.f32 %v879, %v525
    %v937 = vmul.f32 %v881, %v531
    %v938 = vrot.slane %v930, 4
    %v939 = vadd.f32 %v930, %v938
    %v940 = vrot.slane %v939, 2
    %v941 = vadd.f32 %v939, %v940
    %v942 = vrot.slane %v941, 1
    %v943 = vadd.f32 %v941, %v942
    %v944 = vrot.slane %v931, 4
    %v945 = vadd.f32 %v931, %v944
    %v946 = vrot.slane %v945, 2
    %v947 = vadd.f32 %v945, %v946
    %v948 = vrot.slane %v947, 1
    %v949 = vadd.f32 %v947, %v948
    %v950 = vrot.slane %v932, 4
    %v951 = vadd.f32 %v932, %v950
    %v952 = vrot.slane %v951, 2
    %v953 = vadd.f32 %v951, %v952
    %v954 = vrot.slane %v953, 1
    %v955 = vadd.f32 %v953, %v954
    %v956 = vrot.slane %v933, 4
    %v957 = vadd.f32 %v933, %v956
    %v958 = vrot.slane %v957, 2
    %v959 = vadd.f32 %v957, %v958
    %v960 = vrot.slane %v959, 1
    %v961 = vadd.f32 %v959, %v960
    %v962 = vrot.slane %v934, 4
    %v963 = vadd.f32 %v934, %v962
    %v964 = vrot.slane %v963, 2
    %v965 = vadd.f32 %v963, %v964
    %v966 = vrot.slane %v965, 1
    %v967 = vadd.f32 %v965, %v966
    %v968 = vrot.slane %v935, 4
    %v969 = vadd.f32 %v935, %v968
    %v970 = vrot.slane %v969, 2
    %v971 = vadd.f32 %v969, %v970
    %v972 = vrot.slane %v971, 1
    %v973 = vadd.f32 %v971, %v972
    %v974 = vrot.slane %v936, 4
    %v975 = vadd.f32 %v936, %v974
    %v976 = vrot.slane %v975, 2
    %v977 = vadd.f32 %v975, %v976
    %v978 = vrot.slane %v977, 1
    %v979 = vadd.f32 %v977, %v978
    %v980 = vrot.slane %v937, 4
    %v981 = vadd.f32 %v937, %v980
    %v982 = vrot.slane %v981, 2
    %v983 = vadd.f32 %v981, %v982
    %v984 = vrot.slane %v983, 1
    %v985 = vadd.f32 %v983, %v984
    %v986 = vrcp.pop %v887
    %v987 = vrcp.pop %v893
    %v988 = vrcp.pop %v899
    %v989 = vrcp.pop %v905
    %v990 = vrcp.pop %v911
    %v991 = vrcp.pop %v917
    %v992 = vrcp.pop %v923
    %v993 = vrcp.pop %v929
    %v994 = vmul.f32 %v943, %v986
    %v995 = vmul.f32 %v949, %v987
    %v996 = vmul.f32 %v955, %v988
    %v997 = vmul.f32 %v961, %v989
    %v998 = vmul.f32 %v967, %v990
    %v999 = vmul.f32 %v973, %v991
    %v1000 = vmul.f32 %v979, %v992
    %v1001 = vmul.f32 %v985, %v993
    %v1002 = vlaneseq
    %v1003 = vshrl.u32 %v1002, 7
    %v1004 = vsub.s32 1, %v1003
    %v1005 = vrot.slane %v203, %v1004
    %vm1014 = vcmask 1041409
    %v1015 = vsel %vm1014, %v995, %v994
    %vm1016 = vcmask 1042434
    %v1017 = vsel %vm1016, %v996, %v1015
    %vm1018 = vcmask 1043459
    %v1019 = vsel %vm1018, %v997, %v1017
    %vm1020 = vcmask 1044484
    %v1021 = vsel %vm1020, %v998, %v1019
    %vm1022 = vcmask 1045509
    %v1023 = vsel %vm1022, %v999, %v1021
    %vm1024 = vcmask 1046534
    %v1025 = vsel %vm1024, %v1000, %v1023
    %vm1026 = vcmask 1047559
    %v1027 = vsel %vm1026, %v1001, %v1025
    %1029 = vmatprep.subr.mxu0 0.0
    %1030 = vmatpush1.msra.mxu0 %v325
    %1031 = vmatprep.subr.mxu0 0.0
    %1032 = vmatpush1.msra.mxu0 %v324
    %1033 = vmatprep.subr.mxu0 0.0
    %1034 = vmatpush1.msra.mxu0 %v323
    %1035 = vmatprep.subr.mxu0 0.0
    %1036 = vmatpush1.msra.mxu0 %v322
    %1037 = vmatprep.subr.mxu0 0.0
    %1038 = vmatpush1.msra.mxu0 %v321
    %1039 = vmatprep.subr.mxu0 0.0
    %1040 = vmatpush1.msra.mxu0 %v320
    %1041 = vmatprep.subr.mxu0 0.0
    %1042 = vmatpush1.msra.mxu0 %v319
    %1043 = vmatprep.subr.mxu0 0.0
    %1044 = vmatpush1.msra.mxu0 %v318
    %1045 = vmatprep.subr.mxu0 0.0
    %1046 = vmatpush1.msra.mxu0 %v317
    %1047 = vmatprep.subr.mxu0 0.0
    %1048 = vmatpush1.msra.mxu0 %v316
    %1049 = vmatprep.subr.mxu0 0.0
    %1050 = vmatpush1.msra.mxu0 %v315
    %1051 = vmatprep.subr.mxu0 0.0
    %1052 = vmatpush1.msra.mxu0 %v314
    %1053 = vmatprep.subr.mxu0 0.0
    %1054 = vmatpush1.msra.mxu0 %v313
    %1055 = vmatprep.subr.mxu0 0.0
    %1056 = vmatpush1.msra.mxu0 %v312
    %1057 = vmatprep.subr.mxu0 0.0
    %1058 = vmatpush1.msra.mxu0 %v311
    %1059 = vmatprep.subr.mxu0 0.0
    %1060 = vmatpush1.msra.mxu0 %v310
    %1061 = vmatprep.subr.mxu0 0.0
    %1062 = vmatpush2.msra.mxu0 0.0
    %1063 = vmatprep.subr.mxu0 0.0
    %1064 = vmatpush2.msra.mxu0 0.0
    %1065 = vmatprep.subr.mxu0 0.0
    %1066 = vmatpush2.msra.mxu0 0.0
    %1067 = vmatprep.subr.mxu0 0.0
    %1068 = vmatpush2.msra.mxu0 0.0
    %1069 = vmatprep.subr.mxu0 0.0
    %1070 = vmatpush2.msra.mxu0 0.0
    %1071 = vmatprep.subr.mxu0 0.0
    %1072 = vmatpush2.msra.mxu0 0.0
    %1073 = vmatprep.subr.mxu0 0.0
    %1074 = vmatpush2.msra.mxu0 0.0
    %1075 = vmatprep.subr.mxu0 0.0
    %1076 = vmatpush2.msra.mxu0 0.0
    %1077 = vmatprep.subr.mxu0 0.0
    %1078 = vmatpush2.msra.mxu0 0.0
    %1079 = vmatprep.subr.mxu0 0.0
    %1080 = vmatpush2.msra.mxu0 0.0
    %1081 = vmatprep.subr.mxu0 0.0
    %1082 = vmatpush2.msra.mxu0 0.0
    %1083 = vmatprep.subr.mxu0 0.0
    %1084 = vmatpush2.msra.mxu0 0.0
    %1085 = vmatprep.subr.mxu0 0.0
    %1086 = vmatpush2.msra.mxu0 0.0
    %1087 = vmatprep.subr.mxu0 0.0
    %1088 = vmatpush2.msra.mxu0 0.0
    %1089 = vmatprep.subr.mxu0 0.0
    %1090 = vmatpush2.msra.mxu0 0.0
    %1091 = vmatprep.subr.mxu0 0.0
    %1092 = vmatpush2.msra.mxu0 0.0
    %1093 = vmatprep.mubr.f32.mxu0 0.0
    %1094 = vmatmul.mubr.f32.gmra.mxu0 %v1027
    %v1095 = vpop.f32.mrf.mxu0
    %v1096 = vadd.f32 %v1005, %v1095
    %v1097 = vpop.f32.mrf.mxu0
    %1098 = vdwg.mxu0
    %v1099 = vadd.f32 %v1096, %v290
    %1100 = vmatprep.subr.mxu0 0.0
    %1101 = vmatpush1.msra.mxu0 %v202
    %1102 = vmatprep.subr.mxu0 0.0
    %1103 = vmatpush1.msra.mxu0 %v201
    %1104 = vmatprep.subr.mxu0 0.0
    %1105 = vmatpush1.msra.mxu0 %v200
    %1106 = vmatprep.subr.mxu0 0.0
    %1107 = vmatpush1.msra.mxu0 %v199
    %1108 = vmatprep.subr.mxu0 0.0
    %1109 = vmatpush1.msra.mxu0 %v198
    %1110 = vmatprep.subr.mxu0 0.0
    %1111 = vmatpush1.msra.mxu0 %v197
    %1112 = vmatprep.subr.mxu0 0.0
    %1113 = vmatpush1.msra.mxu0 %v196
    %1114 = vmatprep.subr.mxu0 0.0
    %1115 = vmatpush1.msra.mxu0 %v195
    %1116 = vmatprep.subr.mxu0 0.0
    %1117 = vmatpush1.msra.mxu0 %v194
    %1118 = vmatprep.subr.mxu0 0.0
    %1119 = vmatpush1.msra.mxu0 %v193
    %1120 = vmatprep.subr.mxu0 0.0
    %1121 = vmatpush1.msra.mxu0 %v192
    %1122 = vmatprep.subr.mxu0 0.0
    %1123 = vmatpush1.msra.mxu0 %v191
    %1124 = vmatprep.subr.mxu0 0.0
    %1125 = vmatpush1.msra.mxu0 %v190
    %1126 = vmatprep.subr.mxu0 0.0
    %1127 = vmatpush1.msra.mxu0 %v189
    %1128 = vmatprep.subr.mxu0 0.0
    %1129 = vmatpush1.msra.mxu0 %v188
    %1130 = vmatprep.subr.mxu0 0.0
    %1131 = vmatpush1.msra.mxu0 %v187
    %1132 = vmatprep.subr.mxu0 0.0
    %1133 = vmatpush2.msra.mxu0 0.0
    %1134 = vmatprep.subr.mxu0 0.0
    %1135 = vmatpush2.msra.mxu0 0.0
    %1136 = vmatprep.subr.mxu0 0.0
    %1137 = vmatpush2.msra.mxu0 0.0
    %1138 = vmatprep.subr.mxu0 0.0
    %1139 = vmatpush2.msra.mxu0 0.0
    %1140 = vmatprep.subr.mxu0 0.0
    %1141 = vmatpush2.msra.mxu0 0.0
    %1142 = vmatprep.subr.mxu0 0.0
    %1143 = vmatpush2.msra.mxu0 0.0
    %1144 = vmatprep.subr.mxu0 0.0
    %1145 = vmatpush2.msra.mxu0 0.0
    %1146 = vmatprep.subr.mxu0 0.0
    %1147 = vmatpush2.msra.mxu0 0.0
    %1148 = vmatprep.subr.mxu0 0.0
    %1149 = vmatpush2.msra.mxu0 0.0
    %1150 = vmatprep.subr.mxu0 0.0
    %1151 = vmatpush2.msra.mxu0 0.0
    %1152 = vmatprep.subr.mxu0 0.0
    %1153 = vmatpush2.msra.mxu0 0.0
    %1154 = vmatprep.subr.mxu0 0.0
    %1155 = vmatpush2.msra.mxu0 0.0
    %1156 = vmatprep.subr.mxu0 0.0
    %1157 = vmatpush2.msra.mxu0 0.0
    %1158 = vmatprep.subr.mxu0 0.0
    %1159 = vmatpush2.msra.mxu0 0.0
    %1160 = vmatprep.subr.mxu0 0.0
    %1161 = vmatpush2.msra.mxu0 0.0
    %1162 = vmatprep.subr.mxu0 0.0
    %1163 = vmatpush2.msra.mxu0 0.0
    %1164 = vmatprep.mubr.f32.mxu0 0.0
    %1165 = vmatmul.mubr.f32.gmra.mxu0 %v1099
    %v1166 = vpop.f32.mrf.mxu0
    %v1167 = vadd.f32 0.0, %v1166
    %v1168 = vpop.f32.mrf.mxu0
    %1169 = vdwg.mxu0
    %v1170 = vsub.f32 %v1099, %v1167
    %v1171 = vmul.f32 %v1170, %v1170
    %1172 = vmatprep.subr.mxu0 0.0
    %1173 = vmatpush1.msra.mxu0 %v202
    %1174 = vmatprep.subr.mxu0 0.0
    %1175 = vmatpush1.msra.mxu0 %v201
    %1176 = vmatprep.subr.mxu0 0.0
    %1177 = vmatpush1.msra.mxu0 %v200
    %1178 = vmatprep.subr.mxu0 0.0
    %1179 = vmatpush1.msra.mxu0 %v199
    %1180 = vmatprep.subr.mxu0 0.0
    %1181 = vmatpush1.msra.mxu0 %v198
    %1182 = vmatprep.subr.mxu0 0.0
    %1183 = vmatpush1.msra.mxu0 %v197
    %1184 = vmatprep.subr.mxu0 0.0
    %1185 = vmatpush1.msra.mxu0 %v196
    %1186 = vmatprep.subr.mxu0 0.0
    %1187 = vmatpush1.msra.mxu0 %v195
    %1188 = vmatprep.subr.mxu0 0.0
    %1189 = vmatpush1.msra.mxu0 %v194
    %1190 = vmatprep.subr.mxu0 0.0
    %1191 = vmatpush1.msra.mxu0 %v193
    %1192 = vmatprep.subr.mxu0 0.0
    %1193 = vmatpush1.msra.mxu0 %v192
    %1194 = vmatprep.subr.mxu0 0.0
    %1195 = vmatpush1.msra.mxu0 %v191
    %1196 = vmatprep.subr.mxu0 0.0
    %1197 = vmatpush1.msra.mxu0 %v190
    %1198 = vmatprep.subr.mxu0 0.0
    %1199 = vmatpush1.msra.mxu0 %v189
    %1200 = vmatprep.subr.mxu0 0.0
    %1201 = vmatpush1.msra.mxu0 %v188
    %1202 = vmatprep.subr.mxu0 0.0
    %1203 = vmatpush1.msra.mxu0 %v187
    %1204 = vmatprep.subr.mxu0 0.0
    %1205 = vmatpush2.msra.mxu0 0.0
    %1206 = vmatprep.subr.mxu0 0.0
    %1207 = vmatpush2.msra.mxu0 0.0
    %1208 = vmatprep.subr.mxu0 0.0
    %1209 = vmatpush2.msra.mxu0 0.0
    %1210 = vmatprep.subr.mxu0 0.0
    %1211 = vmatpush2.msra.mxu0 0.0
    %1212 = vmatprep.subr.mxu0 0.0
    %1213 = vmatpush2.msra.mxu0 0.0
    %1214 = vmatprep.subr.mxu0 0.0
    %1215 = vmatpush2.msra.mxu0 0.0
    %1216 = vmatprep.subr.mxu0 0.0
    %1217 = vmatpush2.msra.mxu0 0.0
    %1218 = vmatprep.subr.mxu0 0.0
    %1219 = vmatpush2.msra.mxu0 0.0
    %1220 = vmatprep.subr.mxu0 0.0
    %1221 = vmatpush2.msra.mxu0 0.0
    %1222 = vmatprep.subr.mxu0 0.0
    %1223 = vmatpush2.msra.mxu0 0.0
    %1224 = vmatprep.subr.mxu0 0.0
    %1225 = vmatpush2.msra.mxu0 0.0
    %1226 = vmatprep.subr.mxu0 0.0
    %1227 = vmatpush2.msra.mxu0 0.0
    %1228 = vmatprep.subr.mxu0 0.0
    %1229 = vmatpush2.msra.mxu0 0.0
    %1230 = vmatprep.subr.mxu0 0.0
    %1231 = vmatpush2.msra.mxu0 0.0
    %1232 = vmatprep.subr.mxu0 0.0
    %1233 = vmatpush2.msra.mxu0 0.0
    %1234 = vmatprep.subr.mxu0 0.0
    %1235 = vmatpush2.msra.mxu0 0.0
    %1236 = vmatprep.mubr.f32.mxu0 0.0
    %1237 = vmatmul.mubr.f32.gmra.mxu0 %v1171
    %v1238 = vpop.f32.mrf.mxu0
    %v1239 = vadd.f32 1e-05, %v1238
    %v1240 = vpop.f32.mrf.mxu0
    %1241 = vdwg.mxu0
    %v1242 = vrsqrt.pop %v1239
    %v1243 = vmul.f32 %v1170, %v1242
    %v1244 = vlaneseq
    %v1245 = vshrl.u32 %v1244, 7
    %v1246 = vsub.s32 4, %v1245
    %v1247 = vrot.slane %v203, %v1246
    %v1248 = vmul.f32 %v1243, %v1247
    %v1249 = vlaneseq
    %v1250 = vshrl.u32 %v1249, 7
    %v1251 = vsub.s32 5, %v1250
    %v1252 = vrot.slane %v203, %v1251
    %v1253 = vadd.f32 %v1248, %v1252
    %v1254 = vlaneseq
    %v1255 = vshrl.u32 %v1254, 7
    %v1256 = vsub.s32 2, %v1255
    %v1257 = vrot.slane %v203, %v1256
    %1258 = vmatprep.subr.mxu0 0.0
    %1259 = vmatpush1.msra.mxu0 %v342
    %1260 = vmatprep.subr.mxu0 0.0
    %1261 = vmatpush1.msra.mxu0 %v341
    %1262 = vmatprep.subr.mxu0 0.0
    %1263 = vmatpush1.msra.mxu0 %v340
    %1264 = vmatprep.subr.mxu0 0.0
    %1265 = vmatpush1.msra.mxu0 %v339
    %1266 = vmatprep.subr.mxu0 0.0
    %1267 = vmatpush1.msra.mxu0 %v338
    %1268 = vmatprep.subr.mxu0 0.0
    %1269 = vmatpush1.msra.mxu0 %v337
    %1270 = vmatprep.subr.mxu0 0.0
    %1271 = vmatpush1.msra.mxu0 %v336
    %1272 = vmatprep.subr.mxu0 0.0
    %1273 = vmatpush1.msra.mxu0 %v335
    %1274 = vmatprep.subr.mxu0 0.0
    %1275 = vmatpush1.msra.mxu0 %v334
    %1276 = vmatprep.subr.mxu0 0.0
    %1277 = vmatpush1.msra.mxu0 %v333
    %1278 = vmatprep.subr.mxu0 0.0
    %1279 = vmatpush1.msra.mxu0 %v332
    %1280 = vmatprep.subr.mxu0 0.0
    %1281 = vmatpush1.msra.mxu0 %v331
    %1282 = vmatprep.subr.mxu0 0.0
    %1283 = vmatpush1.msra.mxu0 %v330
    %1284 = vmatprep.subr.mxu0 0.0
    %1285 = vmatpush1.msra.mxu0 %v329
    %1286 = vmatprep.subr.mxu0 0.0
    %1287 = vmatpush1.msra.mxu0 %v328
    %1288 = vmatprep.subr.mxu0 0.0
    %1289 = vmatpush1.msra.mxu0 %v327
    %1290 = vmatprep.subr.mxu0 0.0
    %1291 = vmatpush2.msra.mxu0 0.0
    %1292 = vmatprep.subr.mxu0 0.0
    %1293 = vmatpush2.msra.mxu0 0.0
    %1294 = vmatprep.subr.mxu0 0.0
    %1295 = vmatpush2.msra.mxu0 0.0
    %1296 = vmatprep.subr.mxu0 0.0
    %1297 = vmatpush2.msra.mxu0 0.0
    %1298 = vmatprep.subr.mxu0 0.0
    %1299 = vmatpush2.msra.mxu0 0.0
    %1300 = vmatprep.subr.mxu0 0.0
    %1301 = vmatpush2.msra.mxu0 0.0
    %1302 = vmatprep.subr.mxu0 0.0
    %1303 = vmatpush2.msra.mxu0 0.0
    %1304 = vmatprep.subr.mxu0 0.0
    %1305 = vmatpush2.msra.mxu0 0.0
    %1306 = vmatprep.subr.mxu0 0.0
    %1307 = vmatpush2.msra.mxu0 0.0
    %1308 = vmatprep.subr.mxu0 0.0
    %1309 = vmatpush2.msra.mxu0 0.0
    %1310 = vmatprep.subr.mxu0 0.0
    %1311 = vmatpush2.msra.mxu0 0.0
    %1312 = vmatprep.subr.mxu0 0.0
    %1313 = vmatpush2.msra.mxu0 0.0
    %1314 = vmatprep.subr.mxu0 0.0
    %1315 = vmatpush2.msra.mxu0 0.0
    %1316 = vmatprep.subr.mxu0 0.0
    %1317 = vmatpush2.msra.mxu0 0.0
    %1318 = vmatprep.subr.mxu0 0.0
    %1319 = vmatpush2.msra.mxu0 0.0
    %1320 = vmatprep.subr.mxu0 0.0
    %1321 = vmatpush2.msra.mxu0 0.0
    %1322 = vmatprep.mubr.f32.mxu0 0.0
    %1323 = vmatmul.mubr.f32.gmra.mxu0 %v1253
    %v1324 = vpop.f32.mrf.mxu0
    %v1325 = vadd.f32 %v1257, %v1324
    %v1326 = vpop.f32.mrf.mxu0
    %1327 = vdwg.mxu0
    %v1328 = vmax.f32 %v1325, 0.0
    %v1329 = vlaneseq
    %v1330 = vshrl.u32 %v1329, 7
    %v1331 = vsub.s32 3, %v1330
    %v1332 = vrot.slane %v203, %v1331
    %1333 = vmatprep.subr.mxu0 0.0
    %1334 = vmatpush1.msra.mxu0 %v359
    %1335 = vmatprep.subr.mxu0 0.0
    %1336 = vmatpush1.msra.mxu0 %v358
    %1337 = vmatprep.subr.mxu0 0.0
    %1338 = vmatpush1.msra.mxu0 %v357
    %1339 = vmatprep.subr.mxu0 0.0
    %1340 = vmatpush1.msra.mxu0 %v356
    %1341 = vmatprep.subr.mxu0 0.0
    %1342 = vmatpush1.msra.mxu0 %v355
    %1343 = vmatprep.subr.mxu0 0.0
    %1344 = vmatpush1.msra.mxu0 %v354
    %1345 = vmatprep.subr.mxu0 0.0
    %1346 = vmatpush1.msra.mxu0 %v353
    %1347 = vmatprep.subr.mxu0 0.0
    %1348 = vmatpush1.msra.mxu0 %v352
    %1349 = vmatprep.subr.mxu0 0.0
    %1350 = vmatpush1.msra.mxu0 %v351
    %1351 = vmatprep.subr.mxu0 0.0
    %1352 = vmatpush1.msra.mxu0 %v350
    %1353 = vmatprep.subr.mxu0 0.0
    %1354 = vmatpush1.msra.mxu0 %v349
    %1355 = vmatprep.subr.mxu0 0.0
    %1356 = vmatpush1.msra.mxu0 %v348
    %1357 = vmatprep.subr.mxu0 0.0
    %1358 = vmatpush1.msra.mxu0 %v347
    %1359 = vmatprep.subr.mxu0 0.0
    %1360 = vmatpush1.msra.mxu0 %v346
    %1361 = vmatprep.subr.mxu0 0.0
    %1362 = vmatpush1.msra.mxu0 %v345
    %1363 = vmatprep.subr.mxu0 0.0
    %1364 = vmatpush1.msra.mxu0 %v344
    %1365 = vmatprep.subr.mxu0 0.0
    %1366 = vmatpush2.msra.mxu0 0.0
    %1367 = vmatprep.subr.mxu0 0.0
    %1368 = vmatpush2.msra.mxu0 0.0
    %1369 = vmatprep.subr.mxu0 0.0
    %1370 = vmatpush2.msra.mxu0 0.0
    %1371 = vmatprep.subr.mxu0 0.0
    %1372 = vmatpush2.msra.mxu0 0.0
    %1373 = vmatprep.subr.mxu0 0.0
    %1374 = vmatpush2.msra.mxu0 0.0
    %1375 = vmatprep.subr.mxu0 0.0
    %1376 = vmatpush2.msra.mxu0 0.0
    %1377 = vmatprep.subr.mxu0 0.0
    %1378 = vmatpush2.msra.mxu0 0.0
    %1379 = vmatprep.subr.mxu0 0.0
    %1380 = vmatpush2.msra.mxu0 0.0
    %1381 = vmatprep.subr.mxu0 0.0
    %1382 = vmatpush2.msra.mxu0 0.0
    %1383 = vmatprep.subr.mxu0 0.0
    %1384 = vmatpush2.msra.mxu0 0.0
    %1385 = vmatprep.subr.mxu0 0.0
    %1386 = vmatpush2.msra.mxu0 0.0
    %1387 = vmatprep.subr.mxu0 0.0
    %1388 = vmatpush2.msra.mxu0 0.0
    %1389 = vmatprep.subr.mxu0 0.0
    %1390 = vmatpush2.msra.mxu0 0.0
    %1391 = vmatprep.subr.mxu0 0.0
    %1392 = vmatpush2.msra.mxu0 0.0
    %1393 = vmatprep.subr.mxu0 0.0
    %1394 = vmatpush2.msra.mxu0 0.0
    %1395 = vmatprep.subr.mxu0 0.0
    %1396 = vmatpush2.msra.mxu0 0.0
    %1397 = vmatprep.mubr.f32.mxu0 0.0
    %1398 = vmatmul.mubr.f32.gmra.mxu0 %v1328
    %v1399 = vpop.f32.mrf.mxu0
    %v1400 = vadd.f32 %v1332, %v1399
    %v1401 = vpop.f32.mrf.mxu0
    %1402 = vdwg.mxu0
    %v1403 = vadd.f32 %v1400, %v1253
    %1404 = vmatprep.subr.mxu0 0.0
    %1405 = vmatpush1.msra.mxu0 %v202
    %1406 = vmatprep.subr.mxu0 0.0
    %1407 = vmatpush1.msra.mxu0 %v201
    %1408 = vmatprep.subr.mxu0 0.0
    %1409 = vmatpush1.msra.mxu0 %v200
    %1410 = vmatprep.subr.mxu0 0.0
    %1411 = vmatpush1.msra.mxu0 %v199
    %1412 = vmatprep.subr.mxu0 0.0
    %1413 = vmatpush1.msra.mxu0 %v198
    %1414 = vmatprep.subr.mxu0 0.0
    %1415 = vmatpush1.msra.mxu0 %v197
    %1416 = vmatprep.subr.mxu0 0.0
    %1417 = vmatpush1.msra.mxu0 %v196
    %1418 = vmatprep.subr.mxu0 0.0
    %1419 = vmatpush1.msra.mxu0 %v195
    %1420 = vmatprep.subr.mxu0 0.0
    %1421 = vmatpush1.msra.mxu0 %v194
    %1422 = vmatprep.subr.mxu0 0.0
    %1423 = vmatpush1.msra.mxu0 %v193
    %1424 = vmatprep.subr.mxu0 0.0
    %1425 = vmatpush1.msra.mxu0 %v192
    %1426 = vmatprep.subr.mxu0 0.0
    %1427 = vmatpush1.msra.mxu0 %v191
    %1428 = vmatprep.subr.mxu0 0.0
    %1429 = vmatpush1.msra.mxu0 %v190
    %1430 = vmatprep.subr.mxu0 0.0
    %1431 = vmatpush1.msra.mxu0 %v189
    %1432 = vmatprep.subr.mxu0 0.0
    %1433 = vmatpush1.msra.mxu0 %v188
    %1434 = vmatprep.subr.mxu0 0.0
    %1435 = vmatpush1.msra.mxu0 %v187
    %1436 = vmatprep.subr.mxu0 0.0
    %1437 = vmatpush2.msra.mxu0 0.0
    %1438 = vmatprep.subr.mxu0 0.0
    %1439 = vmatpush2.msra.mxu0 0.0
    %1440 = vmatprep.subr.mxu0 0.0
    %1441 = vmatpush2.msra.mxu0 0.0
    %1442 = vmatprep.subr.mxu0 0.0
    %1443 = vmatpush2.msra.mxu0 0.0
    %1444 = vmatprep.subr.mxu0 0.0
    %1445 = vmatpush2.msra.mxu0 0.0
    %1446 = vmatprep.subr.mxu0 0.0
    %1447 = vmatpush2.msra.mxu0 0.0
    %1448 = vmatprep.subr.mxu0 0.0
    %1449 = vmatpush2.msra.mxu0 0.0
    %1450 = vmatprep.subr.mxu0 0.0
    %1451 = vmatpush2.msra.mxu0 0.0
    %1452 = vmatprep.subr.mxu0 0.0
    %1453 = vmatpush2.msra.mxu0 0.0
    %1454 = vmatprep.subr.mxu0 0.0
    %1455 = vmatpush2.msra.mxu0 0.0
    %1456 = vmatprep.subr.mxu0 0.0
    %1457 = vmatpush2.msra.mxu0 0.0
    %1458 = vmatprep.subr.mxu0 0.0
    %1459 = vmatpush2.msra.mxu0 0.0
    %1460 = vmatprep.subr.mxu0 0.0
    %1461 = vmatpush2.msra.mxu0 0.0
    %1462 = vmatprep.subr.mxu0 0.0
    %1463 = vmatpush2.msra.mxu0 0.0
    %1464 = vmatprep.subr.mxu0 0.0
    %1465 = vmatpush2.msra.mxu0 0.0
    %1466 = vmatprep.subr.mxu0 0.0
    %1467 = vmatpush2.msra.mxu0 0.0
    %1468 = vmatprep.mubr.f32.mxu0 0.0
    %1469 = vmatmul.mubr.f32.gmra.mxu0 %v1403
    %v1470 = vpop.f32.mrf.mxu0
    %v1471 = vadd.f32 0.0, %v1470
    %v1472 = vpop.f32.mrf.mxu0
    %1473 = vdwg.mxu0
    %v1474 = vsub.f32 %v1403, %v1471
    %v1475 = vmul.f32 %v1474, %v1474
    %1476 = vmatprep.subr.mxu0 0.0
    %1477 = vmatpush1.msra.mxu0 %v202
    %1478 = vmatprep.subr.mxu0 0.0
    %1479 = vmatpush1.msra.mxu0 %v201
    %1480 = vmatprep.subr.mxu0 0.0
    %1481 = vmatpush1.msra.mxu0 %v200
    %1482 = vmatprep.subr.mxu0 0.0
    %1483 = vmatpush1.msra.mxu0 %v199
    %1484 = vmatprep.subr.mxu0 0.0
    %1485 = vmatpush1.msra.mxu0 %v198
    %1486 = vmatprep.subr.mxu0 0.0
    %1487 = vmatpush1.msra.mxu0 %v197
    %1488 = vmatprep.subr.mxu0 0.0
    %1489 = vmatpush1.msra.mxu0 %v196
    %1490 = vmatprep.subr.mxu0 0.0
    %1491 = vmatpush1.msra.mxu0 %v195
    %1492 = vmatprep.subr.mxu0 0.0
    %1493 = vmatpush1.msra.mxu0 %v194
    %1494 = vmatprep.subr.mxu0 0.0
    %1495 = vmatpush1.msra.mxu0 %v193
    %1496 = vmatprep.subr.mxu0 0.0
    %1497 = vmatpush1.msra.mxu0 %v192
    %1498 = vmatprep.subr.mxu0 0.0
    %1499 = vmatpush1.msra.mxu0 %v191
    %1500 = vmatprep.subr.mxu0 0.0
    %1501 = vmatpush1.msra.mxu0 %v190
    %1502 = vmatprep.subr.mxu0 0.0
    %1503 = vmatpush1.msra.mxu0 %v189
    %1504 = vmatprep.subr.mxu0 0.0
    %1505 = vmatpush1.msra.mxu0 %v188
    %1506 = vmatprep.subr.mxu0 0.0
    %1507 = vmatpush1.msra.mxu0 %v187
    %1508 = vmatprep.subr.mxu0 0.0
    %1509 = vmatpush2.msra.mxu0 0.0
    %1510 = vmatprep.subr.mxu0 0.0
    %1511 = vmatpush2.msra.mxu0 0.0
    %1512 = vmatprep.subr.mxu0 0.0
    %1513 = vmatpush2.msra.mxu0 0.0
    %1514 = vmatprep.subr.mxu0 0.0
    %1515 = vmatpush2.msra.mxu0 0.0
    %1516 = vmatprep.subr.mxu0 0.0
    %1517 = vmatpush2.msra.mxu0 0.0
    %1518 = vmatprep.subr.mxu0 0.0
    %1519 = vmatpush2.msra.mxu0 0.0
    %1520 = vmatprep.subr.mxu0 0.0
    %1521 = vmatpush2.msra.mxu0 0.0
    %1522 = vmatprep.subr.mxu0 0.0
    %1523 = vmatpush2.msra.mxu0 0.0
    %1524 = vmatprep.subr.mxu0 0.0
    %1525 = vmatpush2.msra.mxu0 0.0
    %1526 = vmatprep.subr.mxu0 0.0
    %1527 = vmatpush2.msra.mxu0 0.0
    %1528 = vmatprep.subr.mxu0 0.0
    %1529 = vmatpush2.msra.mxu0 0.0
    %1530 = vmatprep.subr.mxu0 0.0
    %1531 = vmatpush2.msra.mxu0 0.0
    %1532 = vmatprep.subr.mxu0 0.0
    %1533 = vmatpush2.msra.mxu0 0.0
    %1534 = vmatprep.subr.mxu0 0.0
    %1535 = vmatpush2.msra.mxu0 0.0
    %1536 = vmatprep.subr.mxu0 0.0
    %1537 = vmatpush2.msra.mxu0 0.0
    %1538 = vmatprep.subr.mxu0 0.0
    %1539 = vmatpush2.msra.mxu0 0.0
    %1540 = vmatprep.mubr.f32.mxu0 0.0
    %1541 = vmatmul.mubr.f32.gmra.mxu0 %v1475
    %v1542 = vpop.f32.mrf.mxu0
    %v1543 = vadd.f32 1e-05, %v1542
    %v1544 = vpop.f32.mrf.mxu0
    %1545 = vdwg.mxu0
    %v1546 = vrsqrt.pop %v1543
    %v1547 = vmul.f32 %v1474, %v1546
    %v1548 = vlaneseq
    %v1549 = vshrl.u32 %v1548, 7
    %v1550 = vsub.s32 6, %v1549
    %v1551 = vrot.slane %v203, %v1550
    %v1552 = vmul.f32 %v1547, %v1551
    %v1553 = vlaneseq
    %v1554 = vshrl.u32 %v1553, 7
    %v1555 = vsub.s32 7, %v1554
    %v1556 = vrot.slane %v203, %v1555
    %v1557 = vadd.f32 %v1552, %v1556
    %s1558 = scalar_lea.vmem [#allocation10], 512
    %v1559 = vld [vmem:[%s1558] sm:$0xff]
    %v1560 = vld [vmem:[%s1558 + $0x8] sm:$0xff]
    %v1561 = vld [vmem:[%s1558 + $0x10] sm:$0xff]
    %v1562 = vld [vmem:[%s1558 + $0x18] sm:$0xff]
    %v1563 = vld [vmem:[%s1558 + $0x20] sm:$0xff]
    %v1564 = vld [vmem:[%s1558 + $0x28] sm:$0xff]
    %v1565 = vld [vmem:[%s1558 + $0x30] sm:$0xff]
    %v1566 = vld [vmem:[%s1558 + $0x38] sm:$0xff]
    %v1567 = vld [vmem:[%s1558 + $0x40] sm:$0xff]
    %v1568 = vld [vmem:[%s1558 + $0x48] sm:$0xff]
    %v1569 = vld [vmem:[%s1558 + $0x50] sm:$0xff]
    %v1570 = vld [vmem:[%s1558 + $0x58] sm:$0xff]
    %v1571 = vld [vmem:[%s1558 + $0x60] sm:$0xff]
    %v1572 = vld [vmem:[%s1558 + $0x68] sm:$0xff]
    %v1573 = vld [vmem:[%s1558 + $0x70] sm:$0xff]
    %v1574 = vld [vmem:[%s1558 + $0x78] sm:$0xff]
    %s1575 = scalar_lea.vmem [#allocation10], 640
    %v1576 = vld [vmem:[%s1575] sm:$0xff]
    %v1577 = vld [vmem:[%s1575 + $0x8] sm:$0xff]
    %v1578 = vld [vmem:[%s1575 + $0x10] sm:$0xff]
    %v1579 = vld [vmem:[%s1575 + $0x18] sm:$0xff]
    %v1580 = vld [vmem:[%s1575 + $0x20] sm:$0xff]
    %v1581 = vld [vmem:[%s1575 + $0x28] sm:$0xff]
    %v1582 = vld [vmem:[%s1575 + $0x30] sm:$0xff]
    %v1583 = vld [vmem:[%s1575 + $0x38] sm:$0xff]
    %v1584 = vld [vmem:[%s1575 + $0x40] sm:$0xff]
    %v1585 = vld [vmem:[%s1575 + $0x48] sm:$0xff]
    %v1586 = vld [vmem:[%s1575 + $0x50] sm:$0xff]
    %v1587 = vld [vmem:[%s1575 + $0x58] sm:$0xff]
    %v1588 = vld [vmem:[%s1575 + $0x60] sm:$0xff]
    %v1589 = vld [vmem:[%s1575 + $0x68] sm:$0xff]
    %v1590 = vld [vmem:[%s1575 + $0x70] sm:$0xff]
    %v1591 = vld [vmem:[%s1575 + $0x78] sm:$0xff]
    %s1592 = scalar_lea.vmem [#allocation10], 768
    %v1593 = vld [vmem:[%s1592] sm:$0xff]
    %v1594 = vld [vmem:[%s1592 + $0x8] sm:$0xff]
    %v1595 = vld [vmem:[%s1592 + $0x10] sm:$0xff]
    %v1596 = vld [vmem:[%s1592 + $0x18] sm:$0xff]
    %v1597 = vld [vmem:[%s1592 + $0x20] sm:$0xff]
    %v1598 = vld [vmem:[%s1592 + $0x28] sm:$0xff]
    %v1599 = vld [vmem:[%s1592 + $0x30] sm:$0xff]
    %v1600 = vld [vmem:[%s1592 + $0x38] sm:$0xff]
    %v1601 = vld [vmem:[%s1592 + $0x40] sm:$0xff]
    %v1602 = vld [vmem:[%s1592 + $0x48] sm:$0xff]
    %v1603 = vld [vmem:[%s1592 + $0x50] sm:$0xff]
    %v1604 = vld [vmem:[%s1592 + $0x58] sm:$0xff]
    %v1605 = vld [vmem:[%s1592 + $0x60] sm:$0xff]
    %v1606 = vld [vmem:[%s1592 + $0x68] sm:$0xff]
    %v1607 = vld [vmem:[%s1592 + $0x70] sm:$0xff]
    %v1608 = vld [vmem:[%s1592 + $0x78] sm:$0xff]
    %s1609 = scalar_lea.vmem [#allocation10], 896
    %v1610 = vld [vmem:[%s1609] sm:$0xff]
    %v1611 = vld [vmem:[%s1609 + $0x8] sm:$0xff]
    %v1612 = vld [vmem:[%s1609 + $0x10] sm:$0xff]
    %v1613 = vld [vmem:[%s1609 + $0x18] sm:$0xff]
    %v1614 = vld [vmem:[%s1609 + $0x20] sm:$0xff]
    %v1615 = vld [vmem:[%s1609 + $0x28] sm:$0xff]
    %v1616 = vld [vmem:[%s1609 + $0x30] sm:$0xff]
    %v1617 = vld [vmem:[%s1609 + $0x38] sm:$0xff]
    %v1618 = vld [vmem:[%s1609 + $0x40] sm:$0xff]
    %v1619 = vld [vmem:[%s1609 + $0x48] sm:$0xff]
    %v1620 = vld [vmem:[%s1609 + $0x50] sm:$0xff]
    %v1621 = vld [vmem:[%s1609 + $0x58] sm:$0xff]
    %v1622 = vld [vmem:[%s1609 + $0x60] sm:$0xff]
    %v1623 = vld [vmem:[%s1609 + $0x68] sm:$0xff]
    %v1624 = vld [vmem:[%s1609 + $0x70] sm:$0xff]
    %v1625 = vld [vmem:[%s1609 + $0x78] sm:$0xff]
    %s1626 = scalar_lea.vmem [#allocation8], 128
    %v1627 = vld [vmem:[%s1626] sm:$0xff]
    %v1628 = vld [vmem:[%s1626 + $0x8] sm:$0xff]
    %v1629 = vld [vmem:[%s1626 + $0x10] sm:$0xff]
    %v1630 = vld [vmem:[%s1626 + $0x18] sm:$0xff]
    %v1631 = vld [vmem:[%s1626 + $0x20] sm:$0xff]
    %v1632 = vld [vmem:[%s1626 + $0x28] sm:$0xff]
    %v1633 = vld [vmem:[%s1626 + $0x30] sm:$0xff]
    %v1634 = vld [vmem:[%s1626 + $0x38] sm:$0xff]
    %v1635 = vld [vmem:[%s1626 + $0x40] sm:$0xff]
    %v1636 = vld [vmem:[%s1626 + $0x48] sm:$0xff]
    %v1637 = vld [vmem:[%s1626 + $0x50] sm:$0xff]
    %v1638 = vld [vmem:[%s1626 + $0x58] sm:$0xff]
    %v1639 = vld [vmem:[%s1626 + $0x60] sm:$0xff]
    %v1640 = vld [vmem:[%s1626 + $0x68] sm:$0xff]
    %v1641 = vld [vmem:[%s1626 + $0x70] sm:$0xff]
    %v1642 = vld [vmem:[%s1626 + $0x78] sm:$0xff]
    %v1643 = vlaneseq
    %v1644 = vshrl.u32 %v1643, 7
    %v1645 = vsub.s32 1, %v1644
    %v1646 = vrot.slane %v205, %v1645
    %v1647 = vlaneseq
    %v1648 = vshrl.u32 %v1647, 7
    %v1649 = vsub.s32 3, %v1648
    %v1650 = vrot.slane %v205, %v1649
    %v1653 = vlaneseq
    %v1654 = vshrl.u32 %v1653, 7
    %v1655 = vsub.s32 1, %v1654
    %v1656 = vrot.slane %v1646, %v1655
    %v1657 = vlaneseq
    %v1658 = vshrl.u32 %v1657, 7
    %v1659 = vsub.s32 1, %v1658
    %v1660 = vrot.slane %v1650, %v1659
    %1661 = vmatprep.subr.mxu0 0.0
    %1662 = vmatpush1.msra.mxu0 0.0
    %1663 = vmatprep.subr.mxu0 0.0
    %1664 = vmatpush1.msra.mxu0 0.0
    %1665 = vmatprep.subr.mxu0 0.0
    %1666 = vmatpush1.msra.mxu0 0.0
    %1667 = vmatprep.subr.mxu0 0.0
    %1668 = vmatpush1.msra.mxu0 0.0
    %1669 = vmatprep.subr.mxu0 0.0
    %1670 = vmatpush1.msra.mxu0 0.0
    %1671 = vmatprep.subr.mxu0 0.0
    %1672 = vmatpush1.msra.mxu0 0.0
    %1673 = vmatprep.subr.mxu0 0.0
    %1674 = vmatpush1.msra.mxu0 0.0
    %1675 = vmatprep.subr.mxu0 0.0
    %1676 = vmatpush1.msra.mxu0 0.0
    %1677 = vmatprep.subr.mxu0 %v1642
    %1678 = vmatpush1.msra.mxu0 %v1641
    %1679 = vmatprep.subr.mxu0 %v1640
    %1680 = vmatpush1.msra.mxu0 %v1639
    %1681 = vmatprep.subr.mxu0 %v1638
    %1682 = vmatpush1.msra.mxu0 %v1637
    %1683 = vmatprep.subr.mxu0 %v1636
    %1684 = vmatpush1.msra.mxu0 %v1635
    %1685 = vmatprep.subr.mxu0 %v1634
    %1686 = vmatpush1.msra.mxu0 %v1633
    %1687 = vmatprep.subr.mxu0 %v1632
    %1688 = vmatpush1.msra.mxu0 %v1631
    %1689 = vmatprep.subr.mxu0 %v1630
    %1690 = vmatpush1.msra.mxu0 %v1629
    %1691 = vmatprep.subr.mxu0 %v1628
    %1692 = vmatpush1.msra.mxu0 %v1627
    %1693 = vmatprep.subr.mxu0 0.0
    %1694 = vmatpush2.msra.mxu0 0.0
    %1695 = vmatprep.subr.mxu0 0.0
    %1696 = vmatpush2.msra.mxu0 0.0
    %1697 = vmatprep.subr.mxu0 0.0
    %1698 = vmatpush2.msra.mxu0 0.0
    %1699 = vmatprep.subr.mxu0 0.0
    %1700 = vmatpush2.msra.mxu0 0.0
    %1701 = vmatprep.subr.mxu0 0.0
    %1702 = vmatpush2.msra.mxu0 0.0
    %1703 = vmatprep.subr.mxu0 0.0
    %1704 = vmatpush2.msra.mxu0 0.0
    %1705 = vmatprep.subr.mxu0 0.0
    %1706 = vmatpush2.msra.mxu0 0.0
    %1707 = vmatprep.subr.mxu0 0.0
    %1708 = vmatpush2.msra.mxu0 0.0
    %1709 = vmatprep.subr.mxu0 0.0
    %1710 = vmatpush2.msra.mxu0 0.0
    %1711 = vmatprep.subr.mxu0 0.0
    %1712 = vmatpush2.msra.mxu0 0.0
    %1713 = vmatprep.subr.mxu0 0.0
    %1714 = vmatpush2.msra.mxu0 0.0
    %1715 = vmatprep.subr.mxu0 0.0
    %1716 = vmatpush2.msra.mxu0 0.0
    %1717 = vmatprep.subr.mxu0 0.0
    %1718 = vmatpush2.msra.mxu0 0.0
    %1719 = vmatprep.subr.mxu0 0.0
    %1720 = vmatpush2.msra.mxu0 0.0
    %1721 = vmatprep.subr.mxu0 0.0
    %1722 = vmatpush2.msra.mxu0 0.0
    %1723 = vmatprep.subr.mxu0 0.0
    %1724 = vmatpush2.msra.mxu0 0.0
    %1725 = vmatprep.mubr.f32.mxu0 0.0
    %1726 = vmatmul.mubr.f32.gmra.mxu0 %v397
    %v1727 = vpop.f32.mrf.mxu0
    %v1728 = vadd.f32 %v1656, %v1727
    %v1729 = vpop.f32.mrf.mxu0
    %v1730 = vadd.f32 %v1660, %v1729
    %1731 = vmatprep.mubr.f32.mxu0 0.0
    %1732 = vmatmul.mubr.f32.gmra.mxu0 %v400
    %v1733 = vpop.f32.mrf.mxu0
    %v1734 = vadd.f32 %v1656, %v1733
    %v1735 = vpop.f32.mrf.mxu0
    %v1736 = vadd.f32 %v1660, %v1735
    %1737 = vmatprep.mubr.f32.mxu0 0.0
    %1738 = vmatmul.mubr.f32.gmra.mxu0 %v403
    %v1739 = vpop.f32.mrf.mxu0
    %v1740 = vadd.f32 %v1656, %v1739
    %v1741 = vpop.f32.mrf.mxu0
    %v1742 = vadd.f32 %v1660, %v1741
    %1743 = vmatprep.mubr.f32.mxu0 0.0
    %1744 = vmatmul.mubr.f32.gmra.mxu0 %v406
    %v1745 = vpop.f32.mrf.mxu0
    %v1746 = vadd.f32 %v1656, %v1745
    %v1747 = vpop.f32.mrf.mxu0
    %v1748 = vadd.f32 %v1660, %v1747
    %1749 = vmatprep.mubr.f32.mxu0 0.0
    %1750 = vmatmul.mubr.f32.gmra.mxu0 %v409
    %v1751 = vpop.f32.mrf.mxu0
    %v1752 = vadd.f32 %v1656, %v1751
    %v1753 = vpop.f32.mrf.mxu0
    %v1754 = vadd.f32 %v1660, %v1753
    %1755 = vmatprep.mubr.f32.mxu0 0.0
    %1756 = vmatmul.mubr.f32.gmra.mxu0 %v412
    %v1757 = vpop.f32.mrf.mxu0
    %v1758 = vadd.f32 %v1656, %v1757
    %v1759 = vpop.f32.mrf.mxu0
    %v1760 = vadd.f32 %v1660, %v1759
    %1761 = vmatprep.mubr.f32.mxu0 0.0
    %1762 = vmatmul.mubr.f32.gmra.mxu0 %v415
    %v1763 = vpop.f32.mrf.mxu0
    %v1764 = vadd.f32 %v1656, %v1763
    %v1765 = vpop.f32.mrf.mxu0
    %v1766 = vadd.f32 %v1660, %v1765
    %1767 = vmatprep.mubr.f32.mxu0 0.0
    %1768 = vmatmul.mubr.f32.gmra.mxu0 %v418
    %v1769 = vpop.f32.mrf.mxu0
    %v1770 = vadd.f32 %v1656, %v1769
    %v1771 = vpop.f32.mrf.mxu0
    %v1772 = vadd.f32 %v1660, %v1771
    %1773 = vdwg.mxu0
    %v1774 = vlaneseq
    %v1775 = vshrl.u32 %v1774, 7
    %v1776 = vsub.s32 0, %v1775
    %v1777 = vrot.slane %v204, %v1776
    %1778 = vmatprep.subr.mxu0 0.0
    %1779 = vmatpush1.msra.mxu0 %v1574
    %1780 = vmatprep.subr.mxu0 0.0
    %1781 = vmatpush1.msra.mxu0 %v1573
    %1782 = vmatprep.subr.mxu0 0.0
    %1783 = vmatpush1.msra.mxu0 %v1572
    %1784 = vmatprep.subr.mxu0 0.0
    %1785 = vmatpush1.msra.mxu0 %v1571
    %1786 = vmatprep.subr.mxu0 0.0
    %1787 = vmatpush1.msra.mxu0 %v1570
    %1788 = vmatprep.subr.mxu0 0.0
    %1789 = vmatpush1.msra.mxu0 %v1569
    %1790 = vmatprep.subr.mxu0 0.0
    %1791 = vmatpush1.msra.mxu0 %v1568
    %1792 = vmatprep.subr.mxu0 0.0
    %1793 = vmatpush1.msra.mxu0 %v1567
    %1794 = vmatprep.subr.mxu0 0.0
    %1795 = vmatpush1.msra.mxu0 %v1566
    %1796 = vmatprep.subr.mxu0 0.0
    %1797 = vmatpush1.msra.mxu0 %v1565
    %1798 = vmatprep.subr.mxu0 0.0
    %1799 = vmatpush1.msra.mxu0 %v1564
    %1800 = vmatprep.subr.mxu0 0.0
    %1801 = vmatpush1.msra.mxu0 %v1563
    %1802 = vmatprep.subr.mxu0 0.0
    %1803 = vmatpush1.msra.mxu0 %v1562
    %1804 = vmatprep.subr.mxu0 0.0
    %1805 = vmatpush1.msra.mxu0 %v1561
    %1806 = vmatprep.subr.mxu0 0.0
    %1807 = vmatpush1.msra.mxu0 %v1560
    %1808 = vmatprep.subr.mxu0 0.0
    %1809 = vmatpush1.msra.mxu0 %v1559
    %1810 = vmatprep.subr.mxu0 0.0
    %1811 = vmatpush2.msra.mxu0 0.0
    %1812 = vmatprep.subr.mxu0 0.0
    %1813 = vmatpush2.msra.mxu0 0.0
    %1814 = vmatprep.subr.mxu0 0.0
    %1815 = vmatpush2.msra.mxu0 0.0
    %1816 = vmatprep.subr.mxu0 0.0
    %1817 = vmatpush2.msra.mxu0 0.0
    %1818 = vmatprep.subr.mxu0 0.0
    %1819 = vmatpush2.msra.mxu0 0.0
    %1820 = vmatprep.subr.mxu0 0.0
    %1821 = vmatpush2.msra.mxu0 0.0
    %1822 = vmatprep.subr.mxu0 0.0
    %1823 = vmatpush2.msra.mxu0 0.0
    %1824 = vmatprep.subr.mxu0 0.0
    %1825 = vmatpush2.msra.mxu0 0.0
    %1826 = vmatprep.subr.mxu0 0.0
    %1827 = vmatpush2.msra.mxu0 0.0
    %1828 = vmatprep.subr.mxu0 0.0
    %1829 = vmatpush2.msra.mxu0 0.0
    %1830 = vmatprep.subr.mxu0 0.0
    %1831 = vmatpush2.msra.mxu0 0.0
    %1832 = vmatprep.subr.mxu0 0.0
    %1833 = vmatpush2.msra.mxu0 0.0
    %1834 = vmatprep.subr.mxu0 0.0
    %1835 = vmatpush2.msra.mxu0 0.0
    %1836 = vmatprep.subr.mxu0 0.0
    %1837 = vmatpush2.msra.mxu0 0.0
    %1838 = vmatprep.subr.mxu0 0.0
    %1839 = vmatpush2.msra.mxu0 0.0
    %1840 = vmatprep.subr.mxu0 0.0
    %1841 = vmatpush2.msra.mxu0 0.0
    %1842 = vmatprep.mubr.f32.mxu0 0.0
    %1843 = vmatmul.mubr.f32.gmra.mxu0 %v1557
    %v1844 = vpop.f32.mrf.mxu0
    %v1845 = vadd.f32 %v1777, %v1844
    %v1846 = vpop.f32.mrf.mxu0
    %1847 = vdwg.mxu0
    %v1849 = vcombine.high %v1845, %v1845
    %v1851 = vunpack.c.l.s4 1966171168
    %v1852 = vunpack.c.0.s8 %v1851
    %v1853 = vlaneseq
    %v1854 = vshrl.u32 %v1853, 7
    %v1855 = vsub.s32 %v1852, %v1854
    %v1856 = vrot.slane %v1845, %v1855
    %v1858 = vunpack.c.l.s4 1966171168
    %v1859 = vunpack.c.0.s8 %v1858
    %v1860 = vlaneseq
    %v1861 = vshrl.u32 %v1860, 7
    %v1862 = vsub.s32 %v1859, %v1861
    %v1863 = vrot.slane %v1849, %v1862
    %v1864 = vcombine.high %v1856, %v1856
    %v1865 = vcombine.high %v1863, %v1863
    %v1867 = vunpack.c.l.s4 1966171168
    %v1868 = vunpack.c.0.s8 %v1867
    %v1869 = vlaneseq
    %v1870 = vshrl.u32 %v1869, 7
    %v1871 = vsub.s32 %v1868, %v1870
    %v1872 = vrot.slane %v1856, %v1871
    %v1874 = vunpack.c.l.s4 1966171168
    %v1875 = vunpack.c.0.s8 %v1874
    %v1876 = vlaneseq
    %v1877 = vshrl.u32 %v1876, 7
    %v1878 = vsub.s32 %v1875, %v1877
    %v1879 = vrot.slane %v1863, %v1878
    %v1881 = vunpack.c.l.s4 1966171168
    %v1882 = vunpack.c.0.s8 %v1881
    %v1883 = vlaneseq
    %v1884 = vshrl.u32 %v1883, 7
    %v1885 = vsub.s32 %v1882, %v1884
    %v1886 = vrot.slane %v1864, %v1885
    %v1888 = vunpack.c.l.s4 1966171168
    %v1889 = vunpack.c.0.s8 %v1888
    %v1890 = vlaneseq
    %v1891 = vshrl.u32 %v1890, 7
    %v1892 = vsub.s32 %v1889, %v1891
    %v1893 = vrot.slane %v1865, %v1892
    %v1894 = vcombine.high %v1872, %v1872
    %v1895 = vcombine.high %v1879, %v1879
    %v1896 = vcombine.high %v1886, %v1886
    %v1897 = vcombine.high %v1893, %v1893
    %v1898 = vlaneseq
    %v1899 = vshrl.u32 %v1898, 7
    %v1900 = vsub.s32 0, %v1899
    %v1901 = vrot.slane %v1872, %v1900
    %v1902 = vlaneseq
    %v1903 = vshrl.u32 %v1902, 7
    %v1904 = vsub.s32 0, %v1903
    %v1905 = vrot.slane %v1886, %v1904
    %v1906 = vlaneseq
    %v1907 = vshrl.u32 %v1906, 7
    %v1908 = vsub.s32 0, %v1907
    %v1909 = vrot.slane %v1894, %v1908
    %v1910 = vlaneseq
    %v1911 = vshrl.u32 %v1910, 7
    %v1912 = vsub.s32 0, %v1911
    %v1913 = vrot.slane %v1896, %v1912
    %v1914 = vlaneseq
    %v1915 = vshrl.u32 %v1914, 7
    %v1916 = vsub.s32 0, %v1915
    %v1917 = vrot.slane %v1879, %v1916
    %v1918 = vlaneseq
    %v1919 = vshrl.u32 %v1918, 7
    %v1920 = vsub.s32 0, %v1919
    %v1921 = vrot.slane %v1893, %v1920
    %v1922 = vlaneseq
    %v1923 = vshrl.u32 %v1922, 7
    %v1924 = vsub.s32 0, %v1923
    %v1925 = vrot.slane %v1895, %v1924
    %v1926 = vlaneseq
    %v1927 = vshrl.u32 %v1926, 7
    %v1928 = vsub.s32 0, %v1927
    %v1929 = vrot.slane %v1897, %v1928
    %v1938 = vmul.f32 %v1901, %v1728
    %v1939 = vmul.f32 %v1905, %v1734
    %v1940 = vmul.f32 %v1909, %v1740
    %v1941 = vmul.f32 %v1913, %v1746
    %v1942 = vmul.f32 %v1917, %v1752
    %v1943 = vmul.f32 %v1921, %v1758
    %v1944 = vmul.f32 %v1925, %v1764
    %v1945 = vmul.f32 %v1929, %v1770
    %1946 = vmatprep.subr.mxu0 0.0
    %1947 = vmatpush1.msra.mxu0 %v186
    %1948 = vmatprep.subr.mxu0 0.0
    %1949 = vmatpush1.msra.mxu0 %v185
    %1950 = vmatprep.subr.mxu0 0.0
    %1951 = vmatpush1.msra.mxu0 %v184
    %1952 = vmatprep.subr.mxu0 0.0
    %1953 = vmatpush1.msra.mxu0 %v183
    %1954 = vmatprep.subr.mxu0 0.0
    %1955 = vmatpush1.msra.mxu0 %v182
    %1956 = vmatprep.subr.mxu0 0.0
    %1957 = vmatpush1.msra.mxu0 %v181
    %1958 = vmatprep.subr.mxu0 0.0
    %1959 = vmatpush1.msra.mxu0 %v180
    %1960 = vmatprep.subr.mxu0 0.0
    %1961 = vmatpush1.msra.mxu0 %v179
    %1962 = vmatprep.subr.mxu0 0.0
    %1963 = vmatpush1.msra.mxu0 %v178
    %1964 = vmatprep.subr.mxu0 0.0
    %1965 = vmatpush1.msra.mxu0 %v177
    %1966 = vmatprep.subr.mxu0 0.0
    %1967 = vmatpush1.msra.mxu0 %v176
    %1968 = vmatprep.subr.mxu0 0.0
    %1969 = vmatpush1.msra.mxu0 %v175
    %1970 = vmatprep.subr.mxu0 0.0
    %1971 = vmatpush1.msra.mxu0 %v174
    %1972 = vmatprep.subr.mxu0 0.0
    %1973 = vmatpush1.msra.mxu0 %v173
    %1974 = vmatprep.subr.mxu0 0.0
    %1975 = vmatpush1.msra.mxu0 %v172
    %1976 = vmatprep.subr.mxu0 0.0
    %1977 = vmatpush1.msra.mxu0 %v171
    %1978 = vmatprep.subr.mxu0 0.0
    %1979 = vmatpush2.msra.mxu0 0.0
    %1980 = vmatprep.subr.mxu0 0.0
    %1981 = vmatpush2.msra.mxu0 0.0
    %1982 = vmatprep.subr.mxu0 0.0
    %1983 = vmatpush2.msra.mxu0 0.0
    %1984 = vmatprep.subr.mxu0 0.0
    %1985 = vmatpush2.msra.mxu0 0.0
    %1986 = vmatprep.subr.mxu0 0.0
    %1987 = vmatpush2.msra.mxu0 0.0
    %1988 = vmatprep.subr.mxu0 0.0
    %1989 = vmatpush2.msra.mxu0 0.0
    %1990 = vmatprep.subr.mxu0 0.0
    %1991 = vmatpush2.msra.mxu0 0.0
    %1992 = vmatprep.subr.mxu0 0.0
    %1993 = vmatpush2.msra.mxu0 0.0
    %1994 = vmatprep.subr.mxu0 0.0
    %1995 = vmatpush2.msra.mxu0 0.0
    %1996 = vmatprep.subr.mxu0 0.0
    %1997 = vmatpush2.msra.mxu0 0.0
    %1998 = vmatprep.subr.mxu0 0.0
    %1999 = vmatpush2.msra.mxu0 0.0
    %2000 = vmatprep.subr.mxu0 0.0
    %2001 = vmatpush2.msra.mxu0 0.0
    %2002 = vmatprep.subr.mxu0 0.0
    %2003 = vmatpush2.msra.mxu0 0.0
    %2004 = vmatprep.subr.mxu0 0.0
    %2005 = vmatpush2.msra.mxu0 0.0
    %2006 = vmatprep.subr.mxu0 0.0
    %2007 = vmatpush2.msra.mxu0 0.0
    %2008 = vmatprep.subr.mxu0 0.0
    %2009 = vmatpush2.msra.mxu0 0.0
    %2010 = vmatprep.mubr.f32.mxu0 0.0
    %2011 = vmatmul.mubr.f32.gmra.mxu0 %v1938
    %v2012 = vpop.f32.mrf.mxu0
    %v2013 = vadd.f32 0.0, %v2012
    %v2014 = vpop.f32.mrf.mxu0
    %2015 = vmatprep.mubr.f32.mxu0 0.0
    %2016 = vmatmul.mubr.f32.gmra.mxu0 %v1939
    %v2017 = vpop.f32.mrf.mxu0
    %v2018 = vadd.f32 0.0, %v2017
    %v2019 = vpop.f32.mrf.mxu0
    %2020 = vmatprep.mubr.f32.mxu0 0.0
    %2021 = vmatmul.mubr.f32.gmra.mxu0 %v1940
    %v2022 = vpop.f32.mrf.mxu0
    %v2023 = vadd.f32 0.0, %v2022
    %v2024 = vpop.f32.mrf.mxu0
    %2025 = vmatprep.mubr.f32.mxu0 0.0
    %2026 = vmatmul.mubr.f32.gmra.mxu0 %v1941
    %v2027 = vpop.f32.mrf.mxu0
    %v2028 = vadd.f32 0.0, %v2027
    %v2029 = vpop.f32.mrf.mxu0
    %2030 = vmatprep.mubr.f32.mxu0 0.0
    %2031 = vmatmul.mubr.f32.gmra.mxu0 %v1942
    %v2032 = vpop.f32.mrf.mxu0
    %v2033 = vadd.f32 0.0, %v2032
    %v2034 = vpop.f32.mrf.mxu0
    %2035 = vmatprep.mubr.f32.mxu0 0.0
    %2036 = vmatmul.mubr.f32.gmra.mxu0 %v1943
    %v2037 = vpop.f32.mrf.mxu0
    %v2038 = vadd.f32 0.0, %v2037
    %v2039 = vpop.f32.mrf.mxu0
    %2040 = vmatprep.mubr.f32.mxu0 0.0
    %2041 = vmatmul.mubr.f32.gmra.mxu0 %v1944
    %v2042 = vpop.f32.mrf.mxu0
    %v2043 = vadd.f32 0.0, %v2042
    %v2044 = vpop.f32.mrf.mxu0
    %2045 = vmatprep.mubr.f32.mxu0 0.0
    %2046 = vmatmul.mubr.f32.gmra.mxu0 %v1945
    %v2047 = vpop.f32.mrf.mxu0
    %v2048 = vadd.f32 0.0, %v2047
    %v2049 = vpop.f32.mrf.mxu0
    %2050 = vdwg.mxu0
    %v2051 = vrot.slane %v2013, 4
    %v2052 = vmax.f32 %v2013, %v2051
    %v2053 = vrot.slane %v2052, 2
    %v2054 = vmax.f32 %v2052, %v2053
    %v2055 = vrot.slane %v2054, 1
    %v2056 = vmax.f32 %v2054, %v2055
    %v2057 = vrot.slane %v2018, 4
    %v2058 = vmax.f32 %v2018, %v2057
    %v2059 = vrot.slane %v2058, 2
    %v2060 = vmax.f32 %v2058, %v2059
    %v2061 = vrot.slane %v2060, 1
    %v2062 = vmax.f32 %v2060, %v2061
    %v2063 = vrot.slane %v2023, 4
    %v2064 = vmax.f32 %v2023, %v2063
    %v2065 = vrot.slane %v2064, 2
    %v2066 = vmax.f32 %v2064, %v2065
    %v2067 = vrot.slane %v2066, 1
    %v2068 = vmax.f32 %v2066, %v2067
    %v2069 = vrot.slane %v2028, 4
    %v2070 = vmax.f32 %v2028, %v2069
    %v2071 = vrot.slane %v2070, 2
    %v2072 = vmax.f32 %v2070, %v2071
    %v2073 = vrot.slane %v2072, 1
    %v2074 = vmax.f32 %v2072, %v2073
    %v2075 = vrot.slane %v2033, 4
    %v2076 = vmax.f32 %v2033, %v2075
    %v2077 = vrot.slane %v2076, 2
    %v2078 = vmax.f32 %v2076, %v2077
    %v2079 = vrot.slane %v2078, 1
    %v2080 = vmax.f32 %v2078, %v2079
    %v2081 = vrot.slane %v2038, 4
    %v2082 = vmax.f32 %v2038, %v2081
    %v2083 = vrot.slane %v2082, 2
    %v2084 = vmax.f32 %v2082, %v2083
    %v2085 = vrot.slane %v2084, 1
    %v2086 = vmax.f32 %v2084, %v2085
    %v2087 = vrot.slane %v2043, 4
    %v2088 = vmax.f32 %v2043, %v2087
    %v2089 = vrot.slane %v2088, 2
    %v2090 = vmax.f32 %v2088, %v2089
    %v2091 = vrot.slane %v2090, 1
    %v2092 = vmax.f32 %v2090, %v2091
    %v2093 = vrot.slane %v2048, 4
    %v2094 = vmax.f32 %v2048, %v2093
    %v2095 = vrot.slane %v2094, 2
    %v2096 = vmax.f32 %v2094, %v2095
    %v2097 = vrot.slane %v2096, 1
    %v2098 = vmax.f32 %v2096, %v2097
    %v2099 = vsub.f32 %v2013, %v2056
    %v2100 = vsub.f32 %v2018, %v2062
    %v2101 = vsub.f32 %v2023, %v2068
    %v2102 = vsub.f32 %v2028, %v2074
    %v2103 = vsub.f32 %v2033, %v2080
    %v2104 = vsub.f32 %v2038, %v2086
    %v2105 = vsub.f32 %v2043, %v2092
    %v2106 = vsub.f32 %v2048, %v2098
    %v2107 = vmul.f32 %v2099, 1.442695
    %v2108 = vpow.pop %v2107
    %v2109 = vmul.f32 %v2100, 1.442695
    %v2110 = vpow.pop %v2109
    %v2111 = vmul.f32 %v2101, 1.442695
    %v2112 = vpow.pop %v2111
    %v2113 = vmul.f32 %v2102, 1.442695
    %v2114 = vpow.pop %v2113
    %v2115 = vmul.f32 %v2103, 1.442695
    %v2116 = vpow.pop %v2115
    %v2117 = vmul.f32 %v2104, 1.442695
    %v2118 = vpow.pop %v2117
    %v2119 = vmul.f32 %v2105, 1.442695
    %v2120 = vpow.pop %v2119
    %v2121 = vmul.f32 %v2106, 1.442695
    %v2122 = vpow.pop %v2121
    %v2123 = vrot.slane %v2108, 4
    %v2124 = vadd.f32 %v2108, %v2123
    %v2125 = vrot.slane %v2124, 2
    %v2126 = vadd.f32 %v2124, %v2125
    %v2127 = vrot.slane %v2126, 1
    %v2128 = vadd.f32 %v2126, %v2127
    %v2129 = vrot.slane %v2110, 4
    %v2130 = vadd.f32 %v2110, %v2129
    %v2131 = vrot.slane %v2130, 2
    %v2132 = vadd.f32 %v2130, %v2131
    %v2133 = vrot.slane %v2132, 1
    %v2134 = vadd.f32 %v2132, %v2133
    %v2135 = vrot.slane %v2112, 4
    %v2136 = vadd.f32 %v2112, %v2135
    %v2137 = vrot.slane %v2136, 2
    %v2138 = vadd.f32 %v2136, %v2137
    %v2139 = vrot.slane %v2138, 1
    %v2140 = vadd.f32 %v2138, %v2139
    %v2141 = vrot.slane %v2114, 4
    %v2142 = vadd.f32 %v2114, %v2141
    %v2143 = vrot.slane %v2142, 2
    %v2144 = vadd.f32 %v2142, %v2143
    %v2145 = vrot.slane %v2144, 1
    %v2146 = vadd.f32 %v2144, %v2145
    %v2147 = vrot.slane %v2116, 4
    %v2148 = vadd.f32 %v2116, %v2147
    %v2149 = vrot.slane %v2148, 2
    %v2150 = vadd.f32 %v2148, %v2149
    %v2151 = vrot.slane %v2150, 1
    %v2152 = vadd.f32 %v2150, %v2151
    %v2153 = vrot.slane %v2118, 4
    %v2154 = vadd.f32 %v2118, %v2153
    %v2155 = vrot.slane %v2154, 2
    %v2156 = vadd.f32 %v2154, %v2155
    %v2157 = vrot.slane %v2156, 1
    %v2158 = vadd.f32 %v2156, %v2157
    %v2159 = vrot.slane %v2120, 4
    %v2160 = vadd.f32 %v2120, %v2159
    %v2161 = vrot.slane %v2160, 2
    %v2162 = vadd.f32 %v2160, %v2161
    %v2163 = vrot.slane %v2162, 1
    %v2164 = vadd.f32 %v2162, %v2163
    %v2165 = vrot.slane %v2122, 4
    %v2166 = vadd.f32 %v2122, %v2165
    %v2167 = vrot.slane %v2166, 2
    %v2168 = vadd.f32 %v2166, %v2167
    %v2169 = vrot.slane %v2168, 1
    %v2170 = vadd.f32 %v2168, %v2169
    %v2171 = vmul.f32 %v2108, %v1730
    %v2172 = vmul.f32 %v2110, %v1736
    %v2173 = vmul.f32 %v2112, %v1742
    %v2174 = vmul.f32 %v2114, %v1748
    %v2175 = vmul.f32 %v2116, %v1754
    %v2176 = vmul.f32 %v2118, %v1760
    %v2177 = vmul.f32 %v2120, %v1766
    %v2178 = vmul.f32 %v2122, %v1772
    %v2179 = vrot.slane %v2171, 4
    %v2180 = vadd.f32 %v2171, %v2179
    %v2181 = vrot.slane %v2180, 2
    %v2182 = vadd.f32 %v2180, %v2181
    %v2183 = vrot.slane %v2182, 1
    %v2184 = vadd.f32 %v2182, %v2183
    %v2185 = vrot.slane %v2172, 4
    %v2186 = vadd.f32 %v2172, %v2185
    %v2187 = vrot.slane %v2186, 2
    %v2188 = vadd.f32 %v2186, %v2187
    %v2189 = vrot.slane %v2188, 1
    %v2190 = vadd.f32 %v2188, %v2189
    %v2191 = vrot.slane %v2173, 4
    %v2192 = vadd.f32 %v2173, %v2191
    %v2193 = vrot.slane %v2192, 2
    %v2194 = vadd.f32 %v2192, %v2193
    %v2195 = vrot.slane %v2194, 1
    %v2196 = vadd.f32 %v2194, %v2195
    %v2197 = vrot.slane %v2174, 4
    %v2198 = vadd.f32 %v2174, %v2197
    %v2199 = vrot.slane %v2198, 2
    %v2200 = vadd.f32 %v2198, %v2199
    %v2201 = vrot.slane %v2200, 1
    %v2202 = vadd.f32 %v2200, %v2201
    %v2203 = vrot.slane %v2175, 4
    %v2204 = vadd.f32 %v2175, %v2203
    %v2205 = vrot.slane %v2204, 2
    %v2206 = vadd.f32 %v2204, %v2205
    %v2207 = vrot.slane %v2206, 1
    %v2208 = vadd.f32 %v2206, %v2207
    %v2209 = vrot.slane %v2176, 4
    %v2210 = vadd.f32 %v2176, %v2209
    %v2211 = vrot.slane %v2210, 2
    %v2212 = vadd.f32 %v2210, %v2211
    %v2213 = vrot.slane %v2212, 1
    %v2214 = vadd.f32 %v2212, %v2213
    %v2215 = vrot.slane %v2177, 4
    %v2216 = vadd.f32 %v2177, %v2215
    %v2217 = vrot.slane %v2216, 2
    %v2218 = vadd.f32 %v2216, %v2217
    %v2219 = vrot.slane %v2218, 1
    %v2220 = vadd.f32 %v2218, %v2219
    %v2221 = vrot.slane %v2178, 4
    %v2222 = vadd.f32 %v2178, %v2221
    %v2223 = vrot.slane %v2222, 2
    %v2224 = vadd.f32 %v2222, %v2223
    %v2225 = vrot.slane %v2224, 1
    %v2226 = vadd.f32 %v2224, %v2225
    %v2227 = vrcp.pop %v2128
    %v2228 = vrcp.pop %v2134
    %v2229 = vrcp.pop %v2140
    %v2230 = vrcp.pop %v2146
    %v2231 = vrcp.pop %v2152
    %v2232 = vrcp.pop %v2158
    %v2233 = vrcp.pop %v2164
    %v2234 = vrcp.pop %v2170
    %v2235 = vmul.f32 %v2184, %v2227
    %v2236 = vmul.f32 %v2190, %v2228
    %v2237 = vmul.f32 %v2196, %v2229
    %v2238 = vmul.f32 %v2202, %v2230
    %v2239 = vmul.f32 %v2208, %v2231
    %v2240 = vmul.f32 %v2214, %v2232
    %v2241 = vmul.f32 %v2220, %v2233
    %v2242 = vmul.f32 %v2226, %v2234
    %v2243 = vlaneseq
    %v2244 = vshrl.u32 %v2243, 7
    %v2245 = vsub.s32 1, %v2244
    %v2246 = vrot.slane %v204, %v2245
    %v2255 = vsel %vm1014, %v2236, %v2235
    %v2256 = vsel %vm1016, %v2237, %v2255
    %v2257 = vsel %vm1018, %v2238, %v2256
    %v2258 = vsel %vm1020, %v2239, %v2257
    %v2259 = vsel %vm1022, %v2240, %v2258
    %v2260 = vsel %vm1024, %v2241, %v2259
    %v2261 = vsel %vm1026, %v2242, %v2260
    %2263 = vmatprep.subr.mxu0 0.0
    %2264 = vmatpush1.msra.mxu0 %v1591
    %2265 = vmatprep.subr.mxu0 0.0
    %2266 = vmatpush1.msra.mxu0 %v1590
    %2267 = vmatprep.subr.mxu0 0.0
    %2268 = vmatpush1.msra.mxu0 %v1589
    %2269 = vmatprep.subr.mxu0 0.0
    %2270 = vmatpush1.msra.mxu0 %v1588
    %2271 = vmatprep.subr.mxu0 0.0
    %2272 = vmatpush1.msra.mxu0 %v1587
    %2273 = vmatprep.subr.mxu0 0.0
    %2274 = vmatpush1.msra.mxu0 %v1586
    %2275 = vmatprep.subr.mxu0 0.0
    %2276 = vmatpush1.msra.mxu0 %v1585
    %2277 = vmatprep.subr.mxu0 0.0
    %2278 = vmatpush1.msra.mxu0 %v1584
    %2279 = vmatprep.subr.mxu0 0.0
    %2280 = vmatpush1.msra.mxu0 %v1583
    %2281 = vmatprep.subr.mxu0 0.0
    %2282 = vmatpush1.msra.mxu0 %v1582
    %2283 = vmatprep.subr.mxu0 0.0
    %2284 = vmatpush1.msra.mxu0 %v1581
    %2285 = vmatprep.subr.mxu0 0.0
    %2286 = vmatpush1.msra.mxu0 %v1580
    %2287 = vmatprep.subr.mxu0 0.0
    %2288 = vmatpush1.msra.mxu0 %v1579
    %2289 = vmatprep.subr.mxu0 0.0
    %2290 = vmatpush1.msra.mxu0 %v1578
    %2291 = vmatprep.subr.mxu0 0.0
    %2292 = vmatpush1.msra.mxu0 %v1577
    %2293 = vmatprep.subr.mxu0 0.0
    %2294 = vmatpush1.msra.mxu0 %v1576
    %2295 = vmatprep.subr.mxu0 0.0
    %2296 = vmatpush2.msra.mxu0 0.0
    %2297 = vmatprep.subr.mxu0 0.0
    %2298 = vmatpush2.msra.mxu0 0.0
    %2299 = vmatprep.subr.mxu0 0.0
    %2300 = vmatpush2.msra.mxu0 0.0
    %2301 = vmatprep.subr.mxu0 0.0
    %2302 = vmatpush2.msra.mxu0 0.0
    %2303 = vmatprep.subr.mxu0 0.0
    %2304 = vmatpush2.msra.mxu0 0.0
    %2305 = vmatprep.subr.mxu0 0.0
    %2306 = vmatpush2.msra.mxu0 0.0
    %2307 = vmatprep.subr.mxu0 0.0
    %2308 = vmatpush2.msra.mxu0 0.0
    %2309 = vmatprep.subr.mxu0 0.0
    %2310 = vmatpush2.msra.mxu0 0.0
    %2311 = vmatprep.subr.mxu0 0.0
    %2312 = vmatpush2.msra.mxu0 0.0
    %2313 = vmatprep.subr.mxu0 0.0
    %2314 = vmatpush2.msra.mxu0 0.0
    %2315 = vmatprep.subr.mxu0 0.0
    %2316 = vmatpush2.msra.mxu0 0.0
    %2317 = vmatprep.subr.mxu0 0.0
    %2318 = vmatpush2.msra.mxu0 0.0
    %2319 = vmatprep.subr.mxu0 0.0
    %2320 = vmatpush2.msra.mxu0 0.0
    %2321 = vmatprep.subr.mxu0 0.0
    %2322 = vmatpush2.msra.mxu0 0.0
    %2323 = vmatprep.subr.mxu0 0.0
    %2324 = vmatpush2.msra.mxu0 0.0
    %2325 = vmatprep.subr.mxu0 0.0
    %2326 = vmatpush2.msra.mxu0 0.0
    %2327 = vmatprep.mubr.f32.mxu0 0.0
    %2328 = vmatmul.mubr.f32.gmra.mxu0 %v2261
    %v2329 = vpop.f32.mrf.mxu0
    %v2330 = vadd.f32 %v2246, %v2329
    %v2331 = vpop.f32.mrf.mxu0
    %2332 = vdwg.mxu0
    %v2333 = vadd.f32 %v2330, %v1557
    %2334 = vmatprep.subr.mxu0 0.0
    %2335 = vmatpush1.msra.mxu0 %v202
    %2336 = vmatprep.subr.mxu0 0.0
    %2337 = vmatpush1.msra.mxu0 %v201
    %2338 = vmatprep.subr.mxu0 0.0
    %2339 = vmatpush1.msra.mxu0 %v200
    %2340 = vmatprep.subr.mxu0 0.0
    %2341 = vmatpush1.msra.mxu0 %v199
    %2342 = vmatprep.subr.mxu0 0.0
    %2343 = vmatpush1.msra.mxu0 %v198
    %2344 = vmatprep.subr.mxu0 0.0
    %2345 = vmatpush1.msra.mxu0 %v197
    %2346 = vmatprep.subr.mxu0 0.0
    %2347 = vmatpush1.msra.mxu0 %v196
    %2348 = vmatprep.subr.mxu0 0.0
    %2349 = vmatpush1.msra.mxu0 %v195
    %2350 = vmatprep.subr.mxu0 0.0
    %2351 = vmatpush1.msra.mxu0 %v194
    %2352 = vmatprep.subr.mxu0 0.0
    %2353 = vmatpush1.msra.mxu0 %v193
    %2354 = vmatprep.subr.mxu0 0.0
    %2355 = vmatpush1.msra.mxu0 %v192
    %2356 = vmatprep.subr.mxu0 0.0
    %2357 = vmatpush1.msra.mxu0 %v191
    %2358 = vmatprep.subr.mxu0 0.0
    %2359 = vmatpush1.msra.mxu0 %v190
    %2360 = vmatprep.subr.mxu0 0.0
    %2361 = vmatpush1.msra.mxu0 %v189
    %2362 = vmatprep.subr.mxu0 0.0
    %2363 = vmatpush1.msra.mxu0 %v188
    %2364 = vmatprep.subr.mxu0 0.0
    %2365 = vmatpush1.msra.mxu0 %v187
    %2366 = vmatprep.subr.mxu0 0.0
    %2367 = vmatpush2.msra.mxu0 0.0
    %2368 = vmatprep.subr.mxu0 0.0
    %2369 = vmatpush2.msra.mxu0 0.0
    %2370 = vmatprep.subr.mxu0 0.0
    %2371 = vmatpush2.msra.mxu0 0.0
    %2372 = vmatprep.subr.mxu0 0.0
    %2373 = vmatpush2.msra.mxu0 0.0
    %2374 = vmatprep.subr.mxu0 0.0
    %2375 = vmatpush2.msra.mxu0 0.0
    %2376 = vmatprep.subr.mxu0 0.0
    %2377 = vmatpush2.msra.mxu0 0.0
    %2378 = vmatprep.subr.mxu0 0.0
    %2379 = vmatpush2.msra.mxu0 0.0
    %2380 = vmatprep.subr.mxu0 0.0
    %2381 = vmatpush2.msra.mxu0 0.0
    %2382 = vmatprep.subr.mxu0 0.0
    %2383 = vmatpush2.msra.mxu0 0.0
    %2384 = vmatprep.subr.mxu0 0.0
    %2385 = vmatpush2.msra.mxu0 0.0
    %2386 = vmatprep.subr.mxu0 0.0
    %2387 = vmatpush2.msra.mxu0 0.0
    %2388 = vmatprep.subr.mxu0 0.0
    %2389 = vmatpush2.msra.mxu0 0.0
    %2390 = vmatprep.subr.mxu0 0.0
    %2391 = vmatpush2.msra.mxu0 0.0
    %2392 = vmatprep.subr.mxu0 0.0
    %2393 = vmatpush2.msra.mxu0 0.0
    %2394 = vmatprep.subr.mxu0 0.0
    %2395 = vmatpush2.msra.mxu0 0.0
    %2396 = vmatprep.subr.mxu0 0.0
    %2397 = vmatpush2.msra.mxu0 0.0
    %2398 = vmatprep.mubr.f32.mxu0 0.0
    %2399 = vmatmul.mubr.f32.gmra.mxu0 %v2333
    %v2400 = vpop.f32.mrf.mxu0
    %v2401 = vadd.f32 0.0, %v2400
    %v2402 = vpop.f32.mrf.mxu0
    %2403 = vdwg.mxu0
    %v2404 = vsub.f32 %v2333, %v2401
    %v2405 = vmul.f32 %v2404, %v2404
    %2406 = vmatprep.subr.mxu0 0.0
    %2407 = vmatpush1.msra.mxu0 %v202
    %2408 = vmatprep.subr.mxu0 0.0
    %2409 = vmatpush1.msra.mxu0 %v201
    %2410 = vmatprep.subr.mxu0 0.0
    %2411 = vmatpush1.msra.mxu0 %v200
    %2412 = vmatprep.subr.mxu0 0.0
    %2413 = vmatpush1.msra.mxu0 %v199
    %2414 = vmatprep.subr.mxu0 0.0
    %2415 = vmatpush1.msra.mxu0 %v198
    %2416 = vmatprep.subr.mxu0 0.0
    %2417 = vmatpush1.msra.mxu0 %v197
    %2418 = vmatprep.subr.mxu0 0.0
    %2419 = vmatpush1.msra.mxu0 %v196
    %2420 = vmatprep.subr.mxu0 0.0
    %2421 = vmatpush1.msra.mxu0 %v195
    %2422 = vmatprep.subr.mxu0 0.0
    %2423 = vmatpush1.msra.mxu0 %v194
    %2424 = vmatprep.subr.mxu0 0.0
    %2425 = vmatpush1.msra.mxu0 %v193
    %2426 = vmatprep.subr.mxu0 0.0
    %2427 = vmatpush1.msra.mxu0 %v192
    %2428 = vmatprep.subr.mxu0 0.0
    %2429 = vmatpush1.msra.mxu0 %v191
    %2430 = vmatprep.subr.mxu0 0.0
    %2431 = vmatpush1.msra.mxu0 %v190
    %2432 = vmatprep.subr.mxu0 0.0
    %2433 = vmatpush1.msra.mxu0 %v189
    %2434 = vmatprep.subr.mxu0 0.0
    %2435 = vmatpush1.msra.mxu0 %v188
    %2436 = vmatprep.subr.mxu0 0.0
    %2437 = vmatpush1.msra.mxu0 %v187
    %2438 = vmatprep.subr.mxu0 0.0
    %2439 = vmatpush2.msra.mxu0 0.0
    %2440 = vmatprep.subr.mxu0 0.0
    %2441 = vmatpush2.msra.mxu0 0.0
    %2442 = vmatprep.subr.mxu0 0.0
    %2443 = vmatpush2.msra.mxu0 0.0
    %2444 = vmatprep.subr.mxu0 0.0
    %2445 = vmatpush2.msra.mxu0 0.0
    %2446 = vmatprep.subr.mxu0 0.0
    %2447 = vmatpush2.msra.mxu0 0.0
    %2448 = vmatprep.subr.mxu0 0.0
    %2449 = vmatpush2.msra.mxu0 0.0
    %2450 = vmatprep.subr.mxu0 0.0
    %2451 = vmatpush2.msra.mxu0 0.0
    %2452 = vmatprep.subr.mxu0 0.0
    %2453 = vmatpush2.msra.mxu0 0.0
    %2454 = vmatprep.subr.mxu0 0.0
    %2455 = vmatpush2.msra.mxu0 0.0
    %2456 = vmatprep.subr.mxu0 0.0
    %2457 = vmatpush2.msra.mxu0 0.0
    %2458 = vmatprep.subr.mxu0 0.0
    %2459 = vmatpush2.msra.mxu0 0.0
    %2460 = vmatprep.subr.mxu0 0.0
    %2461 = vmatpush2.msra.mxu0 0.0
    %2462 = vmatprep.subr.mxu0 0.0
    %2463 = vmatpush2.msra.mxu0 0.0
    %2464 = vmatprep.subr.mxu0 0.0
    %2465 = vmatpush2.msra.mxu0 0.0
    %2466 = vmatprep.subr.mxu0 0.0
    %2467 = vmatpush2.msra.mxu0 0.0
    %2468 = vmatprep.subr.mxu0 0.0
    %2469 = vmatpush2.msra.mxu0 0.0
    %2470 = vmatprep.mubr.f32.mxu0 0.0
    %2471 = vmatmul.mubr.f32.gmra.mxu0 %v2405
    %v2472 = vpop.f32.mrf.mxu0
    %v2473 = vadd.f32 1e-05, %v2472
    %v2474 = vpop.f32.mrf.mxu0
    %2475 = vdwg.mxu0
    %v2476 = vrsqrt.pop %v2473
    %v2477 = vmul.f32 %v2404, %v2476
    %v2478 = vlaneseq
    %v2479 = vshrl.u32 %v2478, 7
    %v2480 = vsub.s32 4, %v2479
    %v2481 = vrot.slane %v204, %v2480
    %v2482 = vmul.f32 %v2477, %v2481
    %v2483 = vlaneseq
    %v2484 = vshrl.u32 %v2483, 7
    %v2485 = vsub.s32 5, %v2484
    %v2486 = vrot.slane %v204, %v2485
    %v2487 = vadd.f32 %v2482, %v2486
    %v2488 = vlaneseq
    %v2489 = vshrl.u32 %v2488, 7
    %v2490 = vsub.s32 2, %v2489
    %v2491 = vrot.slane %v204, %v2490
    %2492 = vmatprep.subr.mxu0 0.0
    %2493 = vmatpush1.msra.mxu0 %v1608
    %2494 = vmatprep.subr.mxu0 0.0
    %2495 = vmatpush1.msra.mxu0 %v1607
    %2496 = vmatprep.subr.mxu0 0.0
    %2497 = vmatpush1.msra.mxu0 %v1606
    %2498 = vmatprep.subr.mxu0 0.0
    %2499 = vmatpush1.msra.mxu0 %v1605
    %2500 = vmatprep.subr.mxu0 0.0
    %2501 = vmatpush1.msra.mxu0 %v1604
    %2502 = vmatprep.subr.mxu0 0.0
    %2503 = vmatpush1.msra.mxu0 %v1603
    %2504 = vmatprep.subr.mxu0 0.0
    %2505 = vmatpush1.msra.mxu0 %v1602
    %2506 = vmatprep.subr.mxu0 0.0
    %2507 = vmatpush1.msra.mxu0 %v1601
    %2508 = vmatprep.subr.mxu0 0.0
    %2509 = vmatpush1.msra.mxu0 %v1600
    %2510 = vmatprep.subr.mxu0 0.0
    %2511 = vmatpush1.msra.mxu0 %v1599
    %2512 = vmatprep.subr.mxu0 0.0
    %2513 = vmatpush1.msra.mxu0 %v1598
    %2514 = vmatprep.subr.mxu0 0.0
    %2515 = vmatpush1.msra.mxu0 %v1597
    %2516 = vmatprep.subr.mxu0 0.0
    %2517 = vmatpush1.msra.mxu0 %v1596
    %2518 = vmatprep.subr.mxu0 0.0
    %2519 = vmatpush1.msra.mxu0 %v1595
    %2520 = vmatprep.subr.mxu0 0.0
    %2521 = vmatpush1.msra.mxu0 %v1594
    %2522 = vmatprep.subr.mxu0 0.0
    %2523 = vmatpush1.msra.mxu0 %v1593
    %2524 = vmatprep.subr.mxu0 0.0
    %2525 = vmatpush2.msra.mxu0 0.0
    %2526 = vmatprep.subr.mxu0 0.0
    %2527 = vmatpush2.msra.mxu0 0.0
    %2528 = vmatprep.subr.mxu0 0.0
    %2529 = vmatpush2.msra.mxu0 0.0
    %2530 = vmatprep.subr.mxu0 0.0
    %2531 = vmatpush2.msra.mxu0 0.0
    %2532 = vmatprep.subr.mxu0 0.0
    %2533 = vmatpush2.msra.mxu0 0.0
    %2534 = vmatprep.subr.mxu0 0.0
    %2535 = vmatpush2.msra.mxu0 0.0
    %2536 = vmatprep.subr.mxu0 0.0
    %2537 = vmatpush2.msra.mxu0 0.0
    %2538 = vmatprep.subr.mxu0 0.0
    %2539 = vmatpush2.msra.mxu0 0.0
    %2540 = vmatprep.subr.mxu0 0.0
    %2541 = vmatpush2.msra.mxu0 0.0
    %2542 = vmatprep.subr.mxu0 0.0
    %2543 = vmatpush2.msra.mxu0 0.0
    %2544 = vmatprep.subr.mxu0 0.0
    %2545 = vmatpush2.msra.mxu0 0.0
    %2546 = vmatprep.subr.mxu0 0.0
    %2547 = vmatpush2.msra.mxu0 0.0
    %2548 = vmatprep.subr.mxu0 0.0
    %2549 = vmatpush2.msra.mxu0 0.0
    %2550 = vmatprep.subr.mxu0 0.0
    %2551 = vmatpush2.msra.mxu0 0.0
    %2552 = vmatprep.subr.mxu0 0.0
    %2553 = vmatpush2.msra.mxu0 0.0
    %2554 = vmatprep.subr.mxu0 0.0
    %2555 = vmatpush2.msra.mxu0 0.0
    %2556 = vmatprep.mubr.f32.mxu0 0.0
    %2557 = vmatmul.mubr.f32.gmra.mxu0 %v2487
    %v2558 = vpop.f32.mrf.mxu0
    %v2559 = vadd.f32 %v2491, %v2558
    %v2560 = vpop.f32.mrf.mxu0
    %2561 = vdwg.mxu0
    %v2562 = vmax.f32 %v2559, 0.0
    %v2563 = vlaneseq
    %v2564 = vshrl.u32 %v2563, 7
    %v2565 = vsub.s32 3, %v2564
    %v2566 = vrot.slane %v204, %v2565
    %2567 = vmatprep.subr.mxu0 0.0
    %2568 = vmatpush1.msra.mxu0 %v1625
    %2569 = vmatprep.subr.mxu0 0.0
    %2570 = vmatpush1.msra.mxu0 %v1624
    %2571 = vmatprep.subr.mxu0 0.0
    %2572 = vmatpush1.msra.mxu0 %v1623
    %2573 = vmatprep.subr.mxu0 0.0
    %2574 = vmatpush1.msra.mxu0 %v1622
    %2575 = vmatprep.subr.mxu0 0.0
    %2576 = vmatpush1.msra.mxu0 %v1621
    %2577 = vmatprep.subr.mxu0 0.0
    %2578 = vmatpush1.msra.mxu0 %v1620
    %2579 = vmatprep.subr.mxu0 0.0
    %2580 = vmatpush1.msra.mxu0 %v1619
    %2581 = vmatprep.subr.mxu0 0.0
    %2582 = vmatpush1.msra.mxu0 %v1618
    %2583 = vmatprep.subr.mxu0 0.0
    %2584 = vmatpush1.msra.mxu0 %v1617
    %2585 = vmatprep.subr.mxu0 0.0
    %2586 = vmatpush1.msra.mxu0 %v1616
    %2587 = vmatprep.subr.mxu0 0.0
    %2588 = vmatpush1.msra.mxu0 %v1615
    %2589 = vmatprep.subr.mxu0 0.0
    %2590 = vmatpush1.msra.mxu0 %v1614
    %2591 = vmatprep.subr.mxu0 0.0
    %2592 = vmatpush1.msra.mxu0 %v1613
    %2593 = vmatprep.subr.mxu0 0.0
    %2594 = vmatpush1.msra.mxu0 %v1612
    %2595 = vmatprep.subr.mxu0 0.0
    %2596 = vmatpush1.msra.mxu0 %v1611
    %2597 = vmatprep.subr.mxu0 0.0
    %2598 = vmatpush1.msra.mxu0 %v1610
    %2599 = vmatprep.subr.mxu0 0.0
    %2600 = vmatpush2.msra.mxu0 0.0
    %2601 = vmatprep.subr.mxu0 0.0
    %2602 = vmatpush2.msra.mxu0 0.0
    %2603 = vmatprep.subr.mxu0 0.0
    %2604 = vmatpush2.msra.mxu0 0.0
    %2605 = vmatprep.subr.mxu0 0.0
    %2606 = vmatpush2.msra.mxu0 0.0
    %2607 = vmatprep.subr.mxu0 0.0
    %2608 = vmatpush2.msra.mxu0 0.0
    %2609 = vmatprep.subr.mxu0 0.0
    %2610 = vmatpush2.msra.mxu0 0.0
    %2611 = vmatprep.subr.mxu0 0.0
    %2612 = vmatpush2.msra.mxu0 0.0
    %2613 = vmatprep.subr.mxu0 0.0
    %2614 = vmatpush2.msra.mxu0 0.0
    %2615 = vmatprep.subr.mxu0 0.0
    %2616 = vmatpush2.msra.mxu0 0.0
    %2617 = vmatprep.subr.mxu0 0.0
    %2618 = vmatpush2.msra.mxu0 0.0
    %2619 = vmatprep.subr.mxu0 0.0
    %2620 = vmatpush2.msra.mxu0 0.0
    %2621 = vmatprep.subr.mxu0 0.0
    %2622 = vmatpush2.msra.mxu0 0.0
    %2623 = vmatprep.subr.mxu0 0.0
    %2624 = vmatpush2.msra.mxu0 0.0
    %2625 = vmatprep.subr.mxu0 0.0
    %2626 = vmatpush2.msra.mxu0 0.0
    %2627 = vmatprep.subr.mxu0 0.0
    %2628 = vmatpush2.msra.mxu0 0.0
    %2629 = vmatprep.subr.mxu0 0.0
    %2630 = vmatpush2.msra.mxu0 0.0
    %2631 = vmatprep.mubr.f32.mxu0 0.0
    %2632 = vmatmul.mubr.f32.gmra.mxu0 %v2562
    %v2633 = vpop.f32.mrf.mxu0
    %v2634 = vadd.f32 %v2566, %v2633
    %v2635 = vpop.f32.mrf.mxu0
    %2636 = vdwg.mxu0
    %v2637 = vadd.f32 %v2634, %v2487
    %2638 = vmatprep.subr.mxu0 0.0
    %2639 = vmatpush1.msra.mxu0 %v202
    %2640 = vmatprep.subr.mxu0 0.0
    %2641 = vmatpush1.msra.mxu0 %v201
    %2642 = vmatprep.subr.mxu0 0.0
    %2643 = vmatpush1.msra.mxu0 %v200
    %2644 = vmatprep.subr.mxu0 0.0
    %2645 = vmatpush1.msra.mxu0 %v199
    %2646 = vmatprep.subr.mxu0 0.0
    %2647 = vmatpush1.msra.mxu0 %v198
    %2648 = vmatprep.subr.mxu0 0.0
    %2649 = vmatpush1.msra.mxu0 %v197
    %2650 = vmatprep.subr.mxu0 0.0
    %2651 = vmatpush1.msra.mxu0 %v196
    %2652 = vmatprep.subr.mxu0 0.0
    %2653 = vmatpush1.msra.mxu0 %v195
    %2654 = vmatprep.subr.mxu0 0.0
    %2655 = vmatpush1.msra.mxu0 %v194
    %2656 = vmatprep.subr.mxu0 0.0
    %2657 = vmatpush1.msra.mxu0 %v193
    %2658 = vmatprep.subr.mxu0 0.0
    %2659 = vmatpush1.msra.mxu0 %v192
    %2660 = vmatprep.subr.mxu0 0.0
    %2661 = vmatpush1.msra.mxu0 %v191
    %2662 = vmatprep.subr.mxu0 0.0
    %2663 = vmatpush1.msra.mxu0 %v190
    %2664 = vmatprep.subr.mxu0 0.0
    %2665 = vmatpush1.msra.mxu0 %v189
    %2666 = vmatprep.subr.mxu0 0.0
    %2667 = vmatpush1.msra.mxu0 %v188
    %2668 = vmatprep.subr.mxu0 0.0
    %2669 = vmatpush1.msra.mxu0 %v187
    %2670 = vmatprep.subr.mxu0 0.0
    %2671 = vmatpush2.msra.mxu0 0.0
    %2672 = vmatprep.subr.mxu0 0.0
    %2673 = vmatpush2.msra.mxu0 0.0
    %2674 = vmatprep.subr.mxu0 0.0
    %2675 = vmatpush2.msra.mxu0 0.0
    %2676 = vmatprep.subr.mxu0 0.0
    %2677 = vmatpush2.msra.mxu0 0.0
    %2678 = vmatprep.subr.mxu0 0.0
    %2679 = vmatpush2.msra.mxu0 0.0
    %2680 = vmatprep.subr.mxu0 0.0
    %2681 = vmatpush2.msra.mxu0 0.0
    %2682 = vmatprep.subr.mxu0 0.0
    %2683 = vmatpush2.msra.mxu0 0.0
    %2684 = vmatprep.subr.mxu0 0.0
    %2685 = vmatpush2.msra.mxu0 0.0
    %2686 = vmatprep.subr.mxu0 0.0
    %2687 = vmatpush2.msra.mxu0 0.0
    %2688 = vmatprep.subr.mxu0 0.0
    %2689 = vmatpush2.msra.mxu0 0.0
    %2690 = vmatprep.subr.mxu0 0.0
    %2691 = vmatpush2.msra.mxu0 0.0
    %2692 = vmatprep.subr.mxu0 0.0
    %2693 = vmatpush2.msra.mxu0 0.0
    %2694 = vmatprep.subr.mxu0 0.0
    %2695 = vmatpush2.msra.mxu0 0.0
    %2696 = vmatprep.subr.mxu0 0.0
    %2697 = vmatpush2.msra.mxu0 0.0
    %2698 = vmatprep.subr.mxu0 0.0
    %2699 = vmatpush2.msra.mxu0 0.0
    %2700 = vmatprep.subr.mxu0 0.0
    %2701 = vmatpush2.msra.mxu0 0.0
    %2702 = vmatprep.mubr.f32.mxu0 0.0
    %2703 = vmatmul.mubr.f32.gmra.mxu0 %v2637
    %v2704 = vpop.f32.mrf.mxu0
    %v2705 = vadd.f32 0.0, %v2704
    %v2706 = vpop.f32.mrf.mxu0
    %2707 = vdwg.mxu0
    %v2708 = vsub.f32 %v2637, %v2705
    %v2709 = vmul.f32 %v2708, %v2708
    %2710 = vmatprep.subr.mxu0 0.0
    %2711 = vmatpush1.msra.mxu0 %v202
    %2712 = vmatprep.subr.mxu0 0.0
    %2713 = vmatpush1.msra.mxu0 %v201
    %2714 = vmatprep.subr.mxu0 0.0
    %2715 = vmatpush1.msra.mxu0 %v200
    %2716 = vmatprep.subr.mxu0 0.0
    %2717 = vmatpush1.msra.mxu0 %v199
    %2718 = vmatprep.subr.mxu0 0.0
    %2719 = vmatpush1.msra.mxu0 %v198
    %2720 = vmatprep.subr.mxu0 0.0
    %2721 = vmatpush1.msra.mxu0 %v197
    %2722 = vmatprep.subr.mxu0 0.0
    %2723 = vmatpush1.msra.mxu0 %v196
    %2724 = vmatprep.subr.mxu0 0.0
    %2725 = vmatpush1.msra.mxu0 %v195
    %2726 = vmatprep.subr.mxu0 0.0
    %2727 = vmatpush1.msra.mxu0 %v194
    %2728 = vmatprep.subr.mxu0 0.0
    %2729 = vmatpush1.msra.mxu0 %v193
    %2730 = vmatprep.subr.mxu0 0.0
    %2731 = vmatpush1.msra.mxu0 %v192
    %2732 = vmatprep.subr.mxu0 0.0
    %2733 = vmatpush1.msra.mxu0 %v191
    %2734 = vmatprep.subr.mxu0 0.0
    %2735 = vmatpush1.msra.mxu0 %v190
    %2736 = vmatprep.subr.mxu0 0.0
    %2737 = vmatpush1.msra.mxu0 %v189
    %2738 = vmatprep.subr.mxu0 0.0
    %2739 = vmatpush1.msra.mxu0 %v188
    %2740 = vmatprep.subr.mxu0 0.0
    %2741 = vmatpush1.msra.mxu0 %v187
    %2742 = vmatprep.subr.mxu0 0.0
    %2743 = vmatpush2.msra.mxu0 0.0
    %2744 = vmatprep.subr.mxu0 0.0
    %2745 = vmatpush2.msra.mxu0 0.0
    %2746 = vmatprep.subr.mxu0 0.0
    %2747 = vmatpush2.msra.mxu0 0.0
    %2748 = vmatprep.subr.mxu0 0.0
    %2749 = vmatpush2.msra.mxu0 0.0
    %2750 = vmatprep.subr.mxu0 0.0
    %2751 = vmatpush2.msra.mxu0 0.0
    %2752 = vmatprep.subr.mxu0 0.0
    %2753 = vmatpush2.msra.mxu0 0.0
    %2754 = vmatprep.subr.mxu0 0.0
    %2755 = vmatpush2.msra.mxu0 0.0
    %2756 = vmatprep.subr.mxu0 0.0
    %2757 = vmatpush2.msra.mxu0 0.0
    %2758 = vmatprep.subr.mxu0 0.0
    %2759 = vmatpush2.msra.mxu0 0.0
    %2760 = vmatprep.subr.mxu0 0.0
    %2761 = vmatpush2.msra.mxu0 0.0
    %2762 = vmatprep.subr.mxu0 0.0
    %2763 = vmatpush2.msra.mxu0 0.0
    %2764 = vmatprep.subr.mxu0 0.0
    %2765 = vmatpush2.msra.mxu0 0.0
    %2766 = vmatprep.subr.mxu0 0.0
    %2767 = vmatpush2.msra.mxu0 0.0
    %2768 = vmatprep.subr.mxu0 0.0
    %2769 = vmatpush2.msra.mxu0 0.0
    %2770 = vmatprep.subr.mxu0 0.0
    %2771 = vmatpush2.msra.mxu0 0.0
    %2772 = vmatprep.subr.mxu0 0.0
    %2773 = vmatpush2.msra.mxu0 0.0
    %2774 = vmatprep.mubr.f32.mxu0 0.0
    %2775 = vmatmul.mubr.f32.gmra.mxu0 %v2709
    %v2776 = vpop.f32.mrf.mxu0
    %v2777 = vadd.f32 1e-05, %v2776
    %v2778 = vpop.f32.mrf.mxu0
    %2779 = vdwg.mxu0
    %v2780 = vrsqrt.pop %v2777
    %v2781 = vmul.f32 %v2708, %v2780
    %v2782 = vlaneseq
    %v2783 = vshrl.u32 %v2782, 7
    %v2784 = vsub.s32 6, %v2783
    %v2785 = vrot.slane %v204, %v2784
    %v2786 = vmul.f32 %v2781, %v2785
    %v2787 = vlaneseq
    %v2788 = vshrl.u32 %v2787, 7
    %v2789 = vsub.s32 7, %v2788
    %v2790 = vrot.slane %v204, %v2789
    %v2791 = vadd.f32 %v2786, %v2790
    %v2792 = vld [vmem:[#allocation16] sm:$0xff]
    %v2793 = vld [vmem:[#allocation16 + $0x8] sm:$0xff]
    %v2794 = vld [vmem:[#allocation16 + $0x10] sm:$0xff]
    %v2795 = vld [vmem:[#allocation16 + $0x18] sm:$0xff]
    %v2796 = vld [vmem:[#allocation16 + $0x20] sm:$0xff]
    %v2797 = vld [vmem:[#allocation16 + $0x28] sm:$0xff]
    %v2798 = vld [vmem:[#allocation16 + $0x30] sm:$0xff]
    %v2799 = vld [vmem:[#allocation16 + $0x38] sm:$0xff]
    %v2800 = vld [vmem:[#allocation16 + $0x40] sm:$0xff]
    %v2801 = vld [vmem:[#allocation16 + $0x48] sm:$0xff]
    %v2802 = vld [vmem:[#allocation16 + $0x50] sm:$0xff]
    %v2803 = vld [vmem:[#allocation16 + $0x58] sm:$0xff]
    %v2804 = vld [vmem:[#allocation16 + $0x60] sm:$0xff]
    %v2805 = vld [vmem:[#allocation16 + $0x68] sm:$0xff]
    %v2806 = vld [vmem:[#allocation16 + $0x70] sm:$0xff]
    %v2807 = vld [vmem:[#allocation16 + $0x78] sm:$0xff]
    %v2808 = vld [vmem:[%s11] sm:$0x1]
    %v2810 = vlaneseq
    %v2811 = vshrl.u32 %v2810, 7
    %v2812 = vsub.s32 0, %v2811
    %v2813 = vrot.slane %v2808, %v2812
    %2815 = vmatprep.subr.mxu0 0.0
    %2816 = vmatpush1.msra.mxu0 %v2807
    %2817 = vmatprep.subr.mxu0 0.0
    %2818 = vmatpush1.msra.mxu0 %v2806
    %2819 = vmatprep.subr.mxu0 0.0
    %2820 = vmatpush1.msra.mxu0 %v2805
    %2821 = vmatprep.subr.mxu0 0.0
    %2822 = vmatpush1.msra.mxu0 %v2804
    %2823 = vmatprep.subr.mxu0 0.0
    %2824 = vmatpush1.msra.mxu0 %v2803
    %2825 = vmatprep.subr.mxu0 0.0
    %2826 = vmatpush1.msra.mxu0 %v2802
    %2827 = vmatprep.subr.mxu0 0.0
    %2828 = vmatpush1.msra.mxu0 %v2801
    %2829 = vmatprep.subr.mxu0 0.0
    %2830 = vmatpush1.msra.mxu0 %v2800
    %2831 = vmatprep.subr.mxu0 0.0
    %2832 = vmatpush1.msra.mxu0 %v2799
    %2833 = vmatprep.subr.mxu0 0.0
    %2834 = vmatpush1.msra.mxu0 %v2798
    %2835 = vmatprep.subr.mxu0 0.0
    %2836 = vmatpush1.msra.mxu0 %v2797
    %2837 = vmatprep.subr.mxu0 0.0
    %2838 = vmatpush1.msra.mxu0 %v2796
    %2839 = vmatprep.subr.mxu0 0.0
    %2840 = vmatpush1.msra.mxu0 %v2795
    %2841 = vmatprep.subr.mxu0 0.0
    %2842 = vmatpush1.msra.mxu0 %v2794
    %2843 = vmatprep.subr.mxu0 0.0
    %2844 = vmatpush1.msra.mxu0 %v2793
    %2845 = vmatprep.subr.mxu0 0.0
    %2846 = vmatpush1.msra.mxu0 %v2792
    %2847 = vmatprep.subr.mxu0 0.0
    %2848 = vmatpush2.msra.mxu0 0.0
    %2849 = vmatprep.subr.mxu0 0.0
    %2850 = vmatpush2.msra.mxu0 0.0
    %2851 = vmatprep.subr.mxu0 0.0
    %2852 = vmatpush2.msra.mxu0 0.0
    %2853 = vmatprep.subr.mxu0 0.0
    %2854 = vmatpush2.msra.mxu0 0.0
    %2855 = vmatprep.subr.mxu0 0.0
    %2856 = vmatpush2.msra.mxu0 0.0
    %2857 = vmatprep.subr.mxu0 0.0
    %2858 = vmatpush2.msra.mxu0 0.0
    %2859 = vmatprep.subr.mxu0 0.0
    %2860 = vmatpush2.msra.mxu0 0.0
    %2861 = vmatprep.subr.mxu0 0.0
    %2862 = vmatpush2.msra.mxu0 0.0
    %2863 = vmatprep.subr.mxu0 0.0
    %2864 = vmatpush2.msra.mxu0 0.0
    %2865 = vmatprep.subr.mxu0 0.0
    %2866 = vmatpush2.msra.mxu0 0.0
    %2867 = vmatprep.subr.mxu0 0.0
    %2868 = vmatpush2.msra.mxu0 0.0
    %2869 = vmatprep.subr.mxu0 0.0
    %2870 = vmatpush2.msra.mxu0 0.0
    %2871 = vmatprep.subr.mxu0 0.0
    %2872 = vmatpush2.msra.mxu0 0.0
    %2873 = vmatprep.subr.mxu0 0.0
    %2874 = vmatpush2.msra.mxu0 0.0
    %2875 = vmatprep.subr.mxu0 0.0
    %2876 = vmatpush2.msra.mxu0 0.0
    %2877 = vmatprep.subr.mxu0 0.0
    %2878 = vmatpush2.msra.mxu0 0.0
    %2879 = vmatprep.mubr.f32.mxu0 0.0
    %2880 = vmatmul.mubr.f32.gmra.mxu0 %v2791
    %v2881 = vpop.f32.mrf.mxu0
    %v2882 = vadd.f32 %v2813, %v2881
    %v2883 = vpop.f32.mrf.mxu0
    %2884 = vdwg.mxu0
    %2885 = vst [vmem:[#allocation17] sm:$0xff] %v2882
    // Predicated region
    $region86: #{tpu_custom_call.1} parent=1 // pred_check
      _
    $region87: #{tpu_custom_call.1} parent=1 // pred_check_branch
      %2887 = sbr.rel (0) target = $region89
    $region88: #{tpu_custom_call.1} parent=1 // pred_region
      %s2889 = ssub.s32 128, 128
      %2890 = vsyncadd [#allocation4], %s2889
      %s2892 = sshll.u32 [#allocation17], 4
      %s2893 = int_to_ptr.vmem [resolvable:$true] %s2892
      %2895 = dma.vmem_to_hbm [thread:$0]  %s2893, 128, %s12, [#allocation4]
    $region89: #{tpu_custom_call.1} parent=1 // pred_fallthru
      _
    // Predicated region
    $region90: #{tpu_custom_call.1} parent=1 // pred_check
      _
    $region91: #{tpu_custom_call.1} parent=1 // pred_check_branch
      %2897 = sbr.rel (0) target = $region93
    $region92: #{tpu_custom_call.1} parent=1 // pred_region
      %2898 = dma.done [#allocation4], 128
    $region93: #{tpu_custom_call.1} parent=1 // pred_fallthru
      _
    %2899 = vsyncpa [#allocation3], 1
    %2900 = vsyncpa [#allocation6], 1
    %2901 = vsyncpa [#allocation9], 1
    %2902 = vsyncpa [#allocation12], 1
    %2903 = vsyncpa [#allocation15], 1
    %2904 = vsyncpa [#allocation4], 1

</llo_original>
